<compile_context>
chip_gen: v5e
topology: v5e:2x2
jax: 0.10.0
libtpu: 0.0.40
codegen_flags: <defaults>
</compile_context>

<pallas_src>
import math
import jax
import jax.numpy as jnp
from jax import lax
from jax.experimental import pallas as pl
from jax.experimental.pallas import tpu as pltpu


# ---------------------------------------------------------------------------
# Pallas kernel
# ---------------------------------------------------------------------------
def _make_resblock_kernel(H, W, K, Cp):
    """Build the per-batch-element ResidualBlock kernel (all sizes static)."""
    P = K // 2
    Hp, Wp = H + 2 * P, W + 2 * P
    HW = H * W

    def im2col(a):
        # a: (Hp, Wp, Cp)  ->  (HW, K*K*Cp)
        # Tap order is (kh major, kw, then cin) which matches
        # w_hwio.reshape(K*K*Cp, Cp). Each tap slab is exactly 128 lanes wide,
        # so the concat is lane-block aligned (no lane shifts / masking).
        cols = [a[kh:kh + H, kw:kw + W, :].reshape(HW, Cp)
                for kh in range(K) for kw in range(K)]
        return jnp.concatenate(cols, axis=-1)

    def kernel(x_ref, w1_ref, b1_ref, w2_ref, b2_ref, o_ref, mid_ref):
        # x_ref  : (1, Hp, Wp, Cp) bf16  spatially + channel padded input
        # w1/w2  : (K*K*Cp, Cp)    bf16  im2col-packed conv weights
        # b1/b2  : (1, Cp)         f32
        # o_ref  : (1, H, W, Cp)   f32   (lane-dense: last dim = 128)
        # mid_ref: VMEM (Hp, Wp, Cp) bf16 scratch for zero-padded conv1 output
        x = x_ref[0]                                           # (Hp, Wp, Cp)

        # ---- conv1: single MXU matmul, f32 accumulate, bias + relu ---------
        h1 = jnp.dot(im2col(x), w1_ref[...],
                     preferred_element_type=jnp.float32)       # (HW, Cp)
        h1 = jnp.maximum(h1 + b1_ref[...], 0.0)

        # ---- stage conv1 output into a zero-bordered scratch ---------------
        # Only the P-wide border needs zeroing; the interior is fully
        # overwritten every grid step (safe under a "parallel" batch axis).
        zrow = jnp.zeros((P, Wp, Cp), jnp.bfloat16)
        zcol = jnp.zeros((H, P, Cp), jnp.bfloat16)
        mid_ref[0:P, :, :] = zrow
        mid_ref[Hp - P:Hp, :, :] = zrow
        mid_ref[P:P + H, 0:P, :] = zcol
        mid_ref[P:P + H, Wp - P:Wp, :] = zcol
        mid_ref[P:P + H, P:P + W, :] = h1.reshape(H, W, Cp).astype(jnp.bfloat16)

        # ---- conv2: single MXU matmul + bias --------------------------------
        h2 = jnp.dot(im2col(mid_ref[...]), w2_ref[...],
                     preferred_element_type=jnp.float32)       # (HW, Cp)
        h2 = h2 + b2_ref[...]

        # ---- residual add + relu, lane-dense store --------------------------
        res = x[P:P + H, P:P + W, :].astype(jnp.float32).reshape(HW, Cp)
        out = jnp.maximum(h2 + res, 0.0)
        o_ref[0] = out.reshape(H, W, Cp)

    return kernel


# ---------------------------------------------------------------------------
# Wrapper (layout plumbing: NCHW<->NHWC, padding, weight packing, pallas_call)
# ---------------------------------------------------------------------------
def residual_block_pallas(x, w1, b1, w2, b2):
    """x: (N,C,H,W); w: (Cout,Cin,3,3) OIHW; b: (Cout,).  Returns (N,C,H,W) f32."""
    N, C, H, W = x.shape
    Cout, Cin, K, _ = w1.shape
    assert Cin == C and Cout == C, "default ResidualBlock path needs in==out channels"
    P = K // 2
    Hp, Wp = H + 2 * P, W + 2 * P
    Cp = max(128, ((C + 127) // 128) * 128)   # lane-dense channel padding

    # NCHW -> NHWC, spatial zero pad, channel zero pad, bf16 for the MXU.
    x_nhwc = jnp.transpose(x, (0, 2, 3, 1))
    x_pad = jnp.pad(x_nhwc, ((0, 0), (P, P), (P, P), (0, Cp - C)))
    x_pad = x_pad.astype(jnp.bfloat16)

    def pack_w(w):      # OIHW -> HWIO -> channel pad -> (K*K*Cp, Cp) bf16
        w_hwio = jnp.transpose(w, (2, 3, 1, 0))
        w_hwio = jnp.pad(w_hwio, ((0, 0), (0, 0), (0, Cp - C), (0, Cp - C)))
        return w_hwio.reshape(K * K * Cp, Cp).astype(jnp.bfloat16)

    def pack_b(b):
        return jnp.pad(b, (0, Cp - C)).reshape(1, Cp).astype(jnp.float32)

    w1p, w2p = pack_w(w1), pack_w(w2)
    b1p, b2p = pack_b(b1), pack_b(b2)

    kernel = _make_resblock_kernel(H, W, K, Cp)

    out = pl.pallas_call(
        kernel,
        out_shape=jax.ShapeDtypeStruct((N, H, W, Cp), jnp.float32),
        grid_spec=pltpu.PrefetchScalarGridSpec(
            num_scalar_prefetch=0,
            grid=(N,),
            in_specs=[
                pl.BlockSpec((1, Hp, Wp, Cp), lambda n: (n, 0, 0, 0)),
                pl.BlockSpec((K * K * Cp, Cp), lambda n: (0, 0)),
                pl.BlockSpec((1, Cp), lambda n: (0, 0)),
                pl.BlockSpec((K * K * Cp, Cp), lambda n: (0, 0)),
                pl.BlockSpec((1, Cp), lambda n: (0, 0)),
            ],
            out_specs=pl.BlockSpec((1, H, W, Cp), lambda n: (n, 0, 0, 0)),
            scratch_shapes=[pltpu.VMEM((Hp, Wp, Cp), jnp.bfloat16)],
        ),
        compiler_params=pltpu.CompilerParams(
            dimension_semantics=("parallel",),
            vmem_limit_bytes=32 * 1024 * 1024),
    )(x_pad, w1p, b1p, w2p, b2p)

    # Drop channel padding, back to NCHW.
    return jnp.transpose(out[..., :C], (0, 3, 1, 2))


# ---------------------------------------------------------------------------
# Pure-JAX reference (mirrors the PyTorch forward, full f32)
# ---------------------------------------------------------------------------
def residual_block_ref(x, w1, b1, w2, b2):
    dn = ('NCHW', 'OIHW', 'NCHW')

    def conv(inp, w, b):
        y = lax.conv_general_dilated(inp, w, (1, 1), [(1, 1), (1, 1)],
                                     dimension_numbers=dn)
        return y + b[None, :, None, None]

    out = jax.nn.relu(conv(x, w1, b1))
    out = conv(out, w2, b2)
    return jax.nn.relu(out + x)


if __name__ == "__main__":
    # Small shapes consistent with the module's default path (in == out chans).
    N, C, H, W, K = 2, 16, 16, 16, 3

    key = jax.random.PRNGKey(0)
    kx, kw1, kb1, kw2, kb2 = jax.random.split(key, 5)
    bound = 1.0 / math.sqrt(C * K * K)   # PyTorch Conv2d default init scale

    x = jax.random.normal(kx, (N, C, H, W), jnp.float32)
    w1 = jax.random.uniform(kw1, (C, C, K, K), jnp.float32, -bound, bound)
    b1 = jax.random.uniform(kb1, (C,), jnp.float32, -bound, bound)
    w2 = jax.random.uniform(kw2, (C, C, K, K), jnp.float32, -bound, bound)
    b2 = jax.random.uniform(kb2, (C,), jnp.float32, -bound, bound)

    out = jax.block_until_ready(residual_block_pallas(x, w1, b1, w2, b2))
    ref = residual_block_ref(x, w1, b1, w2, b2)

    assert out.shape == ref.shape == (N, C, H, W)
    err = float(jnp.max(jnp.abs(out - ref)))
    # bf16 matmul inputs (f32 accumulation) vs full-f32 reference.
    assert err < 5e-2, f"mismatch vs reference: max abs err = {err}"

    print("KERNEL_OK")
</pallas_src>

<mosaic_0001>
module attributes {stable_mosaic.version = 11 : i64} {
  func.func @kernel(%arg0: i32, %arg1: memref<1x18x18x128xbf16, #tpu.memory_space<vmem>>, %arg2: memref<1152x128xbf16, #tpu.memory_space<vmem>>, %arg3: memref<1x128xf32, #tpu.memory_space<vmem>>, %arg4: memref<1152x128xbf16, #tpu.memory_space<vmem>>, %arg5: memref<1x128xf32, #tpu.memory_space<vmem>>, %arg6: memref<1x16x16x128xf32, #tpu.memory_space<vmem>>, %arg7: memref<18x18x128xbf16, #tpu.memory_space<vmem>>) attributes {dimension_semantics = [#tpu.dimension_semantics<parallel>], iteration_bounds = array<i64: 2>, scalar_prefetch = 0 : i64, scratch_operands = 1 : i64, tpu.core_type = #tpu.core_type<tc>, window_params = [{transform_indices = @transform_0, window_bounds = array<i64: 1, 18, 18, 128>}, {pipeline_mode = #tpu.pipeline_mode<synchronous>, transform_indices = @transform_1, window_bounds = array<i64: 1152, 128>}, {pipeline_mode = #tpu.pipeline_mode<synchronous>, transform_indices = @transform_2, window_bounds = array<i64: 1, 128>}, {pipeline_mode = #tpu.pipeline_mode<synchronous>, transform_indices = @transform_3, window_bounds = array<i64: 1152, 128>}, {pipeline_mode = #tpu.pipeline_mode<synchronous>, transform_indices = @transform_4, window_bounds = array<i64: 1, 128>}, {transform_indices = @transform_5, window_bounds = array<i64: 1, 16, 16, 128>}]} {
    %c0 = arith.constant 0 : index
    %c0_0 = arith.constant 0 : index
    %c0_1 = arith.constant 0 : index
    %c0_2 = arith.constant 0 : index
    %0 = vector.load %arg1[%c0, %c0_0, %c0_1, %c0_2] : memref<1x18x18x128xbf16, #tpu.memory_space<vmem>>, vector<1x18x18x128xbf16>
    %1 = vector.shape_cast %0 : vector<1x18x18x128xbf16> to vector<18x18x128xbf16>
    %2 = vector.extract_strided_slice %1 {offsets = [0, 0, 0], sizes = [16, 16, 128], strides = [1, 1, 1]} : vector<18x18x128xbf16> to vector<16x16x128xbf16>
    %3 = vector.shape_cast %2 : vector<16x16x128xbf16> to vector<256x128xbf16>
    %4 = vector.extract_strided_slice %1 {offsets = [0, 1, 0], sizes = [16, 16, 128], strides = [1, 1, 1]} : vector<18x18x128xbf16> to vector<16x16x128xbf16>
    %5 = vector.shape_cast %4 : vector<16x16x128xbf16> to vector<256x128xbf16>
    %6 = vector.extract_strided_slice %1 {offsets = [0, 2, 0], sizes = [16, 16, 128], strides = [1, 1, 1]} : vector<18x18x128xbf16> to vector<16x16x128xbf16>
    %7 = vector.shape_cast %6 : vector<16x16x128xbf16> to vector<256x128xbf16>
    %8 = vector.extract_strided_slice %1 {offsets = [1, 0, 0], sizes = [16, 16, 128], strides = [1, 1, 1]} : vector<18x18x128xbf16> to vector<16x16x128xbf16>
    %9 = vector.shape_cast %8 : vector<16x16x128xbf16> to vector<256x128xbf16>
    %10 = vector.extract_strided_slice %1 {offsets = [1, 1, 0], sizes = [16, 16, 128], strides = [1, 1, 1]} : vector<18x18x128xbf16> to vector<16x16x128xbf16>
    %11 = vector.shape_cast %10 : vector<16x16x128xbf16> to vector<256x128xbf16>
    %12 = vector.extract_strided_slice %1 {offsets = [1, 2, 0], sizes = [16, 16, 128], strides = [1, 1, 1]} : vector<18x18x128xbf16> to vector<16x16x128xbf16>
    %13 = vector.shape_cast %12 : vector<16x16x128xbf16> to vector<256x128xbf16>
    %14 = vector.extract_strided_slice %1 {offsets = [2, 0, 0], sizes = [16, 16, 128], strides = [1, 1, 1]} : vector<18x18x128xbf16> to vector<16x16x128xbf16>
    %15 = vector.shape_cast %14 : vector<16x16x128xbf16> to vector<256x128xbf16>
    %16 = vector.extract_strided_slice %1 {offsets = [2, 1, 0], sizes = [16, 16, 128], strides = [1, 1, 1]} : vector<18x18x128xbf16> to vector<16x16x128xbf16>
    %17 = vector.shape_cast %16 : vector<16x16x128xbf16> to vector<256x128xbf16>
    %18 = vector.extract_strided_slice %1 {offsets = [2, 2, 0], sizes = [16, 16, 128], strides = [1, 1, 1]} : vector<18x18x128xbf16> to vector<16x16x128xbf16>
    %19 = vector.shape_cast %18 : vector<16x16x128xbf16> to vector<256x128xbf16>
    %20 = tpu.concatenate %3, %5, %7, %9, %11, %13, %15, %17, %19 in 1 : vector<256x128xbf16>, vector<256x128xbf16>, vector<256x128xbf16>, vector<256x128xbf16>, vector<256x128xbf16>, vector<256x128xbf16>, vector<256x128xbf16>, vector<256x128xbf16>, vector<256x128xbf16> -> vector<256x1152xbf16>
    %c0_3 = arith.constant 0 : index
    %c0_4 = arith.constant 0 : index
    %21 = vector.load %arg2[%c0_3, %c0_4] : memref<1152x128xbf16, #tpu.memory_space<vmem>>, vector<1152x128xbf16>
    %cst = arith.constant dense<0.000000e+00> : vector<256x128xf32>
    %22 = tpu.matmul %20, %21, %cst {dimension_numbers = #tpu.dot_dimension_numbers<[1], [0], [0], [1], [0, 0, 1, 1], [], []>} : vector<256x1152xbf16>, vector<1152x128xbf16>, vector<256x128xf32> -> vector<256x128xf32>
    %c0_5 = arith.constant 0 : index
    %c0_6 = arith.constant 0 : index
    %23 = vector.load %arg3[%c0_5, %c0_6] : memref<1x128xf32, #tpu.memory_space<vmem>>, vector<1x128xf32>
    %24 = vector.broadcast %23 : vector<1x128xf32> to vector<256x128xf32>
    %25 = arith.addf %22, %24 : vector<256x128xf32>
    %cst_7 = arith.constant 0.000000e+00 : f32
    %26 = vector.broadcast %cst_7 : f32 to vector<256x128xf32>
    %27 = arith.maximumf %25, %26 : vector<256x128xf32>
    %cst_8 = arith.constant 0.000000e+00 : bf16
    %28 = vector.broadcast %cst_8 : bf16 to vector<1x18x128xbf16>
    %cst_9 = arith.constant 0.000000e+00 : bf16
    %29 = vector.broadcast %cst_9 : bf16 to vector<16x1x128xbf16>
    %c0_10 = arith.constant 0 : index
    %c0_11 = arith.constant 0 : index
    %c0_12 = arith.constant 0 : index
    %30 = vector.load %arg7[%c0_10, %c0_11, %c0_12] : memref<18x18x128xbf16, #tpu.memory_space<vmem>>, vector<1x18x128xbf16>
    tpu.vector_store %arg7[%c0_10, %c0_11, %c0_12], %28 {strides = array<i32>} : memref<18x18x128xbf16, #tpu.memory_space<vmem>>, vector<1x18x128xbf16>,
    %c17 = arith.constant 17 : index
    %c0_13 = arith.constant 0 : index
    %c0_14 = arith.constant 0 : index
    %31 = vector.load %arg7[%c17, %c0_13, %c0_14] : memref<18x18x128xbf16, #tpu.memory_space<vmem>>, vector<1x18x128xbf16>
    tpu.vector_store %arg7[%c17, %c0_13, %c0_14], %28 {strides = array<i32>} : memref<18x18x128xbf16, #tpu.memory_space<vmem>>, vector<1x18x128xbf16>,
    %c1 = arith.constant 1 : index
    %c0_15 = arith.constant 0 : index
    %c0_16 = arith.constant 0 : index
    %32 = vector.load %arg7[%c1, %c0_15, %c0_16] : memref<18x18x128xbf16, #tpu.memory_space<vmem>>, vector<16x1x128xbf16>
    tpu.vector_store %arg7[%c1, %c0_15, %c0_16], %29 {strides = array<i32>} : memref<18x18x128xbf16, #tpu.memory_space<vmem>>, vector<16x1x128xbf16>,
    %c1_17 = arith.constant 1 : index
    %c17_18 = arith.constant 17 : index
    %c0_19 = arith.constant 0 : index
    %33 = vector.load %arg7[%c1_17, %c17_18, %c0_19] : memref<18x18x128xbf16, #tpu.memory_space<vmem>>, vector<16x1x128xbf16>
    tpu.vector_store %arg7[%c1_17, %c17_18, %c0_19], %29 {strides = array<i32>} : memref<18x18x128xbf16, #tpu.memory_space<vmem>>, vector<16x1x128xbf16>,
    %34 = vector.shape_cast %27 : vector<256x128xf32> to vector<16x16x128xf32>
    %35 = arith.truncf %34 : vector<16x16x128xf32> to vector<16x16x128xbf16>
    %c1_20 = arith.constant 1 : index
    %c1_21 = arith.constant 1 : index
    %c0_22 = arith.constant 0 : index
    %36 = vector.load %arg7[%c1_20, %c1_21, %c0_22] : memref<18x18x128xbf16, #tpu.memory_space<vmem>>, vector<16x16x128xbf16>
    tpu.vector_store %arg7[%c1_20, %c1_21, %c0_22], %35 {strides = array<i32>} : memref<18x18x128xbf16, #tpu.memory_space<vmem>>, vector<16x16x128xbf16>,
    %c0_23 = arith.constant 0 : index
    %c0_24 = arith.constant 0 : index
    %c0_25 = arith.constant 0 : index
    %37 = vector.load %arg7[%c0_23, %c0_24, %c0_25] : memref<18x18x128xbf16, #tpu.memory_space<vmem>>, vector<18x18x128xbf16>
    %38 = vector.extract_strided_slice %37 {offsets = [0, 0, 0], sizes = [16, 16, 128], strides = [1, 1, 1]} : vector<18x18x128xbf16> to vector<16x16x128xbf16>
    %39 = vector.shape_cast %38 : vector<16x16x128xbf16> to vector<256x128xbf16>
    %40 = vector.extract_strided_slice %37 {offsets = [0, 1, 0], sizes = [16, 16, 128], strides = [1, 1, 1]} : vector<18x18x128xbf16> to vector<16x16x128xbf16>
    %41 = vector.shape_cast %40 : vector<16x16x128xbf16> to vector<256x128xbf16>
    %42 = vector.extract_strided_slice %37 {offsets = [0, 2, 0], sizes = [16, 16, 128], strides = [1, 1, 1]} : vector<18x18x128xbf16> to vector<16x16x128xbf16>
    %43 = vector.shape_cast %42 : vector<16x16x128xbf16> to vector<256x128xbf16>
    %44 = vector.extract_strided_slice %37 {offsets = [1, 0, 0], sizes = [16, 16, 128], strides = [1, 1, 1]} : vector<18x18x128xbf16> to vector<16x16x128xbf16>
    %45 = vector.shape_cast %44 : vector<16x16x128xbf16> to vector<256x128xbf16>
    %46 = vector.extract_strided_slice %37 {offsets = [1, 1, 0], sizes = [16, 16, 128], strides = [1, 1, 1]} : vector<18x18x128xbf16> to vector<16x16x128xbf16>
    %47 = vector.shape_cast %46 : vector<16x16x128xbf16> to vector<256x128xbf16>
    %48 = vector.extract_strided_slice %37 {offsets = [1, 2, 0], sizes = [16, 16, 128], strides = [1, 1, 1]} : vector<18x18x128xbf16> to vector<16x16x128xbf16>
    %49 = vector.shape_cast %48 : vector<16x16x128xbf16> to vector<256x128xbf16>
    %50 = vector.extract_strided_slice %37 {offsets = [2, 0, 0], sizes = [16, 16, 128], strides = [1, 1, 1]} : vector<18x18x128xbf16> to vector<16x16x128xbf16>
    %51 = vector.shape_cast %50 : vector<16x16x128xbf16> to vector<256x128xbf16>
    %52 = vector.extract_strided_slice %37 {offsets = [2, 1, 0], sizes = [16, 16, 128], strides = [1, 1, 1]} : vector<18x18x128xbf16> to vector<16x16x128xbf16>
    %53 = vector.shape_cast %52 : vector<16x16x128xbf16> to vector<256x128xbf16>
    %54 = vector.extract_strided_slice %37 {offsets = [2, 2, 0], sizes = [16, 16, 128], strides = [1, 1, 1]} : vector<18x18x128xbf16> to vector<16x16x128xbf16>
    %55 = vector.shape_cast %54 : vector<16x16x128xbf16> to vector<256x128xbf16>
    %56 = tpu.concatenate %39, %41, %43, %45, %47, %49, %51, %53, %55 in 1 : vector<256x128xbf16>, vector<256x128xbf16>, vector<256x128xbf16>, vector<256x128xbf16>, vector<256x128xbf16>, vector<256x128xbf16>, vector<256x128xbf16>, vector<256x128xbf16>, vector<256x128xbf16> -> vector<256x1152xbf16>
    %c0_26 = arith.constant 0 : index
    %c0_27 = arith.constant 0 : index
    %57 = vector.load %arg4[%c0_26, %c0_27] : memref<1152x128xbf16, #tpu.memory_space<vmem>>, vector<1152x128xbf16>
    %cst_28 = arith.constant dense<0.000000e+00> : vector<256x128xf32>
    %58 = tpu.matmul %56, %57, %cst_28 {dimension_numbers = #tpu.dot_dimension_numbers<[1], [0], [0], [1], [0, 0, 1, 1], [], []>} : vector<256x1152xbf16>, vector<1152x128xbf16>, vector<256x128xf32> -> vector<256x128xf32>
    %c0_29 = arith.constant 0 : index
    %c0_30 = arith.constant 0 : index
    %59 = vector.load %arg5[%c0_29, %c0_30] : memref<1x128xf32, #tpu.memory_space<vmem>>, vector<1x128xf32>
    %60 = vector.broadcast %59 : vector<1x128xf32> to vector<256x128xf32>
    %61 = arith.addf %58, %60 : vector<256x128xf32>
    %62 = vector.extract_strided_slice %1 {offsets = [1, 1, 0], sizes = [16, 16, 128], strides = [1, 1, 1]} : vector<18x18x128xbf16> to vector<16x16x128xbf16>
    %63 = arith.extf %62 : vector<16x16x128xbf16> to vector<16x16x128xf32>
    %64 = vector.shape_cast %63 : vector<16x16x128xf32> to vector<256x128xf32>
    %65 = arith.addf %61, %64 : vector<256x128xf32>
    %cst_31 = arith.constant 0.000000e+00 : f32
    %66 = vector.broadcast %cst_31 : f32 to vector<256x128xf32>
    %67 = arith.maximumf %65, %66 : vector<256x128xf32>
    %68 = vector.shape_cast %67 : vector<256x128xf32> to vector<16x16x128xf32>
    %c0_32 = arith.constant 0 : index
    %c0_33 = arith.constant 0 : index
    %c0_34 = arith.constant 0 : index
    %c0_35 = arith.constant 0 : index
    %69 = vector.load %arg6[%c0_32, %c0_33, %c0_34, %c0_35] : memref<1x16x16x128xf32, #tpu.memory_space<vmem>>, vector<1x16x16x128xf32>
    %70 = vector.shape_cast %69 : vector<1x16x16x128xf32> to vector<16x16x128xf32>
    %71 = vector.shape_cast %68 : vector<16x16x128xf32> to vector<1x16x16x128xf32>
    tpu.vector_store %arg6[%c0_32, %c0_33, %c0_34, %c0_35], %71 {strides = array<i32>} : memref<1x16x16x128xf32, #tpu.memory_space<vmem>>, vector<1x16x16x128xf32>,
    return
  }
  func.func @transform_0(%arg0: i32) -> (i32, i32, i32, i32) {
    %c0_i32 = arith.constant 0 : i32
    %c0_i32_0 = arith.constant 0 : i32
    %c0_i32_1 = arith.constant 0 : i32
    %c0_i32_2 = arith.constant 0 : i32
    return %arg0, %c0_i32, %c0_i32_0, %c0_i32_1 : i32, i32, i32, i32
  }
  func.func @transform_1(%arg0: i32) -> (i32, i32) {
    %c0_i32 = arith.constant 0 : i32
    %c0_i32_0 = arith.constant 0 : i32
    %c0_i32_1 = arith.constant 0 : i32
    return %c0_i32, %c0_i32_0 : i32, i32
  }
  func.func @transform_2(%arg0: i32) -> (i32, i32) {
    %c0_i32 = arith.constant 0 : i32
    %c0_i32_0 = arith.constant 0 : i32
    %c0_i32_1 = arith.constant 0 : i32
    return %c0_i32, %c0_i32_0 : i32, i32
  }
  func.func @transform_3(%arg0: i32) -> (i32, i32) {
    %c0_i32 = arith.constant 0 : i32
    %c0_i32_0 = arith.constant 0 : i32
    %c0_i32_1 = arith.constant 0 : i32
    return %c0_i32, %c0_i32_0 : i32, i32
  }
  func.func @transform_4(%arg0: i32) -> (i32, i32) {
    %c0_i32 = arith.constant 0 : i32
    %c0_i32_0 = arith.constant 0 : i32
    %c0_i32_1 = arith.constant 0 : i32
    return %c0_i32, %c0_i32_0 : i32, i32
  }
  func.func @transform_5(%arg0: i32) -> (i32, i32, i32, i32) {
    %c0_i32 = arith.constant 0 : i32
    %c0_i32_0 = arith.constant 0 : i32
    %c0_i32_1 = arith.constant 0 : i32
    %c0_i32_2 = arith.constant 0 : i32
    return %arg0, %c0_i32, %c0_i32_0, %c0_i32_1 : i32, i32, i32, i32
  }
}

</mosaic_0001>

<llo_original>
// kernel: tpu_custom_call.1
$region0: #{tpu_custom_call.1}
  #allocation0 [shape = 'u32[]', space=smem, size = 0x4, offset = 0x4, fixed_abs, tag = 'smem constant byte address 0x4 - core index']
  #allocation1 [shape = 'u32[72,128]{1,0:T(1,128)}', space=vmem, size = 0x9000, scoped, tag = 'internal scratch']
  #allocation2 [shape = 'bf16[18,18,128]{2,1,0:T(8,128)(2,1)}', space=vmem, size = 0x1b000, scoped, tag = 'scratch operand']
  %s0 = inlined_call_operand.vmem [shape: bf16[2,18,18,128], index: 0, kind: input, shape index: {}]
  %s1 = inlined_call_operand.vmem [shape: bf16[1152,128], index: 1, kind: input, shape index: {}]
  %s2 = inlined_call_operand.vmem [shape: f32[1,128], index: 2, kind: input, shape index: {}]
  %s3 = inlined_call_operand.hbm [shape: bf16[1152,128], index: 3, kind: input, shape index: {}]
  %s4 = inlined_call_operand.vmem [shape: f32[1,128], index: 4, kind: input, shape index: {}]
  %s5 = inlined_call_operand.hbm [shape: f32[2,16,16,128], index: 5, kind: output, shape index: {}]
  %s6 = sld [smem:[#allocation0]]
  $region57: #{tpu_custom_call.1} parent=0
    _
  %s8 = ssub.s32 1, %s6
  %s9 = scalar_select 0, %s8, %s6
  $region1: #{tpu_custom_call.1} parent=0
    #allocation3 [shape = 'u8[294912]{0}', space=vmem, size = 0x48000, scoped, tag = 'input window, operand 3, single buffered']
    #allocation4 [shape = 's32[2]{0}', space=sflag, size = 0x8, scoped, tag = 'scoped memory for tpu_custom_call.1']
    #allocation5 [shape = 's32[2]{0}', space=sflag, size = 0x8, scoped, tag = 'scoped memory for tpu_custom_call.1']
    #allocation6 [shape = 'u8[262144]{0}', space=vmem, size = 0x40000, scoped, tag = 'output window, operand 0']
    %10 = vsyncpa [#allocation4], 0
    %11 = vsyncpa [#allocation5], 0
    %s12 = scalar_lea.sflag [#allocation5], 1
    %13 = vsyncpa %s12, 0
    loop: start=0, step=1, limit=4
    $region2: #{tpu_custom_call.1} parent=1 // loop_pre_header
      _
    $region3: #{tpu_custom_call.1} parent=1 // loop_header
      %s15 = sphi 0, %s19
      %p16 = scmp.ge.s32.totalorder %s15, 4
      %s25 = sphi 0, %s27
      %s28 = sphi 0, %s25
      %s29 = sphi 0, %s28
      %s45 = sphi 0, %s29
      %s49 = sphi 0, %s49
      %s51 = sphi 0, %s49
      %s52 = sphi 0, %s51
      %s66 = sphi 0, %s52
      %s70 = sphi 0, %s70
      %s72 = sphi 0, %s70
      %s73 = sphi 0, %s72
      %s87 = sphi 0, %s73
      %s91 = sphi 0, %s91
      %s93 = sphi 0, %s91
      %s94 = sphi 0, %s93
      %s108 = sphi 0, %s94
      %s112 = sphi 0, %s112
      %s114 = sphi 0, %s112
      %s115 = sphi 0, %s114
      %s129 = sphi 0, %s115
      %s135 = sphi 0, %s137
      %s138 = sphi 0, %s135
      %s139 = sphi 0, %s138
      %s155 = sphi 0, %s139
    $region4: #{tpu_custom_call.1} parent=1 // loop_header_branch
      %18 = sbr.rel (%p16) target = $region8
    $region5: #{tpu_custom_call.1} parent=1 // loop_body
      %s20 = ssub.s32 %s15, 1
      %s21 = ssub.s32 %s15, 2
      %s22 = sadd.s32 %s15, 1
      %s23 = ssub.s32 %s15, %s22
      %p24 = scmp.eq.s32.totalorder %s23, 0
      %s26 = sadd.s32 %s25, 1
      %s27 = scalar_select %p24, %s25, %s26
      %p30 = pneg %p24
      %p31 = scmp.eq.s32.totalorder %s15, 1
      %p32 = por %p30, %p31
      %p33 = scmp.ne.s32.totalorder %s25, %s28
      %p34 = scmp.eq.s32.totalorder %s15, 0
      %p35 = por %p33, %p34
      %p36 = scmp.ne.s32.totalorder %s25, %s28
      %p37 = scmp.eq.s32.totalorder %s20, 1
      %p38 = por %p36, %p37
      %p39 = scmp.ne.s32.totalorder %s28, %s29
      %p40 = scmp.eq.s32.totalorder %s20, 0
      %p41 = por %p39, %p40
      %p42 = scmp.ne.s32.totalorder %s28, %s29
      %p43 = scmp.eq.s32.totalorder %s21, 1
      %p44 = por %p42, %p43
      %p46 = scmp.ne.s32.totalorder %s29, %s45
      %p47 = scmp.eq.s32.totalorder %s21, 0
      %p48 = por %p46, %p47
      %s50 = sadd.s32 %s49, 1
      %p53 = scmp.eq.s32.totalorder %s15, 1
      %p54 = scmp.ne.s32.totalorder %s49, %s51
      %p55 = scmp.eq.s32.totalorder %s15, 0
      %p56 = por %p54, %p55
      %p57 = scmp.ne.s32.totalorder %s49, %s51
      %p58 = scmp.eq.s32.totalorder %s20, 1
      %p59 = por %p57, %p58
      %p60 = scmp.ne.s32.totalorder %s51, %s52
      %p61 = scmp.eq.s32.totalorder %s20, 0
      %p62 = por %p60, %p61
      %p63 = scmp.ne.s32.totalorder %s51, %s52
      %p64 = scmp.eq.s32.totalorder %s21, 1
      %p65 = por %p63, %p64
      %p67 = scmp.ne.s32.totalorder %s52, %s66
      %p68 = scmp.eq.s32.totalorder %s21, 0
      %p69 = por %p67, %p68
      %s71 = sadd.s32 %s70, 1
      %p74 = scmp.eq.s32.totalorder %s15, 1
      %p75 = scmp.ne.s32.totalorder %s70, %s72
      %p76 = scmp.eq.s32.totalorder %s15, 0
      %p77 = por %p75, %p76
      %p78 = scmp.ne.s32.totalorder %s70, %s72
      %p79 = scmp.eq.s32.totalorder %s20, 1
      %p80 = por %p78, %p79
      %p81 = scmp.ne.s32.totalorder %s72, %s73
      %p82 = scmp.eq.s32.totalorder %s20, 0
      %p83 = por %p81, %p82
      %p84 = scmp.ne.s32.totalorder %s72, %s73
      %p85 = scmp.eq.s32.totalorder %s21, 1
      %p86 = por %p84, %p85
      %p88 = scmp.ne.s32.totalorder %s73, %s87
      %p89 = scmp.eq.s32.totalorder %s21, 0
      %p90 = por %p88, %p89
      %s92 = sadd.s32 %s91, 1
      %p95 = scmp.eq.s32.totalorder %s15, 1
      %p96 = scmp.ne.s32.totalorder %s91, %s93
      %p97 = scmp.eq.s32.totalorder %s15, 0
      %p98 = por %p96, %p97
      %p99 = scmp.ne.s32.totalorder %s91, %s93
      %p100 = scmp.eq.s32.totalorder %s20, 1
      %p101 = por %p99, %p100
      %p102 = scmp.ne.s32.totalorder %s93, %s94
      %p103 = scmp.eq.s32.totalorder %s20, 0
      %p104 = por %p102, %p103
      %p105 = scmp.ne.s32.totalorder %s93, %s94
      %p106 = scmp.eq.s32.totalorder %s21, 1
      %p107 = por %p105, %p106
      %p109 = scmp.ne.s32.totalorder %s94, %s108
      %p110 = scmp.eq.s32.totalorder %s21, 0
      %p111 = por %p109, %p110
      %s113 = sadd.s32 %s112, 1
      %p116 = scmp.eq.s32.totalorder %s15, 1
      %p117 = scmp.ne.s32.totalorder %s112, %s114
      %p118 = scmp.eq.s32.totalorder %s15, 0
      %p119 = por %p117, %p118
      %p120 = scmp.ne.s32.totalorder %s112, %s114
      %p121 = scmp.eq.s32.totalorder %s20, 1
      %p122 = por %p120, %p121
      %p123 = scmp.ne.s32.totalorder %s114, %s115
      %p124 = scmp.eq.s32.totalorder %s20, 0
      %p125 = por %p123, %p124
      %p126 = scmp.ne.s32.totalorder %s114, %s115
      %p127 = scmp.eq.s32.totalorder %s21, 1
      %p128 = por %p126, %p127
      %p130 = scmp.ne.s32.totalorder %s115, %s129
      %p131 = scmp.eq.s32.totalorder %s21, 0
      %p132 = por %p130, %p131
      %s133 = ssub.s32 %s15, %s22
      %p134 = scmp.eq.s32.totalorder %s133, 0
      %s136 = sadd.s32 %s135, 1
      %s137 = scalar_select %p134, %s135, %s136
      %p140 = pneg %p134
      %p141 = scmp.eq.s32.totalorder %s15, 1
      %p142 = por %p140, %p141
      %p143 = scmp.ne.s32.totalorder %s135, %s138
      %p144 = scmp.eq.s32.totalorder %s15, 0
      %p145 = por %p143, %p144
      %p146 = scmp.ne.s32.totalorder %s135, %s138
      %p147 = scmp.eq.s32.totalorder %s20, 1
      %p148 = por %p146, %p147
      %p149 = scmp.ne.s32.totalorder %s138, %s139
      %p150 = scmp.eq.s32.totalorder %s20, 0
      %p151 = por %p149, %p150
      %p152 = scmp.ne.s32.totalorder %s138, %s139
      %p153 = scmp.eq.s32.totalorder %s21, 1
      %p154 = por %p152, %p153
      %p156 = scmp.ne.s32.totalorder %s139, %s155
      %p157 = scmp.eq.s32.totalorder %s21, 0
      %p158 = por %p156, %p157
      %p159 = scmp.le.s32.totalorder 1, %s15
      %p160 = scmp.lt.s32.totalorder %s15, 3
      %p161 = pnand %p159, %p160
      %p162 = pneg %p161
      // Predicated region
      $region9: #{tpu_custom_call.1} parent=5 // pred_check
        _
      $region10: #{tpu_custom_call.1} parent=5 // pred_check_branch
        %164 = sbr.rel (%p161) target = $region12
      $region11: #{tpu_custom_call.1} parent=5 // pred_region
        %s165 = ssub.s32 %s15, 1
        // Predicated region
        $region13: #{tpu_custom_call.1} parent=11 // pred_check
          %p166 = pneg %p62
        $region14: #{tpu_custom_call.1} parent=11 // pred_check_branch
          %168 = sbr.rel (%p166) target = $region16
        $region15: #{tpu_custom_call.1} parent=11 // pred_region
          _
        $region16: #{tpu_custom_call.1} parent=11 // pred_fallthru
          _
        // Predicated region
        $region17: #{tpu_custom_call.1} parent=11 // pred_check
          %p169 = pneg %p83
        $region18: #{tpu_custom_call.1} parent=11 // pred_check_branch
          %171 = sbr.rel (%p169) target = $region20
        $region19: #{tpu_custom_call.1} parent=11 // pred_region
          _
        $region20: #{tpu_custom_call.1} parent=11 // pred_fallthru
          _
        // Predicated region
        $region21: #{tpu_custom_call.1} parent=11 // pred_check
          %p172 = pneg %p104
        $region22: #{tpu_custom_call.1} parent=11 // pred_check_branch
          %174 = sbr.rel (%p172) target = $region24
        $region23: #{tpu_custom_call.1} parent=11 // pred_region
          %176 = vsyncadd [#allocation4], 0
          %s177 = sshll.u32 %s3, 4
          %s178 = int_to_ptr.hbm [resolvable:$true] %s177
          %s179 = sshll.u32 [#allocation3], 4
          %s180 = int_to_ptr.vmem [resolvable:$true] %s179
          %185 = dma.hbm_to_vmem [thread:$0]  %s178, 9216, %s180, [#allocation4], 64, 64, 4
        $region24: #{tpu_custom_call.1} parent=11 // pred_fallthru
          _
        // Predicated region
        $region25: #{tpu_custom_call.1} parent=11 // pred_check
          %p186 = pneg %p125
        $region26: #{tpu_custom_call.1} parent=11 // pred_check_branch
          %188 = sbr.rel (%p186) target = $region28
        $region27: #{tpu_custom_call.1} parent=11 // pred_region
          _
        $region28: #{tpu_custom_call.1} parent=11 // pred_fallthru
          _
      $region12: #{tpu_custom_call.1} parent=5 // pred_fallthru
        _
      %p189 = scmp.lt.s32.totalorder %s15, 2
      // Predicated region
      $region29: #{tpu_custom_call.1} parent=5 // pred_check
        %p190 = pneg %p189
      $region30: #{tpu_custom_call.1} parent=5 // pred_check_branch
        %192 = sbr.rel (%p190) target = $region32
      $region31: #{tpu_custom_call.1} parent=5 // pred_region
        // Predicated region
        $region33: #{tpu_custom_call.1} parent=31 // pred_check
          %p193 = pneg %p35
        $region34: #{tpu_custom_call.1} parent=31 // pred_check_branch
          %195 = sbr.rel (%p193) target = $region36
        $region35: #{tpu_custom_call.1} parent=31 // pred_region
          %p196 = scmp.lt.s32.totalorder %s15, 1
          %s197 = scalar_select %p196, %s15, 1
          %s198 = smul.addr %s197, 54
          %s199 = smul.addr %s198, 4
          %s200 = scalar_lea.vmem %s0, %s199
        $region36: #{tpu_custom_call.1} parent=31 // pred_fallthru
          _
      $region32: #{tpu_custom_call.1} parent=5 // pred_fallthru
        _
      %p201 = scmp.le.s32.totalorder 1, %s15
      %p202 = scmp.lt.s32.totalorder %s15, 3
      %p203 = pnand %p201, %p202
      %p204 = pneg %p203
      // Predicated region
      $region37: #{tpu_custom_call.1} parent=5 // pred_check
        _
      $region38: #{tpu_custom_call.1} parent=5 // pred_check_branch
        %206 = sbr.rel (%p203) target = $region40
      $region39: #{tpu_custom_call.1} parent=5 // pred_region
        %s207 = ssub.s32 %s15, 1
        // Predicated region
        $region41: #{tpu_custom_call.1} parent=39 // pred_check
          %p208 = pneg %p104
        $region42: #{tpu_custom_call.1} parent=39 // pred_check_branch
          %210 = sbr.rel (%p208) target = $region44
        $region43: #{tpu_custom_call.1} parent=39 // pred_region
          %212 = dma.done [#allocation4], 9216
        $region44: #{tpu_custom_call.1} parent=39 // pred_fallthru
          _
        %p213 = scmp.lt.s32.totalorder %s20, 1
        %s214 = scalar_select %p213, %s20, 1
        %s215 = smul.addr %s214, 54
        %s216 = smul.addr %s215, 4
        %s217 = scalar_lea.vmem %s0, %s216
        %p218 = pneg %p41
        %p219 = pneg %p38
        %p220 = pneg %p62
        %p221 = pneg %p59
        %p222 = pneg %p83
        %p223 = pneg %p80
        %p224 = pneg %p104
        %p225 = pneg %p101
        %p226 = pneg %p125
        %p227 = pneg %p122
        %p228 = pneg %p151
        %p229 = pneg %p148
        %s230 = sand.u32 %s138, 1
        %s231 = scalar_lea.sflag [#allocation5], %s230
        %s232 = sand.u32 %s138, 1
        %s233 = smul.addr %s232, 256
        %s234 = scalar_lea.vmem [#allocation6], %s233
        %p235 = scmp.lt.s32.totalorder %s20, 1
        %s236 = scalar_select %p235, %s20, 1
        %s237 = smul.addr %s236, 54
        %s238 = smul.addr %s237, 4
        %s239 = scalar_lea.vmem %s0, %s238
        %v241 = vld [vmem:[%s239] sm:$0xf]
        %v242 = vld [vmem:[%s239 + $0x4] sm:$0xf]
        %v243 = vld [vmem:[%s239 + $0x8] sm:$0x1]
        %v244 = vld [vmem:[%s239 + $0xc] sm:$0xf]
        %v245 = vld [vmem:[%s239 + $0x10] sm:$0xf]
        %v246 = vld [vmem:[%s239 + $0x14] sm:$0x1]
        %v247 = vld [vmem:[%s239 + $0x18] sm:$0xf]
        %v248 = vld [vmem:[%s239 + $0x1c] sm:$0xf]
        %v249 = vld [vmem:[%s239 + $0x20] sm:$0x1]
        %v250 = vld [vmem:[%s239 + $0x24] sm:$0xf]
        %v251 = vld [vmem:[%s239 + $0x28] sm:$0xf]
        %v252 = vld [vmem:[%s239 + $0x2c] sm:$0x1]
        %v253 = vld [vmem:[%s239 + $0x30] sm:$0xf]
        %v254 = vld [vmem:[%s239 + $0x34] sm:$0xf]
        %v255 = vld [vmem:[%s239 + $0x38] sm:$0x1]
        %v256 = vld [vmem:[%s239 + $0x3c] sm:$0xf]
        %v257 = vld [vmem:[%s239 + $0x40] sm:$0xf]
        %v258 = vld [vmem:[%s239 + $0x44] sm:$0x1]
        %v259 = vld [vmem:[%s239 + $0x48] sm:$0xf]
        %v260 = vld [vmem:[%s239 + $0x4c] sm:$0xf]
        %v261 = vld [vmem:[%s239 + $0x50] sm:$0x1]
        %v262 = vld [vmem:[%s239 + $0x54] sm:$0xf]
        %v263 = vld [vmem:[%s239 + $0x58] sm:$0xf]
        %v264 = vld [vmem:[%s239 + $0x5c] sm:$0x1]
        %v265 = vld [vmem:[%s239 + $0x60] sm:$0xf]
        %v266 = vld [vmem:[%s239 + $0x64] sm:$0xf]
        %v267 = vld [vmem:[%s239 + $0x68] sm:$0x1]
        %v268 = vld [vmem:[%s239 + $0x6c] sm:$0xf]
        %v269 = vld [vmem:[%s239 + $0x70] sm:$0xf]
        %v270 = vld [vmem:[%s239 + $0x74] sm:$0x1]
        %v271 = vld [vmem:[%s239 + $0x78] sm:$0xf]
        %v272 = vld [vmem:[%s239 + $0x7c] sm:$0xf]
        %v273 = vld [vmem:[%s239 + $0x80] sm:$0x1]
        %v274 = vld [vmem:[%s239 + $0x84] sm:$0xf]
        %v275 = vld [vmem:[%s239 + $0x88] sm:$0xf]
        %v276 = vld [vmem:[%s239 + $0x8c] sm:$0x1]
        %v277 = vld [vmem:[%s239 + $0x90] sm:$0xf]
        %v278 = vld [vmem:[%s239 + $0x94] sm:$0xf]
        %v279 = vld [vmem:[%s239 + $0x98] sm:$0x1]
        %v280 = vld [vmem:[%s239 + $0x9c] sm:$0xf]
        %v281 = vld [vmem:[%s239 + $0xa0] sm:$0xf]
        %v282 = vld [vmem:[%s239 + $0xa4] sm:$0x1]
        %v283 = vld [vmem:[%s239 + $0xa8] sm:$0xf]
        %v284 = vld [vmem:[%s239 + $0xac] sm:$0xf]
        %v285 = vld [vmem:[%s239 + $0xb0] sm:$0x1]
        %v286 = vld [vmem:[%s239 + $0xb4] sm:$0xf]
        %v287 = vld [vmem:[%s239 + $0xb8] sm:$0xf]
        %v288 = vld [vmem:[%s239 + $0xbc] sm:$0x1]
        %v289 = vld [vmem:[%s239 + $0xc0] sm:$0xf]
        %v290 = vld [vmem:[%s239 + $0xc4] sm:$0xf]
        %v291 = vld [vmem:[%s239 + $0xc8] sm:$0x1]
        %v292 = vld [vmem:[%s239 + $0xcc] sm:$0xf]
        %v293 = vld [vmem:[%s239 + $0xd0] sm:$0xf]
        %v294 = vld [vmem:[%s239 + $0xd4] sm:$0x1]
        %vm295 = vsmask.f32 3328
        %vm296 = vsmask.f32 7440
        %vm297 = vmor %vm295, %vm296
        %v299 = vshrl.u32 %v241, 16
        %v301 = vrot.slane %v299, 4
        %v302 = vshll.u32 %v241, 16
        %v304 = vrot.slane %v302, 5
        %v305 = vor.u32 %v301, %v304
        %v306 = vrot.slane %v305, 4
        %v308 = vshll.u32 %v242, 16
        %v310 = vrot.slane %v308, 5
        %v311 = vsel %vm297, %v306, %v310
        %v312 = vshrl.u32 %v242, 16
        %v314 = vrot.slane %v312, 4
        %v315 = vor.u32 %v314, %v310
        %v316 = vrot.slane %v315, 4
        %v318 = vshll.u32 %v243, 16
        %v320 = vrot.slane %v318, 5
        %v321 = vsel %vm297, %v316, %v320
        %v323 = vshrl.u32 %v244, 16
        %v325 = vrot.slane %v323, 4
        %v326 = vshll.u32 %v244, 16
        %v328 = vrot.slane %v326, 5
        %v329 = vor.u32 %v325, %v328
        %v330 = vrot.slane %v329, 4
        %v332 = vshll.u32 %v245, 16
        %v334 = vrot.slane %v332, 5
        %v335 = vsel %vm297, %v330, %v334
        %v336 = vshrl.u32 %v245, 16
        %v338 = vrot.slane %v336, 4
        %v339 = vor.u32 %v338, %v334
        %v340 = vrot.slane %v339, 4
        %v342 = vshll.u32 %v246, 16
        %v344 = vrot.slane %v342, 5
        %v345 = vsel %vm297, %v340, %v344
        %v347 = vshrl.u32 %v247, 16
        %v349 = vrot.slane %v347, 4
        %v350 = vshll.u32 %v247, 16
        %v352 = vrot.slane %v350, 5
        %v353 = vor.u32 %v349, %v352
        %v354 = vrot.slane %v353, 4
        %v356 = vshll.u32 %v248, 16
        %v358 = vrot.slane %v356, 5
        %v359 = vsel %vm297, %v354, %v358
        %v360 = vshrl.u32 %v248, 16
        %v362 = vrot.slane %v360, 4
        %v363 = vor.u32 %v362, %v358
        %v364 = vrot.slane %v363, 4
        %v366 = vshll.u32 %v249, 16
        %v368 = vrot.slane %v366, 5
        %v369 = vsel %vm297, %v364, %v368
        %v371 = vshrl.u32 %v250, 16
        %v373 = vrot.slane %v371, 4
        %v374 = vshll.u32 %v250, 16
        %v376 = vrot.slane %v374, 5
        %v377 = vor.u32 %v373, %v376
        %v378 = vrot.slane %v377, 4
        %v380 = vshll.u32 %v251, 16
        %v382 = vrot.slane %v380, 5
        %v383 = vsel %vm297, %v378, %v382
        %v384 = vshrl.u32 %v251, 16
        %v386 = vrot.slane %v384, 4
        %v387 = vor.u32 %v386, %v382
        %v388 = vrot.slane %v387, 4
        %v390 = vshll.u32 %v252, 16
        %v392 = vrot.slane %v390, 5
        %v393 = vsel %vm297, %v388, %v392
        %v395 = vshrl.u32 %v253, 16
        %v397 = vrot.slane %v395, 4
        %v398 = vshll.u32 %v253, 16
        %v400 = vrot.slane %v398, 5
        %v401 = vor.u32 %v397, %v400
        %v402 = vrot.slane %v401, 4
        %v404 = vshll.u32 %v254, 16
        %v406 = vrot.slane %v404, 5
        %v407 = vsel %vm297, %v402, %v406
        %v408 = vshrl.u32 %v254, 16
        %v410 = vrot.slane %v408, 4
        %v411 = vor.u32 %v410, %v406
        %v412 = vrot.slane %v411, 4
        %v414 = vshll.u32 %v255, 16
        %v416 = vrot.slane %v414, 5
        %v417 = vsel %vm297, %v412, %v416
        %v419 = vshrl.u32 %v256, 16
        %v421 = vrot.slane %v419, 4
        %v422 = vshll.u32 %v256, 16
        %v424 = vrot.slane %v422, 5
        %v425 = vor.u32 %v421, %v424
        %v426 = vrot.slane %v425, 4
        %v428 = vshll.u32 %v257, 16
        %v430 = vrot.slane %v428, 5
        %v431 = vsel %vm297, %v426, %v430
        %v432 = vshrl.u32 %v257, 16
        %v434 = vrot.slane %v432, 4
        %v435 = vor.u32 %v434, %v430
        %v436 = vrot.slane %v435, 4
        %v438 = vshll.u32 %v258, 16
        %v440 = vrot.slane %v438, 5
        %v441 = vsel %vm297, %v436, %v440
        %v443 = vshrl.u32 %v259, 16
        %v445 = vrot.slane %v443, 4
        %v446 = vshll.u32 %v259, 16
        %v448 = vrot.slane %v446, 5
        %v449 = vor.u32 %v445, %v448
        %v450 = vrot.slane %v449, 4
        %v452 = vshll.u32 %v260, 16
        %v454 = vrot.slane %v452, 5
        %v455 = vsel %vm297, %v450, %v454
        %v456 = vshrl.u32 %v260, 16
        %v458 = vrot.slane %v456, 4
        %v459 = vor.u32 %v458, %v454
        %v460 = vrot.slane %v459, 4
        %v462 = vshll.u32 %v261, 16
        %v464 = vrot.slane %v462, 5
        %v465 = vsel %vm297, %v460, %v464
        %v467 = vshrl.u32 %v262, 16
        %v469 = vrot.slane %v467, 4
        %v470 = vshll.u32 %v262, 16
        %v472 = vrot.slane %v470, 5
        %v473 = vor.u32 %v469, %v472
        %v474 = vrot.slane %v473, 4
        %v476 = vshll.u32 %v263, 16
        %v478 = vrot.slane %v476, 5
        %v479 = vsel %vm297, %v474, %v478
        %v480 = vshrl.u32 %v263, 16
        %v482 = vrot.slane %v480, 4
        %v483 = vor.u32 %v482, %v478
        %v484 = vrot.slane %v483, 4
        %v486 = vshll.u32 %v264, 16
        %v488 = vrot.slane %v486, 5
        %v489 = vsel %vm297, %v484, %v488
        %v491 = vshrl.u32 %v265, 16
        %v493 = vrot.slane %v491, 4
        %v494 = vshll.u32 %v265, 16
        %v496 = vrot.slane %v494, 5
        %v497 = vor.u32 %v493, %v496
        %v498 = vrot.slane %v497, 4
        %v500 = vshll.u32 %v266, 16
        %v502 = vrot.slane %v500, 5
        %v503 = vsel %vm297, %v498, %v502
        %v504 = vshrl.u32 %v266, 16
        %v506 = vrot.slane %v504, 4
        %v507 = vor.u32 %v506, %v502
        %v508 = vrot.slane %v507, 4
        %v510 = vshll.u32 %v267, 16
        %v512 = vrot.slane %v510, 5
        %v513 = vsel %vm297, %v508, %v512
        %v515 = vshrl.u32 %v268, 16
        %v517 = vrot.slane %v515, 4
        %v518 = vshll.u32 %v268, 16
        %v520 = vrot.slane %v518, 5
        %v521 = vor.u32 %v517, %v520
        %v522 = vrot.slane %v521, 4
        %v524 = vshll.u32 %v269, 16
        %v526 = vrot.slane %v524, 5
        %v527 = vsel %vm297, %v522, %v526
        %v528 = vshrl.u32 %v269, 16
        %v530 = vrot.slane %v528, 4
        %v531 = vor.u32 %v530, %v526
        %v532 = vrot.slane %v531, 4
        %v534 = vshll.u32 %v270, 16
        %v536 = vrot.slane %v534, 5
        %v537 = vsel %vm297, %v532, %v536
        %v539 = vshrl.u32 %v271, 16
        %v541 = vrot.slane %v539, 4
        %v542 = vshll.u32 %v271, 16
        %v544 = vrot.slane %v542, 5
        %v545 = vor.u32 %v541, %v544
        %v546 = vrot.slane %v545, 4
        %v548 = vshll.u32 %v272, 16
        %v550 = vrot.slane %v548, 5
        %v551 = vsel %vm297, %v546, %v550
        %v552 = vshrl.u32 %v272, 16
        %v554 = vrot.slane %v552, 4
        %v555 = vor.u32 %v554, %v550
        %v556 = vrot.slane %v555, 4
        %v558 = vshll.u32 %v273, 16
        %v560 = vrot.slane %v558, 5
        %v561 = vsel %vm297, %v556, %v560
        %v563 = vshrl.u32 %v274, 16
        %v565 = vrot.slane %v563, 4
        %v566 = vshll.u32 %v274, 16
        %v568 = vrot.slane %v566, 5
        %v569 = vor.u32 %v565, %v568
        %v570 = vrot.slane %v569, 4
        %v572 = vshll.u32 %v275, 16
        %v574 = vrot.slane %v572, 5
        %v575 = vsel %vm297, %v570, %v574
        %v576 = vshrl.u32 %v275, 16
        %v578 = vrot.slane %v576, 4
        %v579 = vor.u32 %v578, %v574
        %v580 = vrot.slane %v579, 4
        %v582 = vshll.u32 %v276, 16
        %v584 = vrot.slane %v582, 5
        %v585 = vsel %vm297, %v580, %v584
        %v587 = vshrl.u32 %v277, 16
        %v589 = vrot.slane %v587, 4
        %v590 = vshll.u32 %v277, 16
        %v592 = vrot.slane %v590, 5
        %v593 = vor.u32 %v589, %v592
        %v594 = vrot.slane %v593, 4
        %v596 = vshll.u32 %v278, 16
        %v598 = vrot.slane %v596, 5
        %v599 = vsel %vm297, %v594, %v598
        %v600 = vshrl.u32 %v278, 16
        %v602 = vrot.slane %v600, 4
        %v603 = vor.u32 %v602, %v598
        %v604 = vrot.slane %v603, 4
        %v606 = vshll.u32 %v279, 16
        %v608 = vrot.slane %v606, 5
        %v609 = vsel %vm297, %v604, %v608
        %v611 = vshrl.u32 %v280, 16
        %v613 = vrot.slane %v611, 4
        %v614 = vshll.u32 %v280, 16
        %v616 = vrot.slane %v614, 5
        %v617 = vor.u32 %v613, %v616
        %v618 = vrot.slane %v617, 4
        %v620 = vshll.u32 %v281, 16
        %v622 = vrot.slane %v620, 5
        %v623 = vsel %vm297, %v618, %v622
        %v624 = vshrl.u32 %v281, 16
        %v626 = vrot.slane %v624, 4
        %v627 = vor.u32 %v626, %v622
        %v628 = vrot.slane %v627, 4
        %v630 = vshll.u32 %v282, 16
        %v632 = vrot.slane %v630, 5
        %v633 = vsel %vm297, %v628, %v632
        %v635 = vshrl.u32 %v283, 16
        %v637 = vrot.slane %v635, 4
        %v638 = vshll.u32 %v283, 16
        %v640 = vrot.slane %v638, 5
        %v641 = vor.u32 %v637, %v640
        %v642 = vrot.slane %v641, 4
        %v644 = vshll.u32 %v284, 16
        %v646 = vrot.slane %v644, 5
        %v647 = vsel %vm297, %v642, %v646
        %v648 = vshrl.u32 %v284, 16
        %v650 = vrot.slane %v648, 4
        %v651 = vor.u32 %v650, %v646
        %v652 = vrot.slane %v651, 4
        %v654 = vshll.u32 %v285, 16
        %v656 = vrot.slane %v654, 5
        %v657 = vsel %vm297, %v652, %v656
        %v659 = vshrl.u32 %v286, 16
        %v661 = vrot.slane %v659, 4
        %v662 = vshll.u32 %v286, 16
        %v664 = vrot.slane %v662, 5
        %v665 = vor.u32 %v661, %v664
        %v666 = vrot.slane %v665, 4
        %v668 = vshll.u32 %v287, 16
        %v670 = vrot.slane %v668, 5
        %v671 = vsel %vm297, %v666, %v670
        %v672 = vshrl.u32 %v287, 16
        %v674 = vrot.slane %v672, 4
        %v675 = vor.u32 %v674, %v670
        %v676 = vrot.slane %v675, 4
        %v678 = vshll.u32 %v288, 16
        %v680 = vrot.slane %v678, 5
        %v681 = vsel %vm297, %v676, %v680
        %vm730 = vcmask 1042432
        %vm731 = vcmask 1046532
        %vm732 = vmor %vm730, %vm731
        %v733 = vrot.slane %v241, 5
        %v734 = vrot.slane %v733, 4
        %v735 = vrot.slane %v242, 5
        %v736 = vsel %vm732, %v734, %v735
        %v737 = vrot.slane %v735, 4
        %v738 = vrot.slane %v243, 5
        %v739 = vsel %vm732, %v737, %v738
        %v740 = vrot.slane %v244, 5
        %v741 = vrot.slane %v740, 4
        %v742 = vrot.slane %v245, 5
        %v743 = vsel %vm732, %v741, %v742
        %v744 = vrot.slane %v742, 4
        %v745 = vrot.slane %v246, 5
        %v746 = vsel %vm732, %v744, %v745
        %v747 = vrot.slane %v247, 5
        %v748 = vrot.slane %v747, 4
        %v749 = vrot.slane %v248, 5
        %v750 = vsel %vm732, %v748, %v749
        %v751 = vrot.slane %v749, 4
        %v752 = vrot.slane %v249, 5
        %v753 = vsel %vm732, %v751, %v752
        %v754 = vrot.slane %v250, 5
        %v755 = vrot.slane %v754, 4
        %v756 = vrot.slane %v251, 5
        %v757 = vsel %vm732, %v755, %v756
        %v758 = vrot.slane %v756, 4
        %v759 = vrot.slane %v252, 5
        %v760 = vsel %vm732, %v758, %v759
        %v761 = vrot.slane %v253, 5
        %v762 = vrot.slane %v761, 4
        %v763 = vrot.slane %v254, 5
        %v764 = vsel %vm732, %v762, %v763
        %v765 = vrot.slane %v763, 4
        %v766 = vrot.slane %v255, 5
        %v767 = vsel %vm732, %v765, %v766
        %v768 = vrot.slane %v256, 5
        %v769 = vrot.slane %v768, 4
        %v770 = vrot.slane %v257, 5
        %v771 = vsel %vm732, %v769, %v770
        %v772 = vrot.slane %v770, 4
        %v773 = vrot.slane %v258, 5
        %v774 = vsel %vm732, %v772, %v773
        %v775 = vrot.slane %v259, 5
        %v776 = vrot.slane %v775, 4
        %v777 = vrot.slane %v260, 5
        %v778 = vsel %vm732, %v776, %v777
        %v779 = vrot.slane %v777, 4
        %v780 = vrot.slane %v261, 5
        %v781 = vsel %vm732, %v779, %v780
        %v782 = vrot.slane %v262, 5
        %v783 = vrot.slane %v782, 4
        %v784 = vrot.slane %v263, 5
        %v785 = vsel %vm732, %v783, %v784
        %v786 = vrot.slane %v784, 4
        %v787 = vrot.slane %v264, 5
        %v788 = vsel %vm732, %v786, %v787
        %v789 = vrot.slane %v265, 5
        %v790 = vrot.slane %v789, 4
        %v791 = vrot.slane %v266, 5
        %v792 = vsel %vm732, %v790, %v791
        %v793 = vrot.slane %v791, 4
        %v794 = vrot.slane %v267, 5
        %v795 = vsel %vm732, %v793, %v794
        %v796 = vrot.slane %v268, 5
        %v797 = vrot.slane %v796, 4
        %v798 = vrot.slane %v269, 5
        %v799 = vsel %vm732, %v797, %v798
        %v800 = vrot.slane %v798, 4
        %v801 = vrot.slane %v270, 5
        %v802 = vsel %vm732, %v800, %v801
        %v803 = vrot.slane %v271, 5
        %v804 = vrot.slane %v803, 4
        %v805 = vrot.slane %v272, 5
        %v806 = vsel %vm732, %v804, %v805
        %v807 = vrot.slane %v805, 4
        %v808 = vrot.slane %v273, 5
        %v809 = vsel %vm732, %v807, %v808
        %v810 = vrot.slane %v274, 5
        %v811 = vrot.slane %v810, 4
        %v812 = vrot.slane %v275, 5
        %v813 = vsel %vm732, %v811, %v812
        %v814 = vrot.slane %v812, 4
        %v815 = vrot.slane %v276, 5
        %v816 = vsel %vm732, %v814, %v815
        %v817 = vrot.slane %v277, 5
        %v818 = vrot.slane %v817, 4
        %v819 = vrot.slane %v278, 5
        %v820 = vsel %vm732, %v818, %v819
        %v821 = vrot.slane %v819, 4
        %v822 = vrot.slane %v279, 5
        %v823 = vsel %vm732, %v821, %v822
        %v824 = vrot.slane %v280, 5
        %v825 = vrot.slane %v824, 4
        %v826 = vrot.slane %v281, 5
        %v827 = vsel %vm732, %v825, %v826
        %v828 = vrot.slane %v826, 4
        %v829 = vrot.slane %v282, 5
        %v830 = vsel %vm732, %v828, %v829
        %v831 = vrot.slane %v283, 5
        %v832 = vrot.slane %v831, 4
        %v833 = vrot.slane %v284, 5
        %v834 = vsel %vm732, %v832, %v833
        %v835 = vrot.slane %v833, 4
        %v836 = vrot.slane %v285, 5
        %v837 = vsel %vm732, %v835, %v836
        %v838 = vrot.slane %v286, 5
        %v839 = vrot.slane %v838, 4
        %v840 = vrot.slane %v287, 5
        %v841 = vsel %vm732, %v839, %v840
        %v842 = vrot.slane %v840, 4
        %v843 = vrot.slane %v288, 5
        %v844 = vsel %vm732, %v842, %v843
        %v846 = vshrl.u32 %v289, 16
        %v848 = vrot.slane %v846, 4
        %v849 = vshll.u32 %v289, 16
        %v851 = vrot.slane %v849, 5
        %v852 = vor.u32 %v848, %v851
        %v853 = vrot.slane %v852, 4
        %v855 = vshll.u32 %v290, 16
        %v857 = vrot.slane %v855, 5
        %v858 = vsel %vm297, %v853, %v857
        %v859 = vshrl.u32 %v290, 16
        %v861 = vrot.slane %v859, 4
        %v862 = vor.u32 %v861, %v857
        %v863 = vrot.slane %v862, 4
        %v865 = vshll.u32 %v291, 16
        %v867 = vrot.slane %v865, 5
        %v868 = vsel %vm297, %v863, %v867
        %v872 = vrot.slane %v289, 5
        %v873 = vrot.slane %v872, 4
        %v874 = vrot.slane %v290, 5
        %v875 = vsel %vm732, %v873, %v874
        %v876 = vrot.slane %v874, 4
        %v877 = vrot.slane %v291, 5
        %v878 = vsel %vm732, %v876, %v877
        %v880 = vshrl.u32 %v292, 16
        %v882 = vrot.slane %v880, 4
        %v883 = vshll.u32 %v292, 16
        %v885 = vrot.slane %v883, 5
        %v886 = vor.u32 %v882, %v885
        %v887 = vrot.slane %v886, 4
        %v889 = vshll.u32 %v293, 16
        %v891 = vrot.slane %v889, 5
        %v892 = vsel %vm297, %v887, %v891
        %v893 = vshrl.u32 %v293, 16
        %v895 = vrot.slane %v893, 4
        %v896 = vor.u32 %v895, %v891
        %v897 = vrot.slane %v896, 4
        %v899 = vshll.u32 %v294, 16
        %v901 = vrot.slane %v899, 5
        %v902 = vsel %vm297, %v897, %v901
        %v906 = vrot.slane %v292, 5
        %v907 = vrot.slane %v906, 4
        %v908 = vrot.slane %v293, 5
        %v909 = vsel %vm732, %v907, %v908
        %v910 = vrot.slane %v908, 4
        %v911 = vrot.slane %v294, 5
        %v912 = vsel %vm732, %v910, %v911
        %v913 = vunpack.c.l.b16 %v241
        %v914 = vunpack.c.l.b16 %v242
        %v915 = vunpack.c.l.b16 %v244
        %v916 = vunpack.c.l.b16 %v245
        %v917 = vunpack.c.l.b16 %v247
        %v918 = vunpack.c.l.b16 %v248
        %v919 = vunpack.c.l.b16 %v250
        %v920 = vunpack.c.l.b16 %v251
        %v921 = vunpack.c.l.b16 %v253
        %v922 = vunpack.c.l.b16 %v254
        %v923 = vunpack.c.l.b16 %v256
        %v924 = vunpack.c.l.b16 %v257
        %v925 = vunpack.c.l.b16 %v259
        %v926 = vunpack.c.l.b16 %v260
        %v927 = vunpack.c.l.b16 %v262
        %v928 = vunpack.c.l.b16 %v263
        %v929 = vunpack.c.l.b16 %v265
        %v930 = vunpack.c.l.b16 %v266
        %v931 = vunpack.c.l.b16 %v268
        %v932 = vunpack.c.l.b16 %v269
        %v933 = vunpack.c.l.b16 %v271
        %v934 = vunpack.c.l.b16 %v272
        %v935 = vunpack.c.l.b16 %v274
        %v936 = vunpack.c.l.b16 %v275
        %v937 = vunpack.c.l.b16 %v277
        %v938 = vunpack.c.l.b16 %v278
        %v939 = vunpack.c.l.b16 %v280
        %v940 = vunpack.c.l.b16 %v281
        %v941 = vunpack.c.l.b16 %v283
        %v942 = vunpack.c.l.b16 %v284
        %v943 = vunpack.c.l.b16 %v286
        %v944 = vunpack.c.l.b16 %v287
        %v945 = vpack.c.b16 %v914, %v913
        %v946 = vpack.c.b16 %v916, %v915
        %v947 = vpack.c.b16 %v918, %v917
        %v948 = vpack.c.b16 %v920, %v919
        %v949 = vpack.c.b16 %v922, %v921
        %v950 = vpack.c.b16 %v924, %v923
        %v951 = vpack.c.b16 %v926, %v925
        %v952 = vpack.c.b16 %v928, %v927
        %v953 = vpack.c.b16 %v930, %v929
        %v954 = vpack.c.b16 %v932, %v931
        %v955 = vpack.c.b16 %v934, %v933
        %v956 = vpack.c.b16 %v936, %v935
        %v957 = vpack.c.b16 %v938, %v937
        %v958 = vpack.c.b16 %v940, %v939
        %v959 = vpack.c.b16 %v942, %v941
        %v960 = vpack.c.b16 %v944, %v943
        %v977 = vunpack.c.l.b16 %v311
        %v978 = vunpack.c.l.b16 %v321
        %v979 = vunpack.c.l.b16 %v335
        %v980 = vunpack.c.l.b16 %v345
        %v981 = vunpack.c.l.b16 %v359
        %v982 = vunpack.c.l.b16 %v369
        %v983 = vunpack.c.l.b16 %v383
        %v984 = vunpack.c.l.b16 %v393
        %v985 = vunpack.c.l.b16 %v407
        %v986 = vunpack.c.l.b16 %v417
        %v987 = vunpack.c.l.b16 %v431
        %v988 = vunpack.c.l.b16 %v441
        %v989 = vunpack.c.l.b16 %v455
        %v990 = vunpack.c.l.b16 %v465
        %v991 = vunpack.c.l.b16 %v479
        %v992 = vunpack.c.l.b16 %v489
        %v993 = vunpack.c.l.b16 %v503
        %v994 = vunpack.c.l.b16 %v513
        %v995 = vunpack.c.l.b16 %v527
        %v996 = vunpack.c.l.b16 %v537
        %v997 = vunpack.c.l.b16 %v551
        %v998 = vunpack.c.l.b16 %v561
        %v999 = vunpack.c.l.b16 %v575
        %v1000 = vunpack.c.l.b16 %v585
        %v1001 = vunpack.c.l.b16 %v599
        %v1002 = vunpack.c.l.b16 %v609
        %v1003 = vunpack.c.l.b16 %v623
        %v1004 = vunpack.c.l.b16 %v633
        %v1005 = vunpack.c.l.b16 %v647
        %v1006 = vunpack.c.l.b16 %v657
        %v1007 = vunpack.c.l.b16 %v671
        %v1008 = vunpack.c.l.b16 %v681
        %v1009 = vpack.c.b16 %v978, %v977
        %v1010 = vpack.c.b16 %v980, %v979
        %v1011 = vpack.c.b16 %v982, %v981
        %v1012 = vpack.c.b16 %v984, %v983
        %v1013 = vpack.c.b16 %v986, %v985
        %v1014 = vpack.c.b16 %v988, %v987
        %v1015 = vpack.c.b16 %v990, %v989
        %v1016 = vpack.c.b16 %v992, %v991
        %v1017 = vpack.c.b16 %v994, %v993
        %v1018 = vpack.c.b16 %v996, %v995
        %v1019 = vpack.c.b16 %v998, %v997
        %v1020 = vpack.c.b16 %v1000, %v999
        %v1021 = vpack.c.b16 %v1002, %v1001
        %v1022 = vpack.c.b16 %v1004, %v1003
        %v1023 = vpack.c.b16 %v1006, %v1005
        %v1024 = vpack.c.b16 %v1008, %v1007
        %v1041 = vunpack.c.l.b16 %v736
        %v1042 = vunpack.c.l.b16 %v739
        %v1043 = vunpack.c.l.b16 %v743
        %v1044 = vunpack.c.l.b16 %v746
        %v1045 = vunpack.c.l.b16 %v750
        %v1046 = vunpack.c.l.b16 %v753
        %v1047 = vunpack.c.l.b16 %v757
        %v1048 = vunpack.c.l.b16 %v760
        %v1049 = vunpack.c.l.b16 %v764
        %v1050 = vunpack.c.l.b16 %v767
        %v1051 = vunpack.c.l.b16 %v771
        %v1052 = vunpack.c.l.b16 %v774
        %v1053 = vunpack.c.l.b16 %v778
        %v1054 = vunpack.c.l.b16 %v781
        %v1055 = vunpack.c.l.b16 %v785
        %v1056 = vunpack.c.l.b16 %v788
        %v1057 = vunpack.c.l.b16 %v792
        %v1058 = vunpack.c.l.b16 %v795
        %v1059 = vunpack.c.l.b16 %v799
        %v1060 = vunpack.c.l.b16 %v802
        %v1061 = vunpack.c.l.b16 %v806
        %v1062 = vunpack.c.l.b16 %v809
        %v1063 = vunpack.c.l.b16 %v813
        %v1064 = vunpack.c.l.b16 %v816
        %v1065 = vunpack.c.l.b16 %v820
        %v1066 = vunpack.c.l.b16 %v823
        %v1067 = vunpack.c.l.b16 %v827
        %v1068 = vunpack.c.l.b16 %v830
        %v1069 = vunpack.c.l.b16 %v834
        %v1070 = vunpack.c.l.b16 %v837
        %v1071 = vunpack.c.l.b16 %v841
        %v1072 = vunpack.c.l.b16 %v844
        %v1073 = vpack.c.b16 %v1042, %v1041
        %v1074 = vpack.c.b16 %v1044, %v1043
        %v1075 = vpack.c.b16 %v1046, %v1045
        %v1076 = vpack.c.b16 %v1048, %v1047
        %v1077 = vpack.c.b16 %v1050, %v1049
        %v1078 = vpack.c.b16 %v1052, %v1051
        %v1079 = vpack.c.b16 %v1054, %v1053
        %v1080 = vpack.c.b16 %v1056, %v1055
        %v1081 = vpack.c.b16 %v1058, %v1057
        %v1082 = vpack.c.b16 %v1060, %v1059
        %v1083 = vpack.c.b16 %v1062, %v1061
        %v1084 = vpack.c.b16 %v1064, %v1063
        %v1085 = vpack.c.b16 %v1066, %v1065
        %v1086 = vpack.c.b16 %v1068, %v1067
        %v1087 = vpack.c.b16 %v1070, %v1069
        %v1088 = vpack.c.b16 %v1072, %v1071
        %v1105 = vunpack.c.l.b16 %v289
        %v1106 = vunpack.c.l.b16 %v290
        %v1107 = vpack.c.b16 %v1106, %v1105
        %v1109 = vunpack.c.l.b16 %v858
        %v1110 = vunpack.c.l.b16 %v868
        %v1111 = vpack.c.b16 %v1110, %v1109
        %v1113 = vunpack.c.l.b16 %v875
        %v1114 = vunpack.c.l.b16 %v878
        %v1115 = vpack.c.b16 %v1114, %v1113
        %v1117 = vunpack.c.l.b16 %v292
        %v1118 = vunpack.c.l.b16 %v293
        %v1119 = vpack.c.b16 %v1118, %v1117
        %v1121 = vunpack.c.l.b16 %v892
        %v1122 = vunpack.c.l.b16 %v902
        %v1123 = vpack.c.b16 %v1122, %v1121
        %v1125 = vunpack.c.l.b16 %v909
        %v1126 = vunpack.c.l.b16 %v912
        %v1127 = vpack.c.b16 %v1126, %v1125
        %v1129 = vld [vmem:[%s1] sm:$0xf]
        %v1130 = vld [vmem:[%s1 + $0x4] sm:$0xf]
        %v1131 = vld [vmem:[%s1 + $0x8] sm:$0xf]
        %v1132 = vld [vmem:[%s1 + $0xc] sm:$0xf]
        %v1133 = vld [vmem:[%s1 + $0x10] sm:$0xf]
        %v1134 = vld [vmem:[%s1 + $0x14] sm:$0xf]
        %v1135 = vld [vmem:[%s1 + $0x18] sm:$0xf]
        %v1136 = vld [vmem:[%s1 + $0x1c] sm:$0xf]
        %v1137 = vld [vmem:[%s1 + $0x20] sm:$0xf]
        %v1138 = vld [vmem:[%s1 + $0x24] sm:$0xf]
        %v1139 = vld [vmem:[%s1 + $0x28] sm:$0xf]
        %v1140 = vld [vmem:[%s1 + $0x2c] sm:$0xf]
        %v1141 = vld [vmem:[%s1 + $0x30] sm:$0xf]
        %v1142 = vld [vmem:[%s1 + $0x34] sm:$0xf]
        %v1143 = vld [vmem:[%s1 + $0x38] sm:$0xf]
        %v1144 = vld [vmem:[%s1 + $0x3c] sm:$0xf]
        %v1145 = vld [vmem:[%s1 + $0x40] sm:$0xf]
        %v1146 = vld [vmem:[%s1 + $0x44] sm:$0xf]
        %v1147 = vld [vmem:[%s1 + $0x48] sm:$0xf]
        %v1148 = vld [vmem:[%s1 + $0x4c] sm:$0xf]
        %v1149 = vld [vmem:[%s1 + $0x50] sm:$0xf]
        %v1150 = vld [vmem:[%s1 + $0x54] sm:$0xf]
        %v1151 = vld [vmem:[%s1 + $0x58] sm:$0xf]
        %v1152 = vld [vmem:[%s1 + $0x5c] sm:$0xf]
        %v1153 = vld [vmem:[%s1 + $0x60] sm:$0xf]
        %v1154 = vld [vmem:[%s1 + $0x64] sm:$0xf]
        %v1155 = vld [vmem:[%s1 + $0x68] sm:$0xf]
        %v1156 = vld [vmem:[%s1 + $0x6c] sm:$0xf]
        %v1157 = vld [vmem:[%s1 + $0x70] sm:$0xf]
        %v1158 = vld [vmem:[%s1 + $0x74] sm:$0xf]
        %v1159 = vld [vmem:[%s1 + $0x78] sm:$0xf]
        %v1160 = vld [vmem:[%s1 + $0x7c] sm:$0xf]
        %v1161 = vld [vmem:[%s1 + $0x80] sm:$0xf]
        %v1162 = vld [vmem:[%s1 + $0x84] sm:$0xf]
        %v1163 = vld [vmem:[%s1 + $0x88] sm:$0xf]
        %v1164 = vld [vmem:[%s1 + $0x8c] sm:$0xf]
        %v1165 = vld [vmem:[%s1 + $0x90] sm:$0xf]
        %v1166 = vld [vmem:[%s1 + $0x94] sm:$0xf]
        %v1167 = vld [vmem:[%s1 + $0x98] sm:$0xf]
        %v1168 = vld [vmem:[%s1 + $0x9c] sm:$0xf]
        %v1169 = vld [vmem:[%s1 + $0xa0] sm:$0xf]
        %v1170 = vld [vmem:[%s1 + $0xa4] sm:$0xf]
        %v1171 = vld [vmem:[%s1 + $0xa8] sm:$0xf]
        %v1172 = vld [vmem:[%s1 + $0xac] sm:$0xf]
        %v1173 = vld [vmem:[%s1 + $0xb0] sm:$0xf]
        %v1174 = vld [vmem:[%s1 + $0xb4] sm:$0xf]
        %v1175 = vld [vmem:[%s1 + $0xb8] sm:$0xf]
        %v1176 = vld [vmem:[%s1 + $0xbc] sm:$0xf]
        %v1177 = vld [vmem:[%s1 + $0xc0] sm:$0xf]
        %v1178 = vld [vmem:[%s1 + $0xc4] sm:$0xf]
        %v1179 = vld [vmem:[%s1 + $0xc8] sm:$0xf]
        %v1180 = vld [vmem:[%s1 + $0xcc] sm:$0xf]
        %v1181 = vld [vmem:[%s1 + $0xd0] sm:$0xf]
        %v1182 = vld [vmem:[%s1 + $0xd4] sm:$0xf]
        %v1183 = vld [vmem:[%s1 + $0xd8] sm:$0xf]
        %v1184 = vld [vmem:[%s1 + $0xdc] sm:$0xf]
        %v1185 = vld [vmem:[%s1 + $0xe0] sm:$0xf]
        %v1186 = vld [vmem:[%s1 + $0xe4] sm:$0xf]
        %v1187 = vld [vmem:[%s1 + $0xe8] sm:$0xf]
        %v1188 = vld [vmem:[%s1 + $0xec] sm:$0xf]
        %v1189 = vld [vmem:[%s1 + $0xf0] sm:$0xf]
        %v1190 = vld [vmem:[%s1 + $0xf4] sm:$0xf]
        %v1191 = vld [vmem:[%s1 + $0xf8] sm:$0xf]
        %v1192 = vld [vmem:[%s1 + $0xfc] sm:$0xf]
        %v1193 = vld [vmem:[%s1 + $0x100] sm:$0xf]
        %v1194 = vld [vmem:[%s1 + $0x104] sm:$0xf]
        %v1195 = vld [vmem:[%s1 + $0x108] sm:$0xf]
        %v1196 = vld [vmem:[%s1 + $0x10c] sm:$0xf]
        %v1197 = vld [vmem:[%s1 + $0x110] sm:$0xf]
        %v1198 = vld [vmem:[%s1 + $0x114] sm:$0xf]
        %v1199 = vld [vmem:[%s1 + $0x118] sm:$0xf]
        %v1200 = vld [vmem:[%s1 + $0x11c] sm:$0xf]
        %v1201 = vld [vmem:[%s1 + $0x120] sm:$0xf]
        %v1202 = vld [vmem:[%s1 + $0x124] sm:$0xf]
        %v1203 = vld [vmem:[%s1 + $0x128] sm:$0xf]
        %v1204 = vld [vmem:[%s1 + $0x12c] sm:$0xf]
        %v1205 = vld [vmem:[%s1 + $0x130] sm:$0xf]
        %v1206 = vld [vmem:[%s1 + $0x134] sm:$0xf]
        %v1207 = vld [vmem:[%s1 + $0x138] sm:$0xf]
        %v1208 = vld [vmem:[%s1 + $0x13c] sm:$0xf]
        %v1209 = vld [vmem:[%s1 + $0x140] sm:$0xf]
        %v1210 = vld [vmem:[%s1 + $0x144] sm:$0xf]
        %v1211 = vld [vmem:[%s1 + $0x148] sm:$0xf]
        %v1212 = vld [vmem:[%s1 + $0x14c] sm:$0xf]
        %v1213 = vld [vmem:[%s1 + $0x150] sm:$0xf]
        %v1214 = vld [vmem:[%s1 + $0x154] sm:$0xf]
        %v1215 = vld [vmem:[%s1 + $0x158] sm:$0xf]
        %v1216 = vld [vmem:[%s1 + $0x15c] sm:$0xf]
        %v1217 = vld [vmem:[%s1 + $0x160] sm:$0xf]
        %v1218 = vld [vmem:[%s1 + $0x164] sm:$0xf]
        %v1219 = vld [vmem:[%s1 + $0x168] sm:$0xf]
        %v1220 = vld [vmem:[%s1 + $0x16c] sm:$0xf]
        %v1221 = vld [vmem:[%s1 + $0x170] sm:$0xf]
        %v1222 = vld [vmem:[%s1 + $0x174] sm:$0xf]
        %v1223 = vld [vmem:[%s1 + $0x178] sm:$0xf]
        %v1224 = vld [vmem:[%s1 + $0x17c] sm:$0xf]
        %v1225 = vld [vmem:[%s1 + $0x180] sm:$0xf]
        %v1226 = vld [vmem:[%s1 + $0x184] sm:$0xf]
        %v1227 = vld [vmem:[%s1 + $0x188] sm:$0xf]
        %v1228 = vld [vmem:[%s1 + $0x18c] sm:$0xf]
        %v1229 = vld [vmem:[%s1 + $0x190] sm:$0xf]
        %v1230 = vld [vmem:[%s1 + $0x194] sm:$0xf]
        %v1231 = vld [vmem:[%s1 + $0x198] sm:$0xf]
        %v1232 = vld [vmem:[%s1 + $0x19c] sm:$0xf]
        %v1233 = vld [vmem:[%s1 + $0x1a0] sm:$0xf]
        %v1234 = vld [vmem:[%s1 + $0x1a4] sm:$0xf]
        %v1235 = vld [vmem:[%s1 + $0x1a8] sm:$0xf]
        %v1236 = vld [vmem:[%s1 + $0x1ac] sm:$0xf]
        %v1237 = vld [vmem:[%s1 + $0x1b0] sm:$0xf]
        %v1238 = vld [vmem:[%s1 + $0x1b4] sm:$0xf]
        %v1239 = vld [vmem:[%s1 + $0x1b8] sm:$0xf]
        %v1240 = vld [vmem:[%s1 + $0x1bc] sm:$0xf]
        %v1241 = vld [vmem:[%s1 + $0x1c0] sm:$0xf]
        %v1242 = vld [vmem:[%s1 + $0x1c4] sm:$0xf]
        %v1243 = vld [vmem:[%s1 + $0x1c8] sm:$0xf]
        %v1244 = vld [vmem:[%s1 + $0x1cc] sm:$0xf]
        %v1245 = vld [vmem:[%s1 + $0x1d0] sm:$0xf]
        %v1246 = vld [vmem:[%s1 + $0x1d4] sm:$0xf]
        %v1247 = vld [vmem:[%s1 + $0x1d8] sm:$0xf]
        %v1248 = vld [vmem:[%s1 + $0x1dc] sm:$0xf]
        %v1249 = vld [vmem:[%s1 + $0x1e0] sm:$0xf]
        %v1250 = vld [vmem:[%s1 + $0x1e4] sm:$0xf]
        %v1251 = vld [vmem:[%s1 + $0x1e8] sm:$0xf]
        %v1252 = vld [vmem:[%s1 + $0x1ec] sm:$0xf]
        %v1253 = vld [vmem:[%s1 + $0x1f0] sm:$0xf]
        %v1254 = vld [vmem:[%s1 + $0x1f4] sm:$0xf]
        %v1255 = vld [vmem:[%s1 + $0x1f8] sm:$0xf]
        %v1256 = vld [vmem:[%s1 + $0x1fc] sm:$0xf]
        %v1257 = vld [vmem:[%s1 + $0x200] sm:$0xf]
        %v1258 = vld [vmem:[%s1 + $0x204] sm:$0xf]
        %v1259 = vld [vmem:[%s1 + $0x208] sm:$0xf]
        %v1260 = vld [vmem:[%s1 + $0x20c] sm:$0xf]
        %v1261 = vld [vmem:[%s1 + $0x210] sm:$0xf]
        %v1262 = vld [vmem:[%s1 + $0x214] sm:$0xf]
        %v1263 = vld [vmem:[%s1 + $0x218] sm:$0xf]
        %v1264 = vld [vmem:[%s1 + $0x21c] sm:$0xf]
        %v1265 = vld [vmem:[%s1 + $0x220] sm:$0xf]
        %v1266 = vld [vmem:[%s1 + $0x224] sm:$0xf]
        %v1267 = vld [vmem:[%s1 + $0x228] sm:$0xf]
        %v1268 = vld [vmem:[%s1 + $0x22c] sm:$0xf]
        %v1269 = vld [vmem:[%s1 + $0x230] sm:$0xf]
        %v1270 = vld [vmem:[%s1 + $0x234] sm:$0xf]
        %v1271 = vld [vmem:[%s1 + $0x238] sm:$0xf]
        %v1272 = vld [vmem:[%s1 + $0x23c] sm:$0xf]
        %v1273 = vld [vmem:[%s2] sm:$0x1]
        %v1275 = vperm.slane %v1273, 0
        %v1421 = vunpack.c.l.b16 %v1129
        %v1422 = vunpack.c.l.b16 %v1130
        %v1423 = vunpack.c.l.b16 %v1131
        %v1424 = vunpack.c.l.b16 %v1132
        %v1425 = vunpack.c.l.b16 %v1133
        %v1426 = vunpack.c.l.b16 %v1134
        %v1427 = vunpack.c.l.b16 %v1135
        %v1428 = vunpack.c.l.b16 %v1136
        %v1429 = vunpack.c.l.b16 %v1137
        %v1430 = vunpack.c.l.b16 %v1138
        %v1431 = vunpack.c.l.b16 %v1139
        %v1432 = vunpack.c.l.b16 %v1140
        %v1433 = vunpack.c.l.b16 %v1141
        %v1434 = vunpack.c.l.b16 %v1142
        %v1435 = vunpack.c.l.b16 %v1143
        %v1436 = vunpack.c.l.b16 %v1144
        %v1437 = vunpack.c.l.b16 %v1145
        %v1438 = vunpack.c.l.b16 %v1146
        %v1439 = vunpack.c.l.b16 %v1147
        %v1440 = vunpack.c.l.b16 %v1148
        %v1441 = vunpack.c.l.b16 %v1149
        %v1442 = vunpack.c.l.b16 %v1150
        %v1443 = vunpack.c.l.b16 %v1151
        %v1444 = vunpack.c.l.b16 %v1152
        %v1445 = vunpack.c.l.b16 %v1153
        %v1446 = vunpack.c.l.b16 %v1154
        %v1447 = vunpack.c.l.b16 %v1155
        %v1448 = vunpack.c.l.b16 %v1156
        %v1449 = vunpack.c.l.b16 %v1157
        %v1450 = vunpack.c.l.b16 %v1158
        %v1451 = vunpack.c.l.b16 %v1159
        %v1452 = vunpack.c.l.b16 %v1160
        %v1453 = vunpack.c.l.b16 %v1161
        %v1454 = vunpack.c.l.b16 %v1162
        %v1455 = vunpack.c.l.b16 %v1163
        %v1456 = vunpack.c.l.b16 %v1164
        %v1457 = vunpack.c.l.b16 %v1165
        %v1458 = vunpack.c.l.b16 %v1166
        %v1459 = vunpack.c.l.b16 %v1167
        %v1460 = vunpack.c.l.b16 %v1168
        %v1461 = vunpack.c.l.b16 %v1169
        %v1462 = vunpack.c.l.b16 %v1170
        %v1463 = vunpack.c.l.b16 %v1171
        %v1464 = vunpack.c.l.b16 %v1172
        %v1465 = vunpack.c.l.b16 %v1173
        %v1466 = vunpack.c.l.b16 %v1174
        %v1467 = vunpack.c.l.b16 %v1175
        %v1468 = vunpack.c.l.b16 %v1176
        %v1469 = vunpack.c.l.b16 %v1177
        %v1470 = vunpack.c.l.b16 %v1178
        %v1471 = vunpack.c.l.b16 %v1179
        %v1472 = vunpack.c.l.b16 %v1180
        %v1473 = vunpack.c.l.b16 %v1181
        %v1474 = vunpack.c.l.b16 %v1182
        %v1475 = vunpack.c.l.b16 %v1183
        %v1476 = vunpack.c.l.b16 %v1184
        %v1477 = vunpack.c.l.b16 %v1185
        %v1478 = vunpack.c.l.b16 %v1186
        %v1479 = vunpack.c.l.b16 %v1187
        %v1480 = vunpack.c.l.b16 %v1188
        %v1481 = vunpack.c.l.b16 %v1189
        %v1482 = vunpack.c.l.b16 %v1190
        %v1483 = vunpack.c.l.b16 %v1191
        %v1484 = vunpack.c.l.b16 %v1192
        %v1485 = vunpack.c.l.b16 %v1193
        %v1486 = vunpack.c.l.b16 %v1194
        %v1487 = vunpack.c.l.b16 %v1195
        %v1488 = vunpack.c.l.b16 %v1196
        %v1489 = vunpack.c.l.b16 %v1197
        %v1490 = vunpack.c.l.b16 %v1198
        %v1491 = vunpack.c.l.b16 %v1199
        %v1492 = vunpack.c.l.b16 %v1200
        %v1493 = vunpack.c.l.b16 %v1201
        %v1494 = vunpack.c.l.b16 %v1202
        %v1495 = vunpack.c.l.b16 %v1203
        %v1496 = vunpack.c.l.b16 %v1204
        %v1497 = vunpack.c.l.b16 %v1205
        %v1498 = vunpack.c.l.b16 %v1206
        %v1499 = vunpack.c.l.b16 %v1207
        %v1500 = vunpack.c.l.b16 %v1208
        %v1501 = vunpack.c.l.b16 %v1209
        %v1502 = vunpack.c.l.b16 %v1210
        %v1503 = vunpack.c.l.b16 %v1211
        %v1504 = vunpack.c.l.b16 %v1212
        %v1505 = vunpack.c.l.b16 %v1213
        %v1506 = vunpack.c.l.b16 %v1214
        %v1507 = vunpack.c.l.b16 %v1215
        %v1508 = vunpack.c.l.b16 %v1216
        %v1509 = vunpack.c.l.b16 %v1217
        %v1510 = vunpack.c.l.b16 %v1218
        %v1511 = vunpack.c.l.b16 %v1219
        %v1512 = vunpack.c.l.b16 %v1220
        %v1513 = vunpack.c.l.b16 %v1221
        %v1514 = vunpack.c.l.b16 %v1222
        %v1515 = vunpack.c.l.b16 %v1223
        %v1516 = vunpack.c.l.b16 %v1224
        %v1517 = vunpack.c.l.b16 %v1225
        %v1518 = vunpack.c.l.b16 %v1226
        %v1519 = vunpack.c.l.b16 %v1227
        %v1520 = vunpack.c.l.b16 %v1228
        %v1521 = vunpack.c.l.b16 %v1229
        %v1522 = vunpack.c.l.b16 %v1230
        %v1523 = vunpack.c.l.b16 %v1231
        %v1524 = vunpack.c.l.b16 %v1232
        %v1525 = vunpack.c.l.b16 %v1233
        %v1526 = vunpack.c.l.b16 %v1234
        %v1527 = vunpack.c.l.b16 %v1235
        %v1528 = vunpack.c.l.b16 %v1236
        %v1529 = vunpack.c.l.b16 %v1237
        %v1530 = vunpack.c.l.b16 %v1238
        %v1531 = vunpack.c.l.b16 %v1239
        %v1532 = vunpack.c.l.b16 %v1240
        %v1533 = vunpack.c.l.b16 %v1241
        %v1534 = vunpack.c.l.b16 %v1242
        %v1535 = vunpack.c.l.b16 %v1243
        %v1536 = vunpack.c.l.b16 %v1244
        %v1537 = vunpack.c.l.b16 %v1245
        %v1538 = vunpack.c.l.b16 %v1246
        %v1539 = vunpack.c.l.b16 %v1247
        %v1540 = vunpack.c.l.b16 %v1248
        %v1541 = vunpack.c.l.b16 %v1249
        %v1542 = vunpack.c.l.b16 %v1250
        %v1543 = vunpack.c.l.b16 %v1251
        %v1544 = vunpack.c.l.b16 %v1252
        %v1545 = vunpack.c.l.b16 %v1253
        %v1546 = vunpack.c.l.b16 %v1254
        %v1547 = vunpack.c.l.b16 %v1255
        %v1548 = vunpack.c.l.b16 %v1256
        %v1549 = vunpack.c.l.b16 %v1257
        %v1550 = vunpack.c.l.b16 %v1258
        %v1551 = vunpack.c.l.b16 %v1259
        %v1552 = vunpack.c.l.b16 %v1260
        %v1553 = vunpack.c.l.b16 %v1261
        %v1554 = vunpack.c.l.b16 %v1262
        %v1555 = vunpack.c.l.b16 %v1263
        %v1556 = vunpack.c.l.b16 %v1264
        %v1557 = vunpack.c.l.b16 %v1265
        %v1558 = vunpack.c.l.b16 %v1266
        %v1559 = vunpack.c.l.b16 %v1267
        %v1560 = vunpack.c.l.b16 %v1268
        %v1561 = vunpack.c.l.b16 %v1269
        %v1562 = vunpack.c.l.b16 %v1270
        %v1563 = vunpack.c.l.b16 %v1271
        %v1564 = vunpack.c.l.b16 %v1272
        %v1565 = vpack.c.b16 %v1422, %v1421
        %v1566 = vpack.c.b16 %v1424, %v1423
        %v1567 = vpack.c.b16 %v1426, %v1425
        %v1568 = vpack.c.b16 %v1428, %v1427
        %v1569 = vpack.c.b16 %v1430, %v1429
        %v1570 = vpack.c.b16 %v1432, %v1431
        %v1571 = vpack.c.b16 %v1434, %v1433
        %v1572 = vpack.c.b16 %v1436, %v1435
        %v1573 = vpack.c.b16 %v1438, %v1437
        %v1574 = vpack.c.b16 %v1440, %v1439
        %v1575 = vpack.c.b16 %v1442, %v1441
        %v1576 = vpack.c.b16 %v1444, %v1443
        %v1577 = vpack.c.b16 %v1446, %v1445
        %v1578 = vpack.c.b16 %v1448, %v1447
        %v1579 = vpack.c.b16 %v1450, %v1449
        %v1580 = vpack.c.b16 %v1452, %v1451
        %v1581 = vpack.c.b16 %v1454, %v1453
        %v1582 = vpack.c.b16 %v1456, %v1455
        %v1583 = vpack.c.b16 %v1458, %v1457
        %v1584 = vpack.c.b16 %v1460, %v1459
        %v1585 = vpack.c.b16 %v1462, %v1461
        %v1586 = vpack.c.b16 %v1464, %v1463
        %v1587 = vpack.c.b16 %v1466, %v1465
        %v1588 = vpack.c.b16 %v1468, %v1467
        %v1589 = vpack.c.b16 %v1470, %v1469
        %v1590 = vpack.c.b16 %v1472, %v1471
        %v1591 = vpack.c.b16 %v1474, %v1473
        %v1592 = vpack.c.b16 %v1476, %v1475
        %v1593 = vpack.c.b16 %v1478, %v1477
        %v1594 = vpack.c.b16 %v1480, %v1479
        %v1595 = vpack.c.b16 %v1482, %v1481
        %v1596 = vpack.c.b16 %v1484, %v1483
        %v1597 = vpack.c.b16 %v1486, %v1485
        %v1598 = vpack.c.b16 %v1488, %v1487
        %v1599 = vpack.c.b16 %v1490, %v1489
        %v1600 = vpack.c.b16 %v1492, %v1491
        %v1601 = vpack.c.b16 %v1494, %v1493
        %v1602 = vpack.c.b16 %v1496, %v1495
        %v1603 = vpack.c.b16 %v1498, %v1497
        %v1604 = vpack.c.b16 %v1500, %v1499
        %v1605 = vpack.c.b16 %v1502, %v1501
        %v1606 = vpack.c.b16 %v1504, %v1503
        %v1607 = vpack.c.b16 %v1506, %v1505
        %v1608 = vpack.c.b16 %v1508, %v1507
        %v1609 = vpack.c.b16 %v1510, %v1509
        %v1610 = vpack.c.b16 %v1512, %v1511
        %v1611 = vpack.c.b16 %v1514, %v1513
        %v1612 = vpack.c.b16 %v1516, %v1515
        %v1613 = vpack.c.b16 %v1518, %v1517
        %v1614 = vpack.c.b16 %v1520, %v1519
        %v1615 = vpack.c.b16 %v1522, %v1521
        %v1616 = vpack.c.b16 %v1524, %v1523
        %v1617 = vpack.c.b16 %v1526, %v1525
        %v1618 = vpack.c.b16 %v1528, %v1527
        %v1619 = vpack.c.b16 %v1530, %v1529
        %v1620 = vpack.c.b16 %v1532, %v1531
        %v1621 = vpack.c.b16 %v1534, %v1533
        %v1622 = vpack.c.b16 %v1536, %v1535
        %v1623 = vpack.c.b16 %v1538, %v1537
        %v1624 = vpack.c.b16 %v1540, %v1539
        %v1625 = vpack.c.b16 %v1542, %v1541
        %v1626 = vpack.c.b16 %v1544, %v1543
        %v1627 = vpack.c.b16 %v1546, %v1545
        %v1628 = vpack.c.b16 %v1548, %v1547
        %v1629 = vpack.c.b16 %v1550, %v1549
        %v1630 = vpack.c.b16 %v1552, %v1551
        %v1631 = vpack.c.b16 %v1554, %v1553
        %v1632 = vpack.c.b16 %v1556, %v1555
        %v1633 = vpack.c.b16 %v1558, %v1557
        %v1634 = vpack.c.b16 %v1560, %v1559
        %v1635 = vpack.c.b16 %v1562, %v1561
        %v1636 = vpack.c.b16 %v1564, %v1563
        %1709 = vmatpush.bf16.msra.mxu0 %v1572
        %1710 = vmatpush.bf16.msra.mxu0 %v1571
        %1711 = vmatpush.bf16.msra.mxu0 %v1570
        %1712 = vmatpush.bf16.msra.mxu0 %v1569
        %1713 = vmatpush.bf16.msra.mxu0 %v1568
        %1714 = vmatpush.bf16.msra.mxu0 %v1567
        %1715 = vmatpush.bf16.msra.mxu0 %v1566
        %1716 = vmatpush.bf16.msra.mxu0 %v1565
        %1717 = vmatmul.bf16.gmra.mxu0 %v945
        %v1718 = vpop.f32.mrf.mxu0
        %v1719 = vadd.f32 %v1275, %v1718
        %v1720 = vpop.f32.mrf.mxu0
        %v1721 = vadd.f32 %v1275, %v1720
        %1722 = vmatmul.bf16.gmra.mxu0 %v946
        %v1723 = vpop.f32.mrf.mxu0
        %v1724 = vadd.f32 %v1275, %v1723
        %v1725 = vpop.f32.mrf.mxu0
        %v1726 = vadd.f32 %v1275, %v1725
        %1727 = vmatmul.bf16.gmra.mxu0 %v947
        %v1728 = vpop.f32.mrf.mxu0
        %v1729 = vadd.f32 %v1275, %v1728
        %v1730 = vpop.f32.mrf.mxu0
        %v1731 = vadd.f32 %v1275, %v1730
        %1732 = vmatmul.bf16.gmra.mxu0 %v948
        %v1733 = vpop.f32.mrf.mxu0
        %v1734 = vadd.f32 %v1275, %v1733
        %v1735 = vpop.f32.mrf.mxu0
        %v1736 = vadd.f32 %v1275, %v1735
        %1737 = vmatmul.bf16.gmra.mxu0 %v949
        %v1738 = vpop.f32.mrf.mxu0
        %v1739 = vadd.f32 %v1275, %v1738
        %v1740 = vpop.f32.mrf.mxu0
        %v1741 = vadd.f32 %v1275, %v1740
        %1742 = vmatmul.bf16.gmra.mxu0 %v950
        %v1743 = vpop.f32.mrf.mxu0
        %v1744 = vadd.f32 %v1275, %v1743
        %v1745 = vpop.f32.mrf.mxu0
        %v1746 = vadd.f32 %v1275, %v1745
        %1747 = vmatmul.bf16.gmra.mxu0 %v951
        %v1748 = vpop.f32.mrf.mxu0
        %v1749 = vadd.f32 %v1275, %v1748
        %v1750 = vpop.f32.mrf.mxu0
        %v1751 = vadd.f32 %v1275, %v1750
        %1752 = vmatmul.bf16.gmra.mxu0 %v952
        %v1753 = vpop.f32.mrf.mxu0
        %v1754 = vadd.f32 %v1275, %v1753
        %v1755 = vpop.f32.mrf.mxu0
        %v1756 = vadd.f32 %v1275, %v1755
        %1757 = vmatmul.bf16.gmra.mxu0 %v953
        %v1758 = vpop.f32.mrf.mxu0
        %v1759 = vadd.f32 %v1275, %v1758
        %v1760 = vpop.f32.mrf.mxu0
        %v1761 = vadd.f32 %v1275, %v1760
        %1762 = vmatmul.bf16.gmra.mxu0 %v954
        %v1763 = vpop.f32.mrf.mxu0
        %v1764 = vadd.f32 %v1275, %v1763
        %v1765 = vpop.f32.mrf.mxu0
        %v1766 = vadd.f32 %v1275, %v1765
        %1767 = vmatmul.bf16.gmra.mxu0 %v955
        %v1768 = vpop.f32.mrf.mxu0
        %v1769 = vadd.f32 %v1275, %v1768
        %v1770 = vpop.f32.mrf.mxu0
        %v1771 = vadd.f32 %v1275, %v1770
        %1772 = vmatmul.bf16.gmra.mxu0 %v956
        %v1773 = vpop.f32.mrf.mxu0
        %v1774 = vadd.f32 %v1275, %v1773
        %v1775 = vpop.f32.mrf.mxu0
        %v1776 = vadd.f32 %v1275, %v1775
        %1777 = vmatmul.bf16.gmra.mxu0 %v957
        %v1778 = vpop.f32.mrf.mxu0
        %v1779 = vadd.f32 %v1275, %v1778
        %v1780 = vpop.f32.mrf.mxu0
        %v1781 = vadd.f32 %v1275, %v1780
        %1782 = vmatmul.bf16.gmra.mxu0 %v958
        %v1783 = vpop.f32.mrf.mxu0
        %v1784 = vadd.f32 %v1275, %v1783
        %v1785 = vpop.f32.mrf.mxu0
        %v1786 = vadd.f32 %v1275, %v1785
        %1787 = vmatmul.bf16.gmra.mxu0 %v959
        %v1788 = vpop.f32.mrf.mxu0
        %v1789 = vadd.f32 %v1275, %v1788
        %v1790 = vpop.f32.mrf.mxu0
        %v1791 = vadd.f32 %v1275, %v1790
        %1792 = vmatmul.bf16.gmra.mxu0 %v960
        %v1793 = vpop.f32.mrf.mxu0
        %v1794 = vadd.f32 %v1275, %v1793
        %v1795 = vpop.f32.mrf.mxu0
        %v1796 = vadd.f32 %v1275, %v1795
        %1797 = vdwg.mxu0
        %1798 = vmatpush.bf16.msra.mxu0 %v1580
        %1799 = vmatpush.bf16.msra.mxu0 %v1579
        %1800 = vmatpush.bf16.msra.mxu0 %v1578
        %1801 = vmatpush.bf16.msra.mxu0 %v1577
        %1802 = vmatpush.bf16.msra.mxu0 %v1576
        %1803 = vmatpush.bf16.msra.mxu0 %v1575
        %1804 = vmatpush.bf16.msra.mxu0 %v1574
        %1805 = vmatpush.bf16.msra.mxu0 %v1573
        %1806 = vmatmul.bf16.gmra.mxu0 %v1009
        %v1807 = vpop.f32.mrf.mxu0
        %v1808 = vadd.f32 %v1719, %v1807
        %v1809 = vpop.f32.mrf.mxu0
        %v1810 = vadd.f32 %v1721, %v1809
        %1811 = vmatmul.bf16.gmra.mxu0 %v1010
        %v1812 = vpop.f32.mrf.mxu0
        %v1813 = vadd.f32 %v1724, %v1812
        %v1814 = vpop.f32.mrf.mxu0
        %v1815 = vadd.f32 %v1726, %v1814
        %1816 = vmatmul.bf16.gmra.mxu0 %v1011
        %v1817 = vpop.f32.mrf.mxu0
        %v1818 = vadd.f32 %v1729, %v1817
        %v1819 = vpop.f32.mrf.mxu0
        %v1820 = vadd.f32 %v1731, %v1819
        %1821 = vmatmul.bf16.gmra.mxu0 %v1012
        %v1822 = vpop.f32.mrf.mxu0
        %v1823 = vadd.f32 %v1734, %v1822
        %v1824 = vpop.f32.mrf.mxu0
        %v1825 = vadd.f32 %v1736, %v1824
        %1826 = vmatmul.bf16.gmra.mxu0 %v1013
        %v1827 = vpop.f32.mrf.mxu0
        %v1828 = vadd.f32 %v1739, %v1827
        %v1829 = vpop.f32.mrf.mxu0
        %v1830 = vadd.f32 %v1741, %v1829
        %1831 = vmatmul.bf16.gmra.mxu0 %v1014
        %v1832 = vpop.f32.mrf.mxu0
        %v1833 = vadd.f32 %v1744, %v1832
        %v1834 = vpop.f32.mrf.mxu0
        %v1835 = vadd.f32 %v1746, %v1834
        %1836 = vmatmul.bf16.gmra.mxu0 %v1015
        %v1837 = vpop.f32.mrf.mxu0
        %v1838 = vadd.f32 %v1749, %v1837
        %v1839 = vpop.f32.mrf.mxu0
        %v1840 = vadd.f32 %v1751, %v1839
        %1841 = vmatmul.bf16.gmra.mxu0 %v1016
        %v1842 = vpop.f32.mrf.mxu0
        %v1843 = vadd.f32 %v1754, %v1842
        %v1844 = vpop.f32.mrf.mxu0
        %v1845 = vadd.f32 %v1756, %v1844
        %1846 = vmatmul.bf16.gmra.mxu0 %v1017
        %v1847 = vpop.f32.mrf.mxu0
        %v1848 = vadd.f32 %v1759, %v1847
        %v1849 = vpop.f32.mrf.mxu0
        %v1850 = vadd.f32 %v1761, %v1849
        %1851 = vmatmul.bf16.gmra.mxu0 %v1018
        %v1852 = vpop.f32.mrf.mxu0
        %v1853 = vadd.f32 %v1764, %v1852
        %v1854 = vpop.f32.mrf.mxu0
        %v1855 = vadd.f32 %v1766, %v1854
        %1856 = vmatmul.bf16.gmra.mxu0 %v1019
        %v1857 = vpop.f32.mrf.mxu0
        %v1858 = vadd.f32 %v1769, %v1857
        %v1859 = vpop.f32.mrf.mxu0
        %v1860 = vadd.f32 %v1771, %v1859
        %1861 = vmatmul.bf16.gmra.mxu0 %v1020
        %v1862 = vpop.f32.mrf.mxu0
        %v1863 = vadd.f32 %v1774, %v1862
        %v1864 = vpop.f32.mrf.mxu0
        %v1865 = vadd.f32 %v1776, %v1864
        %1866 = vmatmul.bf16.gmra.mxu0 %v1021
        %v1867 = vpop.f32.mrf.mxu0
        %v1868 = vadd.f32 %v1779, %v1867
        %v1869 = vpop.f32.mrf.mxu0
        %v1870 = vadd.f32 %v1781, %v1869
        %1871 = vmatmul.bf16.gmra.mxu0 %v1022
        %v1872 = vpop.f32.mrf.mxu0
        %v1873 = vadd.f32 %v1784, %v1872
        %v1874 = vpop.f32.mrf.mxu0
        %v1875 = vadd.f32 %v1786, %v1874
        %1876 = vmatmul.bf16.gmra.mxu0 %v1023
        %v1877 = vpop.f32.mrf.mxu0
        %v1878 = vadd.f32 %v1789, %v1877
        %v1879 = vpop.f32.mrf.mxu0
        %v1880 = vadd.f32 %v1791, %v1879
        %1881 = vmatmul.bf16.gmra.mxu0 %v1024
        %v1882 = vpop.f32.mrf.mxu0
        %v1883 = vadd.f32 %v1794, %v1882
        %v1884 = vpop.f32.mrf.mxu0
        %v1885 = vadd.f32 %v1796, %v1884
        %1886 = vdwg.mxu0
        %1887 = vmatpush.bf16.msra.mxu0 %v1588
        %1888 = vmatpush.bf16.msra.mxu0 %v1587
        %1889 = vmatpush.bf16.msra.mxu0 %v1586
        %1890 = vmatpush.bf16.msra.mxu0 %v1585
        %1891 = vmatpush.bf16.msra.mxu0 %v1584
        %1892 = vmatpush.bf16.msra.mxu0 %v1583
        %1893 = vmatpush.bf16.msra.mxu0 %v1582
        %1894 = vmatpush.bf16.msra.mxu0 %v1581
        %1895 = vmatmul.bf16.gmra.mxu0 %v1073
        %v1896 = vpop.f32.mrf.mxu0
        %v1897 = vadd.f32 %v1808, %v1896
        %v1898 = vpop.f32.mrf.mxu0
        %v1899 = vadd.f32 %v1810, %v1898
        %1900 = vmatmul.bf16.gmra.mxu0 %v1074
        %v1901 = vpop.f32.mrf.mxu0
        %v1902 = vadd.f32 %v1813, %v1901
        %v1903 = vpop.f32.mrf.mxu0
        %v1904 = vadd.f32 %v1815, %v1903
        %1905 = vmatmul.bf16.gmra.mxu0 %v1075
        %v1906 = vpop.f32.mrf.mxu0
        %v1907 = vadd.f32 %v1818, %v1906
        %v1908 = vpop.f32.mrf.mxu0
        %v1909 = vadd.f32 %v1820, %v1908
        %1910 = vmatmul.bf16.gmra.mxu0 %v1076
        %v1911 = vpop.f32.mrf.mxu0
        %v1912 = vadd.f32 %v1823, %v1911
        %v1913 = vpop.f32.mrf.mxu0
        %v1914 = vadd.f32 %v1825, %v1913
        %1915 = vmatmul.bf16.gmra.mxu0 %v1077
        %v1916 = vpop.f32.mrf.mxu0
        %v1917 = vadd.f32 %v1828, %v1916
        %v1918 = vpop.f32.mrf.mxu0
        %v1919 = vadd.f32 %v1830, %v1918
        %1920 = vmatmul.bf16.gmra.mxu0 %v1078
        %v1921 = vpop.f32.mrf.mxu0
        %v1922 = vadd.f32 %v1833, %v1921
        %v1923 = vpop.f32.mrf.mxu0
        %v1924 = vadd.f32 %v1835, %v1923
        %1925 = vmatmul.bf16.gmra.mxu0 %v1079
        %v1926 = vpop.f32.mrf.mxu0
        %v1927 = vadd.f32 %v1838, %v1926
        %v1928 = vpop.f32.mrf.mxu0
        %v1929 = vadd.f32 %v1840, %v1928
        %1930 = vmatmul.bf16.gmra.mxu0 %v1080
        %v1931 = vpop.f32.mrf.mxu0
        %v1932 = vadd.f32 %v1843, %v1931
        %v1933 = vpop.f32.mrf.mxu0
        %v1934 = vadd.f32 %v1845, %v1933
        %1935 = vmatmul.bf16.gmra.mxu0 %v1081
        %v1936 = vpop.f32.mrf.mxu0
        %v1937 = vadd.f32 %v1848, %v1936
        %v1938 = vpop.f32.mrf.mxu0
        %v1939 = vadd.f32 %v1850, %v1938
        %1940 = vmatmul.bf16.gmra.mxu0 %v1082
        %v1941 = vpop.f32.mrf.mxu0
        %v1942 = vadd.f32 %v1853, %v1941
        %v1943 = vpop.f32.mrf.mxu0
        %v1944 = vadd.f32 %v1855, %v1943
        %1945 = vmatmul.bf16.gmra.mxu0 %v1083
        %v1946 = vpop.f32.mrf.mxu0
        %v1947 = vadd.f32 %v1858, %v1946
        %v1948 = vpop.f32.mrf.mxu0
        %v1949 = vadd.f32 %v1860, %v1948
        %1950 = vmatmul.bf16.gmra.mxu0 %v1084
        %v1951 = vpop.f32.mrf.mxu0
        %v1952 = vadd.f32 %v1863, %v1951
        %v1953 = vpop.f32.mrf.mxu0
        %v1954 = vadd.f32 %v1865, %v1953
        %1955 = vmatmul.bf16.gmra.mxu0 %v1085
        %v1956 = vpop.f32.mrf.mxu0
        %v1957 = vadd.f32 %v1868, %v1956
        %v1958 = vpop.f32.mrf.mxu0
        %v1959 = vadd.f32 %v1870, %v1958
        %1960 = vmatmul.bf16.gmra.mxu0 %v1086
        %v1961 = vpop.f32.mrf.mxu0
        %v1962 = vadd.f32 %v1873, %v1961
        %v1963 = vpop.f32.mrf.mxu0
        %v1964 = vadd.f32 %v1875, %v1963
        %1965 = vmatmul.bf16.gmra.mxu0 %v1087
        %v1966 = vpop.f32.mrf.mxu0
        %v1967 = vadd.f32 %v1878, %v1966
        %v1968 = vpop.f32.mrf.mxu0
        %v1969 = vadd.f32 %v1880, %v1968
        %1970 = vmatmul.bf16.gmra.mxu0 %v1088
        %v1971 = vpop.f32.mrf.mxu0
        %v1972 = vadd.f32 %v1883, %v1971
        %v1973 = vpop.f32.mrf.mxu0
        %v1974 = vadd.f32 %v1885, %v1973
        %1975 = vdwg.mxu0
        %1976 = vmatpush.bf16.msra.mxu0 %v1596
        %1977 = vmatpush.bf16.msra.mxu0 %v1595
        %1978 = vmatpush.bf16.msra.mxu0 %v1594
        %1979 = vmatpush.bf16.msra.mxu0 %v1593
        %1980 = vmatpush.bf16.msra.mxu0 %v1592
        %1981 = vmatpush.bf16.msra.mxu0 %v1591
        %1982 = vmatpush.bf16.msra.mxu0 %v1590
        %1983 = vmatpush.bf16.msra.mxu0 %v1589
        %1984 = vmatmul.bf16.gmra.mxu0 %v946
        %v1985 = vpop.f32.mrf.mxu0
        %v1986 = vadd.f32 %v1897, %v1985
        %v1987 = vpop.f32.mrf.mxu0
        %v1988 = vadd.f32 %v1899, %v1987
        %1989 = vmatmul.bf16.gmra.mxu0 %v947
        %v1990 = vpop.f32.mrf.mxu0
        %v1991 = vadd.f32 %v1902, %v1990
        %v1992 = vpop.f32.mrf.mxu0
        %v1993 = vadd.f32 %v1904, %v1992
        %1994 = vmatmul.bf16.gmra.mxu0 %v948
        %v1995 = vpop.f32.mrf.mxu0
        %v1996 = vadd.f32 %v1907, %v1995
        %v1997 = vpop.f32.mrf.mxu0
        %v1998 = vadd.f32 %v1909, %v1997
        %1999 = vmatmul.bf16.gmra.mxu0 %v949
        %v2000 = vpop.f32.mrf.mxu0
        %v2001 = vadd.f32 %v1912, %v2000
        %v2002 = vpop.f32.mrf.mxu0
        %v2003 = vadd.f32 %v1914, %v2002
        %2004 = vmatmul.bf16.gmra.mxu0 %v950
        %v2005 = vpop.f32.mrf.mxu0
        %v2006 = vadd.f32 %v1917, %v2005
        %v2007 = vpop.f32.mrf.mxu0
        %v2008 = vadd.f32 %v1919, %v2007
        %2009 = vmatmul.bf16.gmra.mxu0 %v951
        %v2010 = vpop.f32.mrf.mxu0
        %v2011 = vadd.f32 %v1922, %v2010
        %v2012 = vpop.f32.mrf.mxu0
        %v2013 = vadd.f32 %v1924, %v2012
        %2014 = vmatmul.bf16.gmra.mxu0 %v952
        %v2015 = vpop.f32.mrf.mxu0
        %v2016 = vadd.f32 %v1927, %v2015
        %v2017 = vpop.f32.mrf.mxu0
        %v2018 = vadd.f32 %v1929, %v2017
        %2019 = vmatmul.bf16.gmra.mxu0 %v953
        %v2020 = vpop.f32.mrf.mxu0
        %v2021 = vadd.f32 %v1932, %v2020
        %v2022 = vpop.f32.mrf.mxu0
        %v2023 = vadd.f32 %v1934, %v2022
        %2024 = vmatmul.bf16.gmra.mxu0 %v954
        %v2025 = vpop.f32.mrf.mxu0
        %v2026 = vadd.f32 %v1937, %v2025
        %v2027 = vpop.f32.mrf.mxu0
        %v2028 = vadd.f32 %v1939, %v2027
        %2029 = vmatmul.bf16.gmra.mxu0 %v955
        %v2030 = vpop.f32.mrf.mxu0
        %v2031 = vadd.f32 %v1942, %v2030
        %v2032 = vpop.f32.mrf.mxu0
        %v2033 = vadd.f32 %v1944, %v2032
        %2034 = vmatmul.bf16.gmra.mxu0 %v956
        %v2035 = vpop.f32.mrf.mxu0
        %v2036 = vadd.f32 %v1947, %v2035
        %v2037 = vpop.f32.mrf.mxu0
        %v2038 = vadd.f32 %v1949, %v2037
        %2039 = vmatmul.bf16.gmra.mxu0 %v957
        %v2040 = vpop.f32.mrf.mxu0
        %v2041 = vadd.f32 %v1952, %v2040
        %v2042 = vpop.f32.mrf.mxu0
        %v2043 = vadd.f32 %v1954, %v2042
        %2044 = vmatmul.bf16.gmra.mxu0 %v958
        %v2045 = vpop.f32.mrf.mxu0
        %v2046 = vadd.f32 %v1957, %v2045
        %v2047 = vpop.f32.mrf.mxu0
        %v2048 = vadd.f32 %v1959, %v2047
        %2049 = vmatmul.bf16.gmra.mxu0 %v959
        %v2050 = vpop.f32.mrf.mxu0
        %v2051 = vadd.f32 %v1962, %v2050
        %v2052 = vpop.f32.mrf.mxu0
        %v2053 = vadd.f32 %v1964, %v2052
        %2054 = vmatmul.bf16.gmra.mxu0 %v960
        %v2055 = vpop.f32.mrf.mxu0
        %v2056 = vadd.f32 %v1967, %v2055
        %v2057 = vpop.f32.mrf.mxu0
        %v2058 = vadd.f32 %v1969, %v2057
        %2059 = vmatmul.bf16.gmra.mxu0 %v1107
        %v2060 = vpop.f32.mrf.mxu0
        %v2061 = vadd.f32 %v1972, %v2060
        %v2062 = vpop.f32.mrf.mxu0
        %v2063 = vadd.f32 %v1974, %v2062
        %2064 = vdwg.mxu0
        %2065 = vmatpush.bf16.msra.mxu0 %v1604
        %2066 = vmatpush.bf16.msra.mxu0 %v1603
        %2067 = vmatpush.bf16.msra.mxu0 %v1602
        %2068 = vmatpush.bf16.msra.mxu0 %v1601
        %2069 = vmatpush.bf16.msra.mxu0 %v1600
        %2070 = vmatpush.bf16.msra.mxu0 %v1599
        %2071 = vmatpush.bf16.msra.mxu0 %v1598
        %2072 = vmatpush.bf16.msra.mxu0 %v1597
        %2073 = vmatmul.bf16.gmra.mxu0 %v1010
        %v2074 = vpop.f32.mrf.mxu0
        %v2075 = vadd.f32 %v1986, %v2074
        %v2076 = vpop.f32.mrf.mxu0
        %v2077 = vadd.f32 %v1988, %v2076
        %2078 = vmatmul.bf16.gmra.mxu0 %v1011
        %v2079 = vpop.f32.mrf.mxu0
        %v2080 = vadd.f32 %v1991, %v2079
        %v2081 = vpop.f32.mrf.mxu0
        %v2082 = vadd.f32 %v1993, %v2081
        %2083 = vmatmul.bf16.gmra.mxu0 %v1012
        %v2084 = vpop.f32.mrf.mxu0
        %v2085 = vadd.f32 %v1996, %v2084
        %v2086 = vpop.f32.mrf.mxu0
        %v2087 = vadd.f32 %v1998, %v2086
        %2088 = vmatmul.bf16.gmra.mxu0 %v1013
        %v2089 = vpop.f32.mrf.mxu0
        %v2090 = vadd.f32 %v2001, %v2089
        %v2091 = vpop.f32.mrf.mxu0
        %v2092 = vadd.f32 %v2003, %v2091
        %2093 = vmatmul.bf16.gmra.mxu0 %v1014
        %v2094 = vpop.f32.mrf.mxu0
        %v2095 = vadd.f32 %v2006, %v2094
        %v2096 = vpop.f32.mrf.mxu0
        %v2097 = vadd.f32 %v2008, %v2096
        %2098 = vmatmul.bf16.gmra.mxu0 %v1015
        %v2099 = vpop.f32.mrf.mxu0
        %v2100 = vadd.f32 %v2011, %v2099
        %v2101 = vpop.f32.mrf.mxu0
        %v2102 = vadd.f32 %v2013, %v2101
        %2103 = vmatmul.bf16.gmra.mxu0 %v1016
        %v2104 = vpop.f32.mrf.mxu0
        %v2105 = vadd.f32 %v2016, %v2104
        %v2106 = vpop.f32.mrf.mxu0
        %v2107 = vadd.f32 %v2018, %v2106
        %2108 = vmatmul.bf16.gmra.mxu0 %v1017
        %v2109 = vpop.f32.mrf.mxu0
        %v2110 = vadd.f32 %v2021, %v2109
        %v2111 = vpop.f32.mrf.mxu0
        %v2112 = vadd.f32 %v2023, %v2111
        %2113 = vmatmul.bf16.gmra.mxu0 %v1018
        %v2114 = vpop.f32.mrf.mxu0
        %v2115 = vadd.f32 %v2026, %v2114
        %v2116 = vpop.f32.mrf.mxu0
        %v2117 = vadd.f32 %v2028, %v2116
        %2118 = vmatmul.bf16.gmra.mxu0 %v1019
        %v2119 = vpop.f32.mrf.mxu0
        %v2120 = vadd.f32 %v2031, %v2119
        %v2121 = vpop.f32.mrf.mxu0
        %v2122 = vadd.f32 %v2033, %v2121
        %2123 = vmatmul.bf16.gmra.mxu0 %v1020
        %v2124 = vpop.f32.mrf.mxu0
        %v2125 = vadd.f32 %v2036, %v2124
        %v2126 = vpop.f32.mrf.mxu0
        %v2127 = vadd.f32 %v2038, %v2126
        %2128 = vmatmul.bf16.gmra.mxu0 %v1021
        %v2129 = vpop.f32.mrf.mxu0
        %v2130 = vadd.f32 %v2041, %v2129
        %v2131 = vpop.f32.mrf.mxu0
        %v2132 = vadd.f32 %v2043, %v2131
        %2133 = vmatmul.bf16.gmra.mxu0 %v1022
        %v2134 = vpop.f32.mrf.mxu0
        %v2135 = vadd.f32 %v2046, %v2134
        %v2136 = vpop.f32.mrf.mxu0
        %v2137 = vadd.f32 %v2048, %v2136
        %2138 = vmatmul.bf16.gmra.mxu0 %v1023
        %v2139 = vpop.f32.mrf.mxu0
        %v2140 = vadd.f32 %v2051, %v2139
        %v2141 = vpop.f32.mrf.mxu0
        %v2142 = vadd.f32 %v2053, %v2141
        %2143 = vmatmul.bf16.gmra.mxu0 %v1024
        %v2144 = vpop.f32.mrf.mxu0
        %v2145 = vadd.f32 %v2056, %v2144
        %v2146 = vpop.f32.mrf.mxu0
        %v2147 = vadd.f32 %v2058, %v2146
        %2148 = vmatmul.bf16.gmra.mxu0 %v1111
        %v2149 = vpop.f32.mrf.mxu0
        %v2150 = vadd.f32 %v2061, %v2149
        %v2151 = vpop.f32.mrf.mxu0
        %v2152 = vadd.f32 %v2063, %v2151
        %2153 = vdwg.mxu0
        %2154 = vmatpush.bf16.msra.mxu0 %v1612
        %2155 = vmatpush.bf16.msra.mxu0 %v1611
        %2156 = vmatpush.bf16.msra.mxu0 %v1610
        %2157 = vmatpush.bf16.msra.mxu0 %v1609
        %2158 = vmatpush.bf16.msra.mxu0 %v1608
        %2159 = vmatpush.bf16.msra.mxu0 %v1607
        %2160 = vmatpush.bf16.msra.mxu0 %v1606
        %2161 = vmatpush.bf16.msra.mxu0 %v1605
        %2162 = vmatmul.bf16.gmra.mxu0 %v1074
        %v2163 = vpop.f32.mrf.mxu0
        %v2164 = vadd.f32 %v2075, %v2163
        %v2165 = vpop.f32.mrf.mxu0
        %v2166 = vadd.f32 %v2077, %v2165
        %2167 = vmatmul.bf16.gmra.mxu0 %v1075
        %v2168 = vpop.f32.mrf.mxu0
        %v2169 = vadd.f32 %v2080, %v2168
        %v2170 = vpop.f32.mrf.mxu0
        %v2171 = vadd.f32 %v2082, %v2170
        %2172 = vmatmul.bf16.gmra.mxu0 %v1076
        %v2173 = vpop.f32.mrf.mxu0
        %v2174 = vadd.f32 %v2085, %v2173
        %v2175 = vpop.f32.mrf.mxu0
        %v2176 = vadd.f32 %v2087, %v2175
        %2177 = vmatmul.bf16.gmra.mxu0 %v1077
        %v2178 = vpop.f32.mrf.mxu0
        %v2179 = vadd.f32 %v2090, %v2178
        %v2180 = vpop.f32.mrf.mxu0
        %v2181 = vadd.f32 %v2092, %v2180
        %2182 = vmatmul.bf16.gmra.mxu0 %v1078
        %v2183 = vpop.f32.mrf.mxu0
        %v2184 = vadd.f32 %v2095, %v2183
        %v2185 = vpop.f32.mrf.mxu0
        %v2186 = vadd.f32 %v2097, %v2185
        %2187 = vmatmul.bf16.gmra.mxu0 %v1079
        %v2188 = vpop.f32.mrf.mxu0
        %v2189 = vadd.f32 %v2100, %v2188
        %v2190 = vpop.f32.mrf.mxu0
        %v2191 = vadd.f32 %v2102, %v2190
        %2192 = vmatmul.bf16.gmra.mxu0 %v1080
        %v2193 = vpop.f32.mrf.mxu0
        %v2194 = vadd.f32 %v2105, %v2193
        %v2195 = vpop.f32.mrf.mxu0
        %v2196 = vadd.f32 %v2107, %v2195
        %2197 = vmatmul.bf16.gmra.mxu0 %v1081
        %v2198 = vpop.f32.mrf.mxu0
        %v2199 = vadd.f32 %v2110, %v2198
        %v2200 = vpop.f32.mrf.mxu0
        %v2201 = vadd.f32 %v2112, %v2200
        %2202 = vmatmul.bf16.gmra.mxu0 %v1082
        %v2203 = vpop.f32.mrf.mxu0
        %v2204 = vadd.f32 %v2115, %v2203
        %v2205 = vpop.f32.mrf.mxu0
        %v2206 = vadd.f32 %v2117, %v2205
        %2207 = vmatmul.bf16.gmra.mxu0 %v1083
        %v2208 = vpop.f32.mrf.mxu0
        %v2209 = vadd.f32 %v2120, %v2208
        %v2210 = vpop.f32.mrf.mxu0
        %v2211 = vadd.f32 %v2122, %v2210
        %2212 = vmatmul.bf16.gmra.mxu0 %v1084
        %v2213 = vpop.f32.mrf.mxu0
        %v2214 = vadd.f32 %v2125, %v2213
        %v2215 = vpop.f32.mrf.mxu0
        %v2216 = vadd.f32 %v2127, %v2215
        %2217 = vmatmul.bf16.gmra.mxu0 %v1085
        %v2218 = vpop.f32.mrf.mxu0
        %v2219 = vadd.f32 %v2130, %v2218
        %v2220 = vpop.f32.mrf.mxu0
        %v2221 = vadd.f32 %v2132, %v2220
        %2222 = vmatmul.bf16.gmra.mxu0 %v1086
        %v2223 = vpop.f32.mrf.mxu0
        %v2224 = vadd.f32 %v2135, %v2223
        %v2225 = vpop.f32.mrf.mxu0
        %v2226 = vadd.f32 %v2137, %v2225
        %2227 = vmatmul.bf16.gmra.mxu0 %v1087
        %v2228 = vpop.f32.mrf.mxu0
        %v2229 = vadd.f32 %v2140, %v2228
        %v2230 = vpop.f32.mrf.mxu0
        %v2231 = vadd.f32 %v2142, %v2230
        %2232 = vmatmul.bf16.gmra.mxu0 %v1088
        %v2233 = vpop.f32.mrf.mxu0
        %v2234 = vadd.f32 %v2145, %v2233
        %v2235 = vpop.f32.mrf.mxu0
        %v2236 = vadd.f32 %v2147, %v2235
        %2237 = vmatmul.bf16.gmra.mxu0 %v1115
        %v2238 = vpop.f32.mrf.mxu0
        %v2239 = vadd.f32 %v2150, %v2238
        %v2240 = vpop.f32.mrf.mxu0
        %v2241 = vadd.f32 %v2152, %v2240
        %2242 = vdwg.mxu0
        %2243 = vmatpush.bf16.msra.mxu0 %v1620
        %2244 = vmatpush.bf16.msra.mxu0 %v1619
        %2245 = vmatpush.bf16.msra.mxu0 %v1618
        %2246 = vmatpush.bf16.msra.mxu0 %v1617
        %2247 = vmatpush.bf16.msra.mxu0 %v1616
        %2248 = vmatpush.bf16.msra.mxu0 %v1615
        %2249 = vmatpush.bf16.msra.mxu0 %v1614
        %2250 = vmatpush.bf16.msra.mxu0 %v1613
        %2251 = vmatmul.bf16.gmra.mxu0 %v947
        %v2252 = vpop.f32.mrf.mxu0
        %v2253 = vadd.f32 %v2164, %v2252
        %v2254 = vpop.f32.mrf.mxu0
        %v2255 = vadd.f32 %v2166, %v2254
        %2256 = vmatmul.bf16.gmra.mxu0 %v948
        %v2257 = vpop.f32.mrf.mxu0
        %v2258 = vadd.f32 %v2169, %v2257
        %v2259 = vpop.f32.mrf.mxu0
        %v2260 = vadd.f32 %v2171, %v2259
        %2261 = vmatmul.bf16.gmra.mxu0 %v949
        %v2262 = vpop.f32.mrf.mxu0
        %v2263 = vadd.f32 %v2174, %v2262
        %v2264 = vpop.f32.mrf.mxu0
        %v2265 = vadd.f32 %v2176, %v2264
        %2266 = vmatmul.bf16.gmra.mxu0 %v950
        %v2267 = vpop.f32.mrf.mxu0
        %v2268 = vadd.f32 %v2179, %v2267
        %v2269 = vpop.f32.mrf.mxu0
        %v2270 = vadd.f32 %v2181, %v2269
        %2271 = vmatmul.bf16.gmra.mxu0 %v951
        %v2272 = vpop.f32.mrf.mxu0
        %v2273 = vadd.f32 %v2184, %v2272
        %v2274 = vpop.f32.mrf.mxu0
        %v2275 = vadd.f32 %v2186, %v2274
        %2276 = vmatmul.bf16.gmra.mxu0 %v952
        %v2277 = vpop.f32.mrf.mxu0
        %v2278 = vadd.f32 %v2189, %v2277
        %v2279 = vpop.f32.mrf.mxu0
        %v2280 = vadd.f32 %v2191, %v2279
        %2281 = vmatmul.bf16.gmra.mxu0 %v953
        %v2282 = vpop.f32.mrf.mxu0
        %v2283 = vadd.f32 %v2194, %v2282
        %v2284 = vpop.f32.mrf.mxu0
        %v2285 = vadd.f32 %v2196, %v2284
        %2286 = vmatmul.bf16.gmra.mxu0 %v954
        %v2287 = vpop.f32.mrf.mxu0
        %v2288 = vadd.f32 %v2199, %v2287
        %v2289 = vpop.f32.mrf.mxu0
        %v2290 = vadd.f32 %v2201, %v2289
        %2291 = vmatmul.bf16.gmra.mxu0 %v955
        %v2292 = vpop.f32.mrf.mxu0
        %v2293 = vadd.f32 %v2204, %v2292
        %v2294 = vpop.f32.mrf.mxu0
        %v2295 = vadd.f32 %v2206, %v2294
        %2296 = vmatmul.bf16.gmra.mxu0 %v956
        %v2297 = vpop.f32.mrf.mxu0
        %v2298 = vadd.f32 %v2209, %v2297
        %v2299 = vpop.f32.mrf.mxu0
        %v2300 = vadd.f32 %v2211, %v2299
        %2301 = vmatmul.bf16.gmra.mxu0 %v957
        %v2302 = vpop.f32.mrf.mxu0
        %v2303 = vadd.f32 %v2214, %v2302
        %v2304 = vpop.f32.mrf.mxu0
        %v2305 = vadd.f32 %v2216, %v2304
        %2306 = vmatmul.bf16.gmra.mxu0 %v958
        %v2307 = vpop.f32.mrf.mxu0
        %v2308 = vadd.f32 %v2219, %v2307
        %v2309 = vpop.f32.mrf.mxu0
        %v2310 = vadd.f32 %v2221, %v2309
        %2311 = vmatmul.bf16.gmra.mxu0 %v959
        %v2312 = vpop.f32.mrf.mxu0
        %v2313 = vadd.f32 %v2224, %v2312
        %v2314 = vpop.f32.mrf.mxu0
        %v2315 = vadd.f32 %v2226, %v2314
        %2316 = vmatmul.bf16.gmra.mxu0 %v960
        %v2317 = vpop.f32.mrf.mxu0
        %v2318 = vadd.f32 %v2229, %v2317
        %v2319 = vpop.f32.mrf.mxu0
        %v2320 = vadd.f32 %v2231, %v2319
        %2321 = vmatmul.bf16.gmra.mxu0 %v1107
        %v2322 = vpop.f32.mrf.mxu0
        %v2323 = vadd.f32 %v2234, %v2322
        %v2324 = vpop.f32.mrf.mxu0
        %v2325 = vadd.f32 %v2236, %v2324
        %2326 = vmatmul.bf16.gmra.mxu0 %v1119
        %v2327 = vpop.f32.mrf.mxu0
        %v2328 = vadd.f32 %v2239, %v2327
        %v2329 = vpop.f32.mrf.mxu0
        %v2330 = vadd.f32 %v2241, %v2329
        %2331 = vdwg.mxu0
        %2332 = vmatpush.bf16.msra.mxu0 %v1628
        %2333 = vmatpush.bf16.msra.mxu0 %v1627
        %2334 = vmatpush.bf16.msra.mxu0 %v1626
        %2335 = vmatpush.bf16.msra.mxu0 %v1625
        %2336 = vmatpush.bf16.msra.mxu0 %v1624
        %2337 = vmatpush.bf16.msra.mxu0 %v1623
        %2338 = vmatpush.bf16.msra.mxu0 %v1622
        %2339 = vmatpush.bf16.msra.mxu0 %v1621
        %2340 = vmatmul.bf16.gmra.mxu0 %v1011
        %v2341 = vpop.f32.mrf.mxu0
        %v2342 = vadd.f32 %v2253, %v2341
        %v2343 = vpop.f32.mrf.mxu0
        %v2344 = vadd.f32 %v2255, %v2343
        %2345 = vmatmul.bf16.gmra.mxu0 %v1012
        %v2346 = vpop.f32.mrf.mxu0
        %v2347 = vadd.f32 %v2258, %v2346
        %v2348 = vpop.f32.mrf.mxu0
        %v2349 = vadd.f32 %v2260, %v2348
        %2350 = vmatmul.bf16.gmra.mxu0 %v1013
        %v2351 = vpop.f32.mrf.mxu0
        %v2352 = vadd.f32 %v2263, %v2351
        %v2353 = vpop.f32.mrf.mxu0
        %v2354 = vadd.f32 %v2265, %v2353
        %2355 = vmatmul.bf16.gmra.mxu0 %v1014
        %v2356 = vpop.f32.mrf.mxu0
        %v2357 = vadd.f32 %v2268, %v2356
        %v2358 = vpop.f32.mrf.mxu0
        %v2359 = vadd.f32 %v2270, %v2358
        %2360 = vmatmul.bf16.gmra.mxu0 %v1015
        %v2361 = vpop.f32.mrf.mxu0
        %v2362 = vadd.f32 %v2273, %v2361
        %v2363 = vpop.f32.mrf.mxu0
        %v2364 = vadd.f32 %v2275, %v2363
        %2365 = vmatmul.bf16.gmra.mxu0 %v1016
        %v2366 = vpop.f32.mrf.mxu0
        %v2367 = vadd.f32 %v2278, %v2366
        %v2368 = vpop.f32.mrf.mxu0
        %v2369 = vadd.f32 %v2280, %v2368
        %2370 = vmatmul.bf16.gmra.mxu0 %v1017
        %v2371 = vpop.f32.mrf.mxu0
        %v2372 = vadd.f32 %v2283, %v2371
        %v2373 = vpop.f32.mrf.mxu0
        %v2374 = vadd.f32 %v2285, %v2373
        %2375 = vmatmul.bf16.gmra.mxu0 %v1018
        %v2376 = vpop.f32.mrf.mxu0
        %v2377 = vadd.f32 %v2288, %v2376
        %v2378 = vpop.f32.mrf.mxu0
        %v2379 = vadd.f32 %v2290, %v2378
        %2380 = vmatmul.bf16.gmra.mxu0 %v1019
        %v2381 = vpop.f32.mrf.mxu0
        %v2382 = vadd.f32 %v2293, %v2381
        %v2383 = vpop.f32.mrf.mxu0
        %v2384 = vadd.f32 %v2295, %v2383
        %2385 = vmatmul.bf16.gmra.mxu0 %v1020
        %v2386 = vpop.f32.mrf.mxu0
        %v2387 = vadd.f32 %v2298, %v2386
        %v2388 = vpop.f32.mrf.mxu0
        %v2389 = vadd.f32 %v2300, %v2388
        %2390 = vmatmul.bf16.gmra.mxu0 %v1021
        %v2391 = vpop.f32.mrf.mxu0
        %v2392 = vadd.f32 %v2303, %v2391
        %v2393 = vpop.f32.mrf.mxu0
        %v2394 = vadd.f32 %v2305, %v2393
        %2395 = vmatmul.bf16.gmra.mxu0 %v1022
        %v2396 = vpop.f32.mrf.mxu0
        %v2397 = vadd.f32 %v2308, %v2396
        %v2398 = vpop.f32.mrf.mxu0
        %v2399 = vadd.f32 %v2310, %v2398
        %2400 = vmatmul.bf16.gmra.mxu0 %v1023
        %v2401 = vpop.f32.mrf.mxu0
        %v2402 = vadd.f32 %v2313, %v2401
        %v2403 = vpop.f32.mrf.mxu0
        %v2404 = vadd.f32 %v2315, %v2403
        %2405 = vmatmul.bf16.gmra.mxu0 %v1024
        %v2406 = vpop.f32.mrf.mxu0
        %v2407 = vadd.f32 %v2318, %v2406
        %v2408 = vpop.f32.mrf.mxu0
        %v2409 = vadd.f32 %v2320, %v2408
        %2410 = vmatmul.bf16.gmra.mxu0 %v1111
        %v2411 = vpop.f32.mrf.mxu0
        %v2412 = vadd.f32 %v2323, %v2411
        %v2413 = vpop.f32.mrf.mxu0
        %v2414 = vadd.f32 %v2325, %v2413
        %2415 = vmatmul.bf16.gmra.mxu0 %v1123
        %v2416 = vpop.f32.mrf.mxu0
        %v2417 = vadd.f32 %v2328, %v2416
        %v2418 = vpop.f32.mrf.mxu0
        %v2419 = vadd.f32 %v2330, %v2418
        %2420 = vdwg.mxu0
        %2421 = vmatpush.bf16.msra.mxu0 %v1636
        %2422 = vmatpush.bf16.msra.mxu0 %v1635
        %2423 = vmatpush.bf16.msra.mxu0 %v1634
        %2424 = vmatpush.bf16.msra.mxu0 %v1633
        %2425 = vmatpush.bf16.msra.mxu0 %v1632
        %2426 = vmatpush.bf16.msra.mxu0 %v1631
        %2427 = vmatpush.bf16.msra.mxu0 %v1630
        %2428 = vmatpush.bf16.msra.mxu0 %v1629
        %2429 = vmatmul.bf16.gmra.mxu0 %v1075
        %v2430 = vpop.f32.mrf.mxu0
        %v2431 = vadd.f32 %v2342, %v2430
        %v2432 = vpop.f32.mrf.mxu0
        %v2433 = vadd.f32 %v2344, %v2432
        %2434 = vmatmul.bf16.gmra.mxu0 %v1076
        %v2435 = vpop.f32.mrf.mxu0
        %v2436 = vadd.f32 %v2347, %v2435
        %v2437 = vpop.f32.mrf.mxu0
        %v2438 = vadd.f32 %v2349, %v2437
        %2439 = vmatmul.bf16.gmra.mxu0 %v1077
        %v2440 = vpop.f32.mrf.mxu0
        %v2441 = vadd.f32 %v2352, %v2440
        %v2442 = vpop.f32.mrf.mxu0
        %v2443 = vadd.f32 %v2354, %v2442
        %2444 = vmatmul.bf16.gmra.mxu0 %v1078
        %v2445 = vpop.f32.mrf.mxu0
        %v2446 = vadd.f32 %v2357, %v2445
        %v2447 = vpop.f32.mrf.mxu0
        %v2448 = vadd.f32 %v2359, %v2447
        %2449 = vmatmul.bf16.gmra.mxu0 %v1079
        %v2450 = vpop.f32.mrf.mxu0
        %v2451 = vadd.f32 %v2362, %v2450
        %v2452 = vpop.f32.mrf.mxu0
        %v2453 = vadd.f32 %v2364, %v2452
        %2454 = vmatmul.bf16.gmra.mxu0 %v1080
        %v2455 = vpop.f32.mrf.mxu0
        %v2456 = vadd.f32 %v2367, %v2455
        %v2457 = vpop.f32.mrf.mxu0
        %v2458 = vadd.f32 %v2369, %v2457
        %2459 = vmatmul.bf16.gmra.mxu0 %v1081
        %v2460 = vpop.f32.mrf.mxu0
        %v2461 = vadd.f32 %v2372, %v2460
        %v2462 = vpop.f32.mrf.mxu0
        %v2463 = vadd.f32 %v2374, %v2462
        %2464 = vmatmul.bf16.gmra.mxu0 %v1082
        %v2465 = vpop.f32.mrf.mxu0
        %v2466 = vadd.f32 %v2377, %v2465
        %v2467 = vpop.f32.mrf.mxu0
        %v2468 = vadd.f32 %v2379, %v2467
        %2469 = vmatmul.bf16.gmra.mxu0 %v1083
        %v2470 = vpop.f32.mrf.mxu0
        %v2471 = vadd.f32 %v2382, %v2470
        %v2472 = vpop.f32.mrf.mxu0
        %v2473 = vadd.f32 %v2384, %v2472
        %2474 = vmatmul.bf16.gmra.mxu0 %v1084
        %v2475 = vpop.f32.mrf.mxu0
        %v2476 = vadd.f32 %v2387, %v2475
        %v2477 = vpop.f32.mrf.mxu0
        %v2478 = vadd.f32 %v2389, %v2477
        %2479 = vmatmul.bf16.gmra.mxu0 %v1085
        %v2480 = vpop.f32.mrf.mxu0
        %v2481 = vadd.f32 %v2392, %v2480
        %v2482 = vpop.f32.mrf.mxu0
        %v2483 = vadd.f32 %v2394, %v2482
        %2484 = vmatmul.bf16.gmra.mxu0 %v1086
        %v2485 = vpop.f32.mrf.mxu0
        %v2486 = vadd.f32 %v2397, %v2485
        %v2487 = vpop.f32.mrf.mxu0
        %v2488 = vadd.f32 %v2399, %v2487
        %2489 = vmatmul.bf16.gmra.mxu0 %v1087
        %v2490 = vpop.f32.mrf.mxu0
        %v2491 = vadd.f32 %v2402, %v2490
        %v2492 = vpop.f32.mrf.mxu0
        %v2493 = vadd.f32 %v2404, %v2492
        %2494 = vmatmul.bf16.gmra.mxu0 %v1088
        %v2495 = vpop.f32.mrf.mxu0
        %v2496 = vadd.f32 %v2407, %v2495
        %v2497 = vpop.f32.mrf.mxu0
        %v2498 = vadd.f32 %v2409, %v2497
        %2499 = vmatmul.bf16.gmra.mxu0 %v1115
        %v2500 = vpop.f32.mrf.mxu0
        %v2501 = vadd.f32 %v2412, %v2500
        %v2502 = vpop.f32.mrf.mxu0
        %v2503 = vadd.f32 %v2414, %v2502
        %2504 = vmatmul.bf16.gmra.mxu0 %v1127
        %v2505 = vpop.f32.mrf.mxu0
        %v2506 = vadd.f32 %v2417, %v2505
        %v2507 = vpop.f32.mrf.mxu0
        %v2508 = vadd.f32 %v2419, %v2507
        %2509 = vdwg.mxu0
        %v2510 = vmax.f32 %v2431, 0.0
        %v2511 = vmax.f32 %v2433, 0.0
        %v2512 = vmax.f32 %v2436, 0.0
        %v2513 = vmax.f32 %v2438, 0.0
        %v2514 = vmax.f32 %v2441, 0.0
        %v2515 = vmax.f32 %v2443, 0.0
        %v2516 = vmax.f32 %v2446, 0.0
        %v2517 = vmax.f32 %v2448, 0.0
        %v2518 = vmax.f32 %v2451, 0.0
        %v2519 = vmax.f32 %v2453, 0.0
        %v2520 = vmax.f32 %v2456, 0.0
        %v2521 = vmax.f32 %v2458, 0.0
        %v2522 = vmax.f32 %v2461, 0.0
        %v2523 = vmax.f32 %v2463, 0.0
        %v2524 = vmax.f32 %v2466, 0.0
        %v2525 = vmax.f32 %v2468, 0.0
        %v2526 = vmax.f32 %v2471, 0.0
        %v2527 = vmax.f32 %v2473, 0.0
        %v2528 = vmax.f32 %v2476, 0.0
        %v2529 = vmax.f32 %v2478, 0.0
        %v2530 = vmax.f32 %v2481, 0.0
        %v2531 = vmax.f32 %v2483, 0.0
        %v2532 = vmax.f32 %v2486, 0.0
        %v2533 = vmax.f32 %v2488, 0.0
        %v2534 = vmax.f32 %v2491, 0.0
        %v2535 = vmax.f32 %v2493, 0.0
        %v2536 = vmax.f32 %v2496, 0.0
        %v2537 = vmax.f32 %v2498, 0.0
        %v2538 = vmax.f32 %v2501, 0.0
        %v2539 = vmax.f32 %v2503, 0.0
        %v2540 = vmax.f32 %v2506, 0.0
        %v2541 = vmax.f32 %v2508, 0.0
        %2542 = vst [vmem:[#allocation2] sm:$0xf] 0
        %2543 = vst [vmem:[#allocation2 + $0x4] sm:$0xf] 0
        %2544 = vst [vmem:[#allocation2 + $0x8] sm:$0x1] 0
        %s2545 = scalar_lea.vmem [#allocation2], 204
        %2546 = vst [vmem:[%s2545] sm:$0xf] 0
        %2547 = vst [vmem:[%s2545 + $0x4] sm:$0xf] 0
        %2548 = vst [vmem:[%s2545 + $0x8] sm:$0x1] 0
        %s2549 = scalar_lea.vmem [#allocation2], 12
        %vm2550 = vcmask 1040384
        %vm2551 = vsmask.f32 256
        %vm2552 = vmand %vm2550, %vm2551
        %v2553 = vld [vmem:[%s2549] sm:$0x1]
        %v2554 = vsel %vm2552, 0, %v2553
        %2555 = vst [vmem:[%s2549] sm:$0x1] %v2554
        %v2556 = vld [vmem:[%s2549 + $0xc] sm:$0x1]
        %v2557 = vsel %vm2552, 0, %v2556
        %2558 = vst [vmem:[%s2549 + $0xc] sm:$0x1] %v2557
        %v2559 = vld [vmem:[%s2549 + $0x18] sm:$0x1]
        %v2560 = vsel %vm2552, 0, %v2559
        %2561 = vst [vmem:[%s2549 + $0x18] sm:$0x1] %v2560
        %v2562 = vld [vmem:[%s2549 + $0x24] sm:$0x1]
        %v2563 = vsel %vm2552, 0, %v2562
        %2564 = vst [vmem:[%s2549 + $0x24] sm:$0x1] %v2563
        %v2565 = vld [vmem:[%s2549 + $0x30] sm:$0x1]
        %v2566 = vsel %vm2552, 0, %v2565
        %2567 = vst [vmem:[%s2549 + $0x30] sm:$0x1] %v2566
        %v2568 = vld [vmem:[%s2549 + $0x3c] sm:$0x1]
        %v2569 = vsel %vm2552, 0, %v2568
        %2570 = vst [vmem:[%s2549 + $0x3c] sm:$0x1] %v2569
        %v2571 = vld [vmem:[%s2549 + $0x48] sm:$0x1]
        %v2572 = vsel %vm2552, 0, %v2571
        %2573 = vst [vmem:[%s2549 + $0x48] sm:$0x1] %v2572
        %v2574 = vld [vmem:[%s2549 + $0x54] sm:$0x1]
        %v2575 = vsel %vm2552, 0, %v2574
        %2576 = vst [vmem:[%s2549 + $0x54] sm:$0x1] %v2575
        %v2577 = vld [vmem:[%s2549 + $0x60] sm:$0x1]
        %v2578 = vsel %vm2552, 0, %v2577
        %2579 = vst [vmem:[%s2549 + $0x60] sm:$0x1] %v2578
        %v2580 = vld [vmem:[%s2549 + $0x6c] sm:$0x1]
        %v2581 = vsel %vm2552, 0, %v2580
        %2582 = vst [vmem:[%s2549 + $0x6c] sm:$0x1] %v2581
        %v2583 = vld [vmem:[%s2549 + $0x78] sm:$0x1]
        %v2584 = vsel %vm2552, 0, %v2583
        %2585 = vst [vmem:[%s2549 + $0x78] sm:$0x1] %v2584
        %v2586 = vld [vmem:[%s2549 + $0x84] sm:$0x1]
        %v2587 = vsel %vm2552, 0, %v2586
        %2588 = vst [vmem:[%s2549 + $0x84] sm:$0x1] %v2587
        %v2589 = vld [vmem:[%s2549 + $0x90] sm:$0x1]
        %v2590 = vsel %vm2552, 0, %v2589
        %2591 = vst [vmem:[%s2549 + $0x90] sm:$0x1] %v2590
        %v2592 = vld [vmem:[%s2549 + $0x9c] sm:$0x1]
        %v2593 = vsel %vm2552, 0, %v2592
        %2594 = vst [vmem:[%s2549 + $0x9c] sm:$0x1] %v2593
        %v2595 = vld [vmem:[%s2549 + $0xa8] sm:$0x1]
        %v2596 = vsel %vm2552, 0, %v2595
        %2597 = vst [vmem:[%s2549 + $0xa8] sm:$0x1] %v2596
        %v2598 = vld [vmem:[%s2549 + $0xb4] sm:$0x1]
        %v2599 = vsel %vm2552, 0, %v2598
        %2600 = vst [vmem:[%s2549 + $0xb4] sm:$0x1] %v2599
        %vm2601 = vsmask.f32 7938
        %vm2602 = vmand %vm2550, %vm2601
        %v2603 = vld [vmem:[%s2549 + $0x8] sm:$0x1]
        %v2604 = vsel %vm2602, 0, %v2603
        %2605 = vst [vmem:[%s2549 + $0x8] sm:$0x1] %v2604
        %v2606 = vld [vmem:[%s2549 + $0x14] sm:$0x1]
        %v2607 = vsel %vm2602, 0, %v2606
        %2608 = vst [vmem:[%s2549 + $0x14] sm:$0x1] %v2607
        %v2609 = vld [vmem:[%s2549 + $0x20] sm:$0x1]
        %v2610 = vsel %vm2602, 0, %v2609
        %2611 = vst [vmem:[%s2549 + $0x20] sm:$0x1] %v2610
        %v2612 = vld [vmem:[%s2549 + $0x2c] sm:$0x1]
        %v2613 = vsel %vm2602, 0, %v2612
        %2614 = vst [vmem:[%s2549 + $0x2c] sm:$0x1] %v2613
        %v2615 = vld [vmem:[%s2549 + $0x38] sm:$0x1]
        %v2616 = vsel %vm2602, 0, %v2615
        %2617 = vst [vmem:[%s2549 + $0x38] sm:$0x1] %v2616
        %v2618 = vld [vmem:[%s2549 + $0x44] sm:$0x1]
        %v2619 = vsel %vm2602, 0, %v2618
        %2620 = vst [vmem:[%s2549 + $0x44] sm:$0x1] %v2619
        %v2621 = vld [vmem:[%s2549 + $0x50] sm:$0x1]
        %v2622 = vsel %vm2602, 0, %v2621
        %2623 = vst [vmem:[%s2549 + $0x50] sm:$0x1] %v2622
        %v2624 = vld [vmem:[%s2549 + $0x5c] sm:$0x1]
        %v2625 = vsel %vm2602, 0, %v2624
        %2626 = vst [vmem:[%s2549 + $0x5c] sm:$0x1] %v2625
        %v2627 = vld [vmem:[%s2549 + $0x68] sm:$0x1]
        %v2628 = vsel %vm2602, 0, %v2627
        %2629 = vst [vmem:[%s2549 + $0x68] sm:$0x1] %v2628
        %v2630 = vld [vmem:[%s2549 + $0x74] sm:$0x1]
        %v2631 = vsel %vm2602, 0, %v2630
        %2632 = vst [vmem:[%s2549 + $0x74] sm:$0x1] %v2631
        %v2633 = vld [vmem:[%s2549 + $0x80] sm:$0x1]
        %v2634 = vsel %vm2602, 0, %v2633
        %2635 = vst [vmem:[%s2549 + $0x80] sm:$0x1] %v2634
        %v2636 = vld [vmem:[%s2549 + $0x8c] sm:$0x1]
        %v2637 = vsel %vm2602, 0, %v2636
        %2638 = vst [vmem:[%s2549 + $0x8c] sm:$0x1] %v2637
        %v2639 = vld [vmem:[%s2549 + $0x98] sm:$0x1]
        %v2640 = vsel %vm2602, 0, %v2639
        %2641 = vst [vmem:[%s2549 + $0x98] sm:$0x1] %v2640
        %v2642 = vld [vmem:[%s2549 + $0xa4] sm:$0x1]
        %v2643 = vsel %vm2602, 0, %v2642
        %2644 = vst [vmem:[%s2549 + $0xa4] sm:$0x1] %v2643
        %v2645 = vld [vmem:[%s2549 + $0xb0] sm:$0x1]
        %v2646 = vsel %vm2602, 0, %v2645
        %2647 = vst [vmem:[%s2549 + $0xb0] sm:$0x1] %v2646
        %v2648 = vld [vmem:[%s2549 + $0xbc] sm:$0x1]
        %v2649 = vsel %vm2602, 0, %v2648
        %2650 = vst [vmem:[%s2549 + $0xbc] sm:$0x1] %v2649
        %v2651 = vpack.c.bf16 %v2510, %v2510
        %v2652 = vpack.c.bf16 %v2511, %v2511
        %v2653 = vpack.c.bf16 %v2512, %v2512
        %v2654 = vpack.c.bf16 %v2513, %v2513
        %v2655 = vpack.c.bf16 %v2514, %v2514
        %v2656 = vpack.c.bf16 %v2515, %v2515
        %v2657 = vpack.c.bf16 %v2516, %v2516
        %v2658 = vpack.c.bf16 %v2517, %v2517
        %v2659 = vpack.c.bf16 %v2518, %v2518
        %v2660 = vpack.c.bf16 %v2519, %v2519
        %v2661 = vpack.c.bf16 %v2520, %v2520
        %v2662 = vpack.c.bf16 %v2521, %v2521
        %v2663 = vpack.c.bf16 %v2522, %v2522
        %v2664 = vpack.c.bf16 %v2523, %v2523
        %v2665 = vpack.c.bf16 %v2524, %v2524
        %v2666 = vpack.c.bf16 %v2525, %v2525
        %v2667 = vpack.c.bf16 %v2526, %v2526
        %v2668 = vpack.c.bf16 %v2527, %v2527
        %v2669 = vpack.c.bf16 %v2528, %v2528
        %v2670 = vpack.c.bf16 %v2529, %v2529
        %v2671 = vpack.c.bf16 %v2530, %v2530
        %v2672 = vpack.c.bf16 %v2531, %v2531
        %v2673 = vpack.c.bf16 %v2532, %v2532
        %v2674 = vpack.c.bf16 %v2533, %v2533
        %v2675 = vpack.c.bf16 %v2534, %v2534
        %v2676 = vpack.c.bf16 %v2535, %v2535
        %v2677 = vpack.c.bf16 %v2536, %v2536
        %v2678 = vpack.c.bf16 %v2537, %v2537
        %v2679 = vpack.c.bf16 %v2538, %v2538
        %v2680 = vpack.c.bf16 %v2539, %v2539
        %v2681 = vpack.c.bf16 %v2540, %v2540
        %v2682 = vpack.c.bf16 %v2541, %v2541
        %vm2683 = vsmask.f32 4368
        %vm2684 = vmor %vm2551, %vm2683
        %v2686 = vshrl.u32 %v2651, 16
        %v2688 = vrot.slane %v2686, 7
        %v2689 = vshll.u32 %v2651, 16
        %v2691 = vor.u32 %v2688, %v2689
        %v2692 = vrot.slane %v2688, 4
        %v2694 = vshrl.u32 %v2652, 16
        %v2696 = vrot.slane %v2694, 7
        %v2697 = vshll.u32 %v2652, 16
        %v2699 = vor.u32 %v2696, %v2697
        %v2700 = vsel %vm2684, %v2692, %v2699
        %v2701 = vrot.slane %v2696, 4
        %v2703 = vshrl.u32 %v2653, 16
        %v2705 = vrot.slane %v2703, 7
        %v2706 = vshll.u32 %v2653, 16
        %v2708 = vor.u32 %v2705, %v2706
        %v2709 = vrot.slane %v2705, 4
        %v2711 = vshrl.u32 %v2654, 16
        %v2713 = vrot.slane %v2711, 7
        %v2714 = vshll.u32 %v2654, 16
        %v2716 = vor.u32 %v2713, %v2714
        %v2717 = vsel %vm2684, %v2709, %v2716
        %v2718 = vrot.slane %v2713, 4
        %v2720 = vshrl.u32 %v2655, 16
        %v2722 = vrot.slane %v2720, 7
        %v2723 = vshll.u32 %v2655, 16
        %v2725 = vor.u32 %v2722, %v2723
        %v2726 = vrot.slane %v2722, 4
        %v2728 = vshrl.u32 %v2656, 16
        %v2730 = vrot.slane %v2728, 7
        %v2731 = vshll.u32 %v2656, 16
        %v2733 = vor.u32 %v2730, %v2731
        %v2734 = vsel %vm2684, %v2726, %v2733
        %v2735 = vrot.slane %v2730, 4
        %v2737 = vshrl.u32 %v2657, 16
        %v2739 = vrot.slane %v2737, 7
        %v2740 = vshll.u32 %v2657, 16
        %v2742 = vor.u32 %v2739, %v2740
        %v2743 = vrot.slane %v2739, 4
        %v2745 = vshrl.u32 %v2658, 16
        %v2747 = vrot.slane %v2745, 7
        %v2748 = vshll.u32 %v2658, 16
        %v2750 = vor.u32 %v2747, %v2748
        %v2751 = vsel %vm2684, %v2743, %v2750
        %v2752 = vrot.slane %v2747, 4
        %v2754 = vshrl.u32 %v2659, 16
        %v2756 = vrot.slane %v2754, 7
        %v2757 = vshll.u32 %v2659, 16
        %v2759 = vor.u32 %v2756, %v2757
        %v2760 = vrot.slane %v2756, 4
        %v2762 = vshrl.u32 %v2660, 16
        %v2764 = vrot.slane %v2762, 7
        %v2765 = vshll.u32 %v2660, 16
        %v2767 = vor.u32 %v2764, %v2765
        %v2768 = vsel %vm2684, %v2760, %v2767
        %v2769 = vrot.slane %v2764, 4
        %v2771 = vshrl.u32 %v2661, 16
        %v2773 = vrot.slane %v2771, 7
        %v2774 = vshll.u32 %v2661, 16
        %v2776 = vor.u32 %v2773, %v2774
        %v2777 = vrot.slane %v2773, 4
        %v2779 = vshrl.u32 %v2662, 16
        %v2781 = vrot.slane %v2779, 7
        %v2782 = vshll.u32 %v2662, 16
        %v2784 = vor.u32 %v2781, %v2782
        %v2785 = vsel %vm2684, %v2777, %v2784
        %v2786 = vrot.slane %v2781, 4
        %v2788 = vshrl.u32 %v2663, 16
        %v2790 = vrot.slane %v2788, 7
        %v2791 = vshll.u32 %v2663, 16
        %v2793 = vor.u32 %v2790, %v2791
        %v2794 = vrot.slane %v2790, 4
        %v2796 = vshrl.u32 %v2664, 16
        %v2798 = vrot.slane %v2796, 7
        %v2799 = vshll.u32 %v2664, 16
        %v2801 = vor.u32 %v2798, %v2799
        %v2802 = vsel %vm2684, %v2794, %v2801
        %v2803 = vrot.slane %v2798, 4
        %v2805 = vshrl.u32 %v2665, 16
        %v2807 = vrot.slane %v2805, 7
        %v2808 = vshll.u32 %v2665, 16
        %v2810 = vor.u32 %v2807, %v2808
        %v2811 = vrot.slane %v2807, 4
        %v2813 = vshrl.u32 %v2666, 16
        %v2815 = vrot.slane %v2813, 7
        %v2816 = vshll.u32 %v2666, 16
        %v2818 = vor.u32 %v2815, %v2816
        %v2819 = vsel %vm2684, %v2811, %v2818
        %v2820 = vrot.slane %v2815, 4
        %v2822 = vshrl.u32 %v2667, 16
        %v2824 = vrot.slane %v2822, 7
        %v2825 = vshll.u32 %v2667, 16
        %v2827 = vor.u32 %v2824, %v2825
        %v2828 = vrot.slane %v2824, 4
        %v2830 = vshrl.u32 %v2668, 16
        %v2832 = vrot.slane %v2830, 7
        %v2833 = vshll.u32 %v2668, 16
        %v2835 = vor.u32 %v2832, %v2833
        %v2836 = vsel %vm2684, %v2828, %v2835
        %v2837 = vrot.slane %v2832, 4
        %v2839 = vshrl.u32 %v2669, 16
        %v2841 = vrot.slane %v2839, 7
        %v2842 = vshll.u32 %v2669, 16
        %v2844 = vor.u32 %v2841, %v2842
        %v2845 = vrot.slane %v2841, 4
        %v2847 = vshrl.u32 %v2670, 16
        %v2849 = vrot.slane %v2847, 7
        %v2850 = vshll.u32 %v2670, 16
        %v2852 = vor.u32 %v2849, %v2850
        %v2853 = vsel %vm2684, %v2845, %v2852
        %v2854 = vrot.slane %v2849, 4
        %v2856 = vshrl.u32 %v2671, 16
        %v2858 = vrot.slane %v2856, 7
        %v2859 = vshll.u32 %v2671, 16
        %v2861 = vor.u32 %v2858, %v2859
        %v2862 = vrot.slane %v2858, 4
        %v2864 = vshrl.u32 %v2672, 16
        %v2866 = vrot.slane %v2864, 7
        %v2867 = vshll.u32 %v2672, 16
        %v2869 = vor.u32 %v2866, %v2867
        %v2870 = vsel %vm2684, %v2862, %v2869
        %v2871 = vrot.slane %v2866, 4
        %v2873 = vshrl.u32 %v2673, 16
        %v2875 = vrot.slane %v2873, 7
        %v2876 = vshll.u32 %v2673, 16
        %v2878 = vor.u32 %v2875, %v2876
        %v2879 = vrot.slane %v2875, 4
        %v2881 = vshrl.u32 %v2674, 16
        %v2883 = vrot.slane %v2881, 7
        %v2884 = vshll.u32 %v2674, 16
        %v2886 = vor.u32 %v2883, %v2884
        %v2887 = vsel %vm2684, %v2879, %v2886
        %v2888 = vrot.slane %v2883, 4
        %v2890 = vshrl.u32 %v2675, 16
        %v2892 = vrot.slane %v2890, 7
        %v2893 = vshll.u32 %v2675, 16
        %v2895 = vor.u32 %v2892, %v2893
        %v2896 = vrot.slane %v2892, 4
        %v2898 = vshrl.u32 %v2676, 16
        %v2900 = vrot.slane %v2898, 7
        %v2901 = vshll.u32 %v2676, 16
        %v2903 = vor.u32 %v2900, %v2901
        %v2904 = vsel %vm2684, %v2896, %v2903
        %v2905 = vrot.slane %v2900, 4
        %v2907 = vshrl.u32 %v2677, 16
        %v2909 = vrot.slane %v2907, 7
        %v2910 = vshll.u32 %v2677, 16
        %v2912 = vor.u32 %v2909, %v2910
        %v2913 = vrot.slane %v2909, 4
        %v2915 = vshrl.u32 %v2678, 16
        %v2917 = vrot.slane %v2915, 7
        %v2918 = vshll.u32 %v2678, 16
        %v2920 = vor.u32 %v2917, %v2918
        %v2921 = vsel %vm2684, %v2913, %v2920
        %v2922 = vrot.slane %v2917, 4
        %v2924 = vshrl.u32 %v2679, 16
        %v2926 = vrot.slane %v2924, 7
        %v2927 = vshll.u32 %v2679, 16
        %v2929 = vor.u32 %v2926, %v2927
        %v2930 = vrot.slane %v2926, 4
        %v2932 = vshrl.u32 %v2680, 16
        %v2934 = vrot.slane %v2932, 7
        %v2935 = vshll.u32 %v2680, 16
        %v2937 = vor.u32 %v2934, %v2935
        %v2938 = vsel %vm2684, %v2930, %v2937
        %v2939 = vrot.slane %v2934, 4
        %v2941 = vshrl.u32 %v2681, 16
        %v2943 = vrot.slane %v2941, 7
        %v2944 = vshll.u32 %v2681, 16
        %v2946 = vor.u32 %v2943, %v2944
        %v2947 = vrot.slane %v2943, 4
        %v2949 = vshrl.u32 %v2682, 16
        %v2951 = vrot.slane %v2949, 7
        %v2952 = vshll.u32 %v2682, 16
        %v2954 = vor.u32 %v2951, %v2952
        %v2955 = vsel %vm2684, %v2947, %v2954
        %v2956 = vrot.slane %v2951, 4
        %vm3005 = vcmask 1043456
        %vm3006 = vmand %vm3005, %vm2601
        %v3007 = vld [vmem:[%s2549] sm:$0xf]
        %v3008 = vsel %vm3006, %v2691, %v3007
        %3009 = vst [vmem:[%s2549] sm:$0xf] %v3008
        %3010 = vst [vmem:[%s2549 + $0x4] sm:$0xf] %v2700
        %v3011 = vld [vmem:[%s2549 + $0x8] sm:$0x1]
        %v3012 = vsel %vm2552, %v2701, %v3011
        %3013 = vst [vmem:[%s2549 + $0x8] sm:$0x1] %v3012
        %v3014 = vld [vmem:[%s2549 + $0xc] sm:$0xf]
        %v3015 = vsel %vm3006, %v2708, %v3014
        %3016 = vst [vmem:[%s2549 + $0xc] sm:$0xf] %v3015
        %3017 = vst [vmem:[%s2549 + $0x10] sm:$0xf] %v2717
        %v3018 = vld [vmem:[%s2549 + $0x14] sm:$0x1]
        %v3019 = vsel %vm2552, %v2718, %v3018
        %3020 = vst [vmem:[%s2549 + $0x14] sm:$0x1] %v3019
        %v3021 = vld [vmem:[%s2549 + $0x18] sm:$0xf]
        %v3022 = vsel %vm3006, %v2725, %v3021
        %3023 = vst [vmem:[%s2549 + $0x18] sm:$0xf] %v3022
        %3024 = vst [vmem:[%s2549 + $0x1c] sm:$0xf] %v2734
        %v3025 = vld [vmem:[%s2549 + $0x20] sm:$0x1]
        %v3026 = vsel %vm2552, %v2735, %v3025
        %3027 = vst [vmem:[%s2549 + $0x20] sm:$0x1] %v3026
        %v3028 = vld [vmem:[%s2549 + $0x24] sm:$0xf]
        %v3029 = vsel %vm3006, %v2742, %v3028
        %3030 = vst [vmem:[%s2549 + $0x24] sm:$0xf] %v3029
        %3031 = vst [vmem:[%s2549 + $0x28] sm:$0xf] %v2751
        %v3032 = vld [vmem:[%s2549 + $0x2c] sm:$0x1]
        %v3033 = vsel %vm2552, %v2752, %v3032
        %3034 = vst [vmem:[%s2549 + $0x2c] sm:$0x1] %v3033
        %v3035 = vld [vmem:[%s2549 + $0x30] sm:$0xf]
        %v3036 = vsel %vm3006, %v2759, %v3035
        %3037 = vst [vmem:[%s2549 + $0x30] sm:$0xf] %v3036
        %3038 = vst [vmem:[%s2549 + $0x34] sm:$0xf] %v2768
        %v3039 = vld [vmem:[%s2549 + $0x38] sm:$0x1]
        %v3040 = vsel %vm2552, %v2769, %v3039
        %3041 = vst [vmem:[%s2549 + $0x38] sm:$0x1] %v3040
        %v3042 = vld [vmem:[%s2549 + $0x3c] sm:$0xf]
        %v3043 = vsel %vm3006, %v2776, %v3042
        %3044 = vst [vmem:[%s2549 + $0x3c] sm:$0xf] %v3043
        %3045 = vst [vmem:[%s2549 + $0x40] sm:$0xf] %v2785
        %v3046 = vld [vmem:[%s2549 + $0x44] sm:$0x1]
        %v3047 = vsel %vm2552, %v2786, %v3046
        %3048 = vst [vmem:[%s2549 + $0x44] sm:$0x1] %v3047
        %v3049 = vld [vmem:[%s2549 + $0x48] sm:$0xf]
        %v3050 = vsel %vm3006, %v2793, %v3049
        %3051 = vst [vmem:[%s2549 + $0x48] sm:$0xf] %v3050
        %3052 = vst [vmem:[%s2549 + $0x4c] sm:$0xf] %v2802
        %v3053 = vld [vmem:[%s2549 + $0x50] sm:$0x1]
        %v3054 = vsel %vm2552, %v2803, %v3053
        %3055 = vst [vmem:[%s2549 + $0x50] sm:$0x1] %v3054
        %v3056 = vld [vmem:[%s2549 + $0x54] sm:$0xf]
        %v3057 = vsel %vm3006, %v2810, %v3056
        %3058 = vst [vmem:[%s2549 + $0x54] sm:$0xf] %v3057
        %3059 = vst [vmem:[%s2549 + $0x58] sm:$0xf] %v2819
        %v3060 = vld [vmem:[%s2549 + $0x5c] sm:$0x1]
        %v3061 = vsel %vm2552, %v2820, %v3060
        %3062 = vst [vmem:[%s2549 + $0x5c] sm:$0x1] %v3061
        %v3063 = vld [vmem:[%s2549 + $0x60] sm:$0xf]
        %v3064 = vsel %vm3006, %v2827, %v3063
        %3065 = vst [vmem:[%s2549 + $0x60] sm:$0xf] %v3064
        %3066 = vst [vmem:[%s2549 + $0x64] sm:$0xf] %v2836
        %v3067 = vld [vmem:[%s2549 + $0x68] sm:$0x1]
        %v3068 = vsel %vm2552, %v2837, %v3067
        %3069 = vst [vmem:[%s2549 + $0x68] sm:$0x1] %v3068
        %v3070 = vld [vmem:[%s2549 + $0x6c] sm:$0xf]
        %v3071 = vsel %vm3006, %v2844, %v3070
        %3072 = vst [vmem:[%s2549 + $0x6c] sm:$0xf] %v3071
        %3073 = vst [vmem:[%s2549 + $0x70] sm:$0xf] %v2853
        %v3074 = vld [vmem:[%s2549 + $0x74] sm:$0x1]
        %v3075 = vsel %vm2552, %v2854, %v3074
        %3076 = vst [vmem:[%s2549 + $0x74] sm:$0x1] %v3075
        %v3077 = vld [vmem:[%s2549 + $0x78] sm:$0xf]
        %v3078 = vsel %vm3006, %v2861, %v3077
        %3079 = vst [vmem:[%s2549 + $0x78] sm:$0xf] %v3078
        %3080 = vst [vmem:[%s2549 + $0x7c] sm:$0xf] %v2870
        %v3081 = vld [vmem:[%s2549 + $0x80] sm:$0x1]
        %v3082 = vsel %vm2552, %v2871, %v3081
        %3083 = vst [vmem:[%s2549 + $0x80] sm:$0x1] %v3082
        %v3084 = vld [vmem:[%s2549 + $0x84] sm:$0xf]
        %v3085 = vsel %vm3006, %v2878, %v3084
        %3086 = vst [vmem:[%s2549 + $0x84] sm:$0xf] %v3085
        %3087 = vst [vmem:[%s2549 + $0x88] sm:$0xf] %v2887
        %v3088 = vld [vmem:[%s2549 + $0x8c] sm:$0x1]
        %v3089 = vsel %vm2552, %v2888, %v3088
        %3090 = vst [vmem:[%s2549 + $0x8c] sm:$0x1] %v3089
        %v3091 = vld [vmem:[%s2549 + $0x90] sm:$0xf]
        %v3092 = vsel %vm3006, %v2895, %v3091
        %3093 = vst [vmem:[%s2549 + $0x90] sm:$0xf] %v3092
        %3094 = vst [vmem:[%s2549 + $0x94] sm:$0xf] %v2904
        %v3095 = vld [vmem:[%s2549 + $0x98] sm:$0x1]
        %v3096 = vsel %vm2552, %v2905, %v3095
        %3097 = vst [vmem:[%s2549 + $0x98] sm:$0x1] %v3096
        %v3098 = vld [vmem:[%s2549 + $0x9c] sm:$0xf]
        %v3099 = vsel %vm3006, %v2912, %v3098
        %3100 = vst [vmem:[%s2549 + $0x9c] sm:$0xf] %v3099
        %3101 = vst [vmem:[%s2549 + $0xa0] sm:$0xf] %v2921
        %v3102 = vld [vmem:[%s2549 + $0xa4] sm:$0x1]
        %v3103 = vsel %vm2552, %v2922, %v3102
        %3104 = vst [vmem:[%s2549 + $0xa4] sm:$0x1] %v3103
        %v3105 = vld [vmem:[%s2549 + $0xa8] sm:$0xf]
        %v3106 = vsel %vm3006, %v2929, %v3105
        %3107 = vst [vmem:[%s2549 + $0xa8] sm:$0xf] %v3106
        %3108 = vst [vmem:[%s2549 + $0xac] sm:$0xf] %v2938
        %v3109 = vld [vmem:[%s2549 + $0xb0] sm:$0x1]
        %v3110 = vsel %vm2552, %v2939, %v3109
        %3111 = vst [vmem:[%s2549 + $0xb0] sm:$0x1] %v3110
        %v3112 = vld [vmem:[%s2549 + $0xb4] sm:$0xf]
        %v3113 = vsel %vm3006, %v2946, %v3112
        %3114 = vst [vmem:[%s2549 + $0xb4] sm:$0xf] %v3113
        %3115 = vst [vmem:[%s2549 + $0xb8] sm:$0xf] %v2955
        %v3116 = vld [vmem:[%s2549 + $0xbc] sm:$0x1]
        %v3117 = vsel %vm2552, %v2956, %v3116
        %3118 = vst [vmem:[%s2549 + $0xbc] sm:$0x1] %v3117
        %v3119 = vld [vmem:[#allocation2] sm:$0xf]
        %v3120 = vld [vmem:[#allocation2 + $0x4] sm:$0xf]
        %v3121 = vld [vmem:[#allocation2 + $0x8] sm:$0x1]
        %v3122 = vld [vmem:[#allocation2 + $0xc] sm:$0xf]
        %v3123 = vld [vmem:[#allocation2 + $0x10] sm:$0xf]
        %v3124 = vld [vmem:[#allocation2 + $0x14] sm:$0x1]
        %v3125 = vld [vmem:[#allocation2 + $0x18] sm:$0xf]
        %v3126 = vld [vmem:[#allocation2 + $0x1c] sm:$0xf]
        %v3127 = vld [vmem:[#allocation2 + $0x20] sm:$0x1]
        %v3128 = vld [vmem:[#allocation2 + $0x24] sm:$0xf]
        %v3129 = vld [vmem:[#allocation2 + $0x28] sm:$0xf]
        %v3130 = vld [vmem:[#allocation2 + $0x2c] sm:$0x1]
        %v3131 = vld [vmem:[#allocation2 + $0x30] sm:$0xf]
        %v3132 = vld [vmem:[#allocation2 + $0x34] sm:$0xf]
        %v3133 = vld [vmem:[#allocation2 + $0x38] sm:$0x1]
        %v3134 = vld [vmem:[#allocation2 + $0x3c] sm:$0xf]
        %v3135 = vld [vmem:[#allocation2 + $0x40] sm:$0xf]
        %v3136 = vld [vmem:[#allocation2 + $0x44] sm:$0x1]
        %v3137 = vld [vmem:[#allocation2 + $0x48] sm:$0xf]
        %v3138 = vld [vmem:[#allocation2 + $0x4c] sm:$0xf]
        %v3139 = vld [vmem:[#allocation2 + $0x50] sm:$0x1]
        %v3140 = vld [vmem:[#allocation2 + $0x54] sm:$0xf]
        %v3141 = vld [vmem:[#allocation2 + $0x58] sm:$0xf]
        %v3142 = vld [vmem:[#allocation2 + $0x5c] sm:$0x1]
        %v3143 = vld [vmem:[#allocation2 + $0x60] sm:$0xf]
        %v3144 = vld [vmem:[#allocation2 + $0x64] sm:$0xf]
        %v3145 = vld [vmem:[#allocation2 + $0x68] sm:$0x1]
        %v3146 = vld [vmem:[#allocation2 + $0x6c] sm:$0xf]
        %v3147 = vld [vmem:[#allocation2 + $0x70] sm:$0xf]
        %v3148 = vld [vmem:[#allocation2 + $0x74] sm:$0x1]
        %v3149 = vld [vmem:[#allocation2 + $0x78] sm:$0xf]
        %v3150 = vld [vmem:[#allocation2 + $0x7c] sm:$0xf]
        %v3151 = vld [vmem:[#allocation2 + $0x80] sm:$0x1]
        %v3152 = vld [vmem:[#allocation2 + $0x84] sm:$0xf]
        %v3153 = vld [vmem:[#allocation2 + $0x88] sm:$0xf]
        %v3154 = vld [vmem:[#allocation2 + $0x8c] sm:$0x1]
        %v3155 = vld [vmem:[#allocation2 + $0x90] sm:$0xf]
        %v3156 = vld [vmem:[#allocation2 + $0x94] sm:$0xf]
        %v3157 = vld [vmem:[#allocation2 + $0x98] sm:$0x1]
        %v3158 = vld [vmem:[#allocation2 + $0x9c] sm:$0xf]
        %v3159 = vld [vmem:[#allocation2 + $0xa0] sm:$0xf]
        %v3160 = vld [vmem:[#allocation2 + $0xa4] sm:$0x1]
        %v3161 = vld [vmem:[#allocation2 + $0xa8] sm:$0xf]
        %v3162 = vld [vmem:[#allocation2 + $0xac] sm:$0xf]
        %v3163 = vld [vmem:[#allocation2 + $0xb0] sm:$0x1]
        %v3164 = vld [vmem:[#allocation2 + $0xb4] sm:$0xf]
        %v3165 = vld [vmem:[#allocation2 + $0xb8] sm:$0xf]
        %v3166 = vld [vmem:[#allocation2 + $0xbc] sm:$0x1]
        %v3167 = vld [vmem:[#allocation2 + $0xc0] sm:$0xf]
        %v3168 = vld [vmem:[#allocation2 + $0xc4] sm:$0xf]
        %v3169 = vld [vmem:[#allocation2 + $0xc8] sm:$0x1]
        %v3170 = vld [vmem:[#allocation2 + $0xcc] sm:$0xf]
        %v3171 = vld [vmem:[#allocation2 + $0xd0] sm:$0xf]
        %v3172 = vld [vmem:[#allocation2 + $0xd4] sm:$0x1]
        %v3174 = vshrl.u32 %v3119, 16
        %v3176 = vrot.slane %v3174, 4
        %v3177 = vshll.u32 %v3119, 16
        %v3179 = vrot.slane %v3177, 5
        %v3180 = vor.u32 %v3176, %v3179
        %v3181 = vrot.slane %v3180, 4
        %v3183 = vshll.u32 %v3120, 16
        %v3185 = vrot.slane %v3183, 5
        %v3186 = vsel %vm297, %v3181, %v3185
        %v3187 = vshrl.u32 %v3120, 16
        %v3189 = vrot.slane %v3187, 4
        %v3190 = vor.u32 %v3189, %v3185
        %v3191 = vrot.slane %v3190, 4
        %v3193 = vshll.u32 %v3121, 16
        %v3195 = vrot.slane %v3193, 5
        %v3196 = vsel %vm297, %v3191, %v3195
        %v3198 = vshrl.u32 %v3122, 16
        %v3200 = vrot.slane %v3198, 4
        %v3201 = vshll.u32 %v3122, 16
        %v3203 = vrot.slane %v3201, 5
        %v3204 = vor.u32 %v3200, %v3203
        %v3205 = vrot.slane %v3204, 4
        %v3207 = vshll.u32 %v3123, 16
        %v3209 = vrot.slane %v3207, 5
        %v3210 = vsel %vm297, %v3205, %v3209
        %v3211 = vshrl.u32 %v3123, 16
        %v3213 = vrot.slane %v3211, 4
        %v3214 = vor.u32 %v3213, %v3209
        %v3215 = vrot.slane %v3214, 4
        %v3217 = vshll.u32 %v3124, 16
        %v3219 = vrot.slane %v3217, 5
        %v3220 = vsel %vm297, %v3215, %v3219
        %v3222 = vshrl.u32 %v3125, 16
        %v3224 = vrot.slane %v3222, 4
        %v3225 = vshll.u32 %v3125, 16
        %v3227 = vrot.slane %v3225, 5
        %v3228 = vor.u32 %v3224, %v3227
        %v3229 = vrot.slane %v3228, 4
        %v3231 = vshll.u32 %v3126, 16
        %v3233 = vrot.slane %v3231, 5
        %v3234 = vsel %vm297, %v3229, %v3233
        %v3235 = vshrl.u32 %v3126, 16
        %v3237 = vrot.slane %v3235, 4
        %v3238 = vor.u32 %v3237, %v3233
        %v3239 = vrot.slane %v3238, 4
        %v3241 = vshll.u32 %v3127, 16
        %v3243 = vrot.slane %v3241, 5
        %v3244 = vsel %vm297, %v3239, %v3243
        %v3246 = vshrl.u32 %v3128, 16
        %v3248 = vrot.slane %v3246, 4
        %v3249 = vshll.u32 %v3128, 16
        %v3251 = vrot.slane %v3249, 5
        %v3252 = vor.u32 %v3248, %v3251
        %v3253 = vrot.slane %v3252, 4
        %v3255 = vshll.u32 %v3129, 16
        %v3257 = vrot.slane %v3255, 5
        %v3258 = vsel %vm297, %v3253, %v3257
        %v3259 = vshrl.u32 %v3129, 16
        %v3261 = vrot.slane %v3259, 4
        %v3262 = vor.u32 %v3261, %v3257
        %v3263 = vrot.slane %v3262, 4
        %v3265 = vshll.u32 %v3130, 16
        %v3267 = vrot.slane %v3265, 5
        %v3268 = vsel %vm297, %v3263, %v3267
        %v3270 = vshrl.u32 %v3131, 16
        %v3272 = vrot.slane %v3270, 4
        %v3273 = vshll.u32 %v3131, 16
        %v3275 = vrot.slane %v3273, 5
        %v3276 = vor.u32 %v3272, %v3275
        %v3277 = vrot.slane %v3276, 4
        %v3279 = vshll.u32 %v3132, 16
        %v3281 = vrot.slane %v3279, 5
        %v3282 = vsel %vm297, %v3277, %v3281
        %v3283 = vshrl.u32 %v3132, 16
        %v3285 = vrot.slane %v3283, 4
        %v3286 = vor.u32 %v3285, %v3281
        %v3287 = vrot.slane %v3286, 4
        %v3289 = vshll.u32 %v3133, 16
        %v3291 = vrot.slane %v3289, 5
        %v3292 = vsel %vm297, %v3287, %v3291
        %v3294 = vshrl.u32 %v3134, 16
        %v3296 = vrot.slane %v3294, 4
        %v3297 = vshll.u32 %v3134, 16
        %v3299 = vrot.slane %v3297, 5
        %v3300 = vor.u32 %v3296, %v3299
        %v3301 = vrot.slane %v3300, 4
        %v3303 = vshll.u32 %v3135, 16
        %v3305 = vrot.slane %v3303, 5
        %v3306 = vsel %vm297, %v3301, %v3305
        %v3307 = vshrl.u32 %v3135, 16
        %v3309 = vrot.slane %v3307, 4
        %v3310 = vor.u32 %v3309, %v3305
        %v3311 = vrot.slane %v3310, 4
        %v3313 = vshll.u32 %v3136, 16
        %v3315 = vrot.slane %v3313, 5
        %v3316 = vsel %vm297, %v3311, %v3315
        %v3318 = vshrl.u32 %v3137, 16
        %v3320 = vrot.slane %v3318, 4
        %v3321 = vshll.u32 %v3137, 16
        %v3323 = vrot.slane %v3321, 5
        %v3324 = vor.u32 %v3320, %v3323
        %v3325 = vrot.slane %v3324, 4
        %v3327 = vshll.u32 %v3138, 16
        %v3329 = vrot.slane %v3327, 5
        %v3330 = vsel %vm297, %v3325, %v3329
        %v3331 = vshrl.u32 %v3138, 16
        %v3333 = vrot.slane %v3331, 4
        %v3334 = vor.u32 %v3333, %v3329
        %v3335 = vrot.slane %v3334, 4
        %v3337 = vshll.u32 %v3139, 16
        %v3339 = vrot.slane %v3337, 5
        %v3340 = vsel %vm297, %v3335, %v3339
        %v3342 = vshrl.u32 %v3140, 16
        %v3344 = vrot.slane %v3342, 4
        %v3345 = vshll.u32 %v3140, 16
        %v3347 = vrot.slane %v3345, 5
        %v3348 = vor.u32 %v3344, %v3347
        %v3349 = vrot.slane %v3348, 4
        %v3351 = vshll.u32 %v3141, 16
        %v3353 = vrot.slane %v3351, 5
        %v3354 = vsel %vm297, %v3349, %v3353
        %v3355 = vshrl.u32 %v3141, 16
        %v3357 = vrot.slane %v3355, 4
        %v3358 = vor.u32 %v3357, %v3353
        %v3359 = vrot.slane %v3358, 4
        %v3361 = vshll.u32 %v3142, 16
        %v3363 = vrot.slane %v3361, 5
        %v3364 = vsel %vm297, %v3359, %v3363
        %v3366 = vshrl.u32 %v3143, 16
        %v3368 = vrot.slane %v3366, 4
        %v3369 = vshll.u32 %v3143, 16
        %v3371 = vrot.slane %v3369, 5
        %v3372 = vor.u32 %v3368, %v3371
        %v3373 = vrot.slane %v3372, 4
        %v3375 = vshll.u32 %v3144, 16
        %v3377 = vrot.slane %v3375, 5
        %v3378 = vsel %vm297, %v3373, %v3377
        %v3379 = vshrl.u32 %v3144, 16
        %v3381 = vrot.slane %v3379, 4
        %v3382 = vor.u32 %v3381, %v3377
        %v3383 = vrot.slane %v3382, 4
        %v3385 = vshll.u32 %v3145, 16
        %v3387 = vrot.slane %v3385, 5
        %v3388 = vsel %vm297, %v3383, %v3387
        %v3390 = vshrl.u32 %v3146, 16
        %v3392 = vrot.slane %v3390, 4
        %v3393 = vshll.u32 %v3146, 16
        %v3395 = vrot.slane %v3393, 5
        %v3396 = vor.u32 %v3392, %v3395
        %v3397 = vrot.slane %v3396, 4
        %v3399 = vshll.u32 %v3147, 16
        %v3401 = vrot.slane %v3399, 5
        %v3402 = vsel %vm297, %v3397, %v3401
        %v3403 = vshrl.u32 %v3147, 16
        %v3405 = vrot.slane %v3403, 4
        %v3406 = vor.u32 %v3405, %v3401
        %v3407 = vrot.slane %v3406, 4
        %v3409 = vshll.u32 %v3148, 16
        %v3411 = vrot.slane %v3409, 5
        %v3412 = vsel %vm297, %v3407, %v3411
        %v3414 = vshrl.u32 %v3149, 16
        %v3416 = vrot.slane %v3414, 4
        %v3417 = vshll.u32 %v3149, 16
        %v3419 = vrot.slane %v3417, 5
        %v3420 = vor.u32 %v3416, %v3419
        %v3421 = vrot.slane %v3420, 4
        %v3423 = vshll.u32 %v3150, 16
        %v3425 = vrot.slane %v3423, 5
        %v3426 = vsel %vm297, %v3421, %v3425
        %v3427 = vshrl.u32 %v3150, 16
        %v3429 = vrot.slane %v3427, 4
        %v3430 = vor.u32 %v3429, %v3425
        %v3431 = vrot.slane %v3430, 4
        %v3433 = vshll.u32 %v3151, 16
        %v3435 = vrot.slane %v3433, 5
        %v3436 = vsel %vm297, %v3431, %v3435
        %v3438 = vshrl.u32 %v3152, 16
        %v3440 = vrot.slane %v3438, 4
        %v3441 = vshll.u32 %v3152, 16
        %v3443 = vrot.slane %v3441, 5
        %v3444 = vor.u32 %v3440, %v3443
        %v3445 = vrot.slane %v3444, 4
        %v3447 = vshll.u32 %v3153, 16
        %v3449 = vrot.slane %v3447, 5
        %v3450 = vsel %vm297, %v3445, %v3449
        %v3451 = vshrl.u32 %v3153, 16
        %v3453 = vrot.slane %v3451, 4
        %v3454 = vor.u32 %v3453, %v3449
        %v3455 = vrot.slane %v3454, 4
        %v3457 = vshll.u32 %v3154, 16
        %v3459 = vrot.slane %v3457, 5
        %v3460 = vsel %vm297, %v3455, %v3459
        %v3462 = vshrl.u32 %v3155, 16
        %v3464 = vrot.slane %v3462, 4
        %v3465 = vshll.u32 %v3155, 16
        %v3467 = vrot.slane %v3465, 5
        %v3468 = vor.u32 %v3464, %v3467
        %v3469 = vrot.slane %v3468, 4
        %v3471 = vshll.u32 %v3156, 16
        %v3473 = vrot.slane %v3471, 5
        %v3474 = vsel %vm297, %v3469, %v3473
        %v3475 = vshrl.u32 %v3156, 16
        %v3477 = vrot.slane %v3475, 4
        %v3478 = vor.u32 %v3477, %v3473
        %v3479 = vrot.slane %v3478, 4
        %v3481 = vshll.u32 %v3157, 16
        %v3483 = vrot.slane %v3481, 5
        %v3484 = vsel %vm297, %v3479, %v3483
        %v3486 = vshrl.u32 %v3158, 16
        %v3488 = vrot.slane %v3486, 4
        %v3489 = vshll.u32 %v3158, 16
        %v3491 = vrot.slane %v3489, 5
        %v3492 = vor.u32 %v3488, %v3491
        %v3493 = vrot.slane %v3492, 4
        %v3495 = vshll.u32 %v3159, 16
        %v3497 = vrot.slane %v3495, 5
        %v3498 = vsel %vm297, %v3493, %v3497
        %v3499 = vshrl.u32 %v3159, 16
        %v3501 = vrot.slane %v3499, 4
        %v3502 = vor.u32 %v3501, %v3497
        %v3503 = vrot.slane %v3502, 4
        %v3505 = vshll.u32 %v3160, 16
        %v3507 = vrot.slane %v3505, 5
        %v3508 = vsel %vm297, %v3503, %v3507
        %v3510 = vshrl.u32 %v3161, 16
        %v3512 = vrot.slane %v3510, 4
        %v3513 = vshll.u32 %v3161, 16
        %v3515 = vrot.slane %v3513, 5
        %v3516 = vor.u32 %v3512, %v3515
        %v3517 = vrot.slane %v3516, 4
        %v3519 = vshll.u32 %v3162, 16
        %v3521 = vrot.slane %v3519, 5
        %v3522 = vsel %vm297, %v3517, %v3521
        %v3523 = vshrl.u32 %v3162, 16
        %v3525 = vrot.slane %v3523, 4
        %v3526 = vor.u32 %v3525, %v3521
        %v3527 = vrot.slane %v3526, 4
        %v3529 = vshll.u32 %v3163, 16
        %v3531 = vrot.slane %v3529, 5
        %v3532 = vsel %vm297, %v3527, %v3531
        %v3534 = vshrl.u32 %v3164, 16
        %v3536 = vrot.slane %v3534, 4
        %v3537 = vshll.u32 %v3164, 16
        %v3539 = vrot.slane %v3537, 5
        %v3540 = vor.u32 %v3536, %v3539
        %v3541 = vrot.slane %v3540, 4
        %v3543 = vshll.u32 %v3165, 16
        %v3545 = vrot.slane %v3543, 5
        %v3546 = vsel %vm297, %v3541, %v3545
        %v3547 = vshrl.u32 %v3165, 16
        %v3549 = vrot.slane %v3547, 4
        %v3550 = vor.u32 %v3549, %v3545
        %v3551 = vrot.slane %v3550, 4
        %v3553 = vshll.u32 %v3166, 16
        %v3555 = vrot.slane %v3553, 5
        %v3556 = vsel %vm297, %v3551, %v3555
        %v3605 = vrot.slane %v3119, 5
        %v3606 = vrot.slane %v3605, 4
        %v3607 = vrot.slane %v3120, 5
        %v3608 = vsel %vm732, %v3606, %v3607
        %v3609 = vrot.slane %v3607, 4
        %v3610 = vrot.slane %v3121, 5
        %v3611 = vsel %vm732, %v3609, %v3610
        %v3612 = vrot.slane %v3122, 5
        %v3613 = vrot.slane %v3612, 4
        %v3614 = vrot.slane %v3123, 5
        %v3615 = vsel %vm732, %v3613, %v3614
        %v3616 = vrot.slane %v3614, 4
        %v3617 = vrot.slane %v3124, 5
        %v3618 = vsel %vm732, %v3616, %v3617
        %v3619 = vrot.slane %v3125, 5
        %v3620 = vrot.slane %v3619, 4
        %v3621 = vrot.slane %v3126, 5
        %v3622 = vsel %vm732, %v3620, %v3621
        %v3623 = vrot.slane %v3621, 4
        %v3624 = vrot.slane %v3127, 5
        %v3625 = vsel %vm732, %v3623, %v3624
        %v3626 = vrot.slane %v3128, 5
        %v3627 = vrot.slane %v3626, 4
        %v3628 = vrot.slane %v3129, 5
        %v3629 = vsel %vm732, %v3627, %v3628
        %v3630 = vrot.slane %v3628, 4
        %v3631 = vrot.slane %v3130, 5
        %v3632 = vsel %vm732, %v3630, %v3631
        %v3633 = vrot.slane %v3131, 5
        %v3634 = vrot.slane %v3633, 4
        %v3635 = vrot.slane %v3132, 5
        %v3636 = vsel %vm732, %v3634, %v3635
        %v3637 = vrot.slane %v3635, 4
        %v3638 = vrot.slane %v3133, 5
        %v3639 = vsel %vm732, %v3637, %v3638
        %v3640 = vrot.slane %v3134, 5
        %v3641 = vrot.slane %v3640, 4
        %v3642 = vrot.slane %v3135, 5
        %v3643 = vsel %vm732, %v3641, %v3642
        %v3644 = vrot.slane %v3642, 4
        %v3645 = vrot.slane %v3136, 5
        %v3646 = vsel %vm732, %v3644, %v3645
        %v3647 = vrot.slane %v3137, 5
        %v3648 = vrot.slane %v3647, 4
        %v3649 = vrot.slane %v3138, 5
        %v3650 = vsel %vm732, %v3648, %v3649
        %v3651 = vrot.slane %v3649, 4
        %v3652 = vrot.slane %v3139, 5
        %v3653 = vsel %vm732, %v3651, %v3652
        %v3654 = vrot.slane %v3140, 5
        %v3655 = vrot.slane %v3654, 4
        %v3656 = vrot.slane %v3141, 5
        %v3657 = vsel %vm732, %v3655, %v3656
        %v3658 = vrot.slane %v3656, 4
        %v3659 = vrot.slane %v3142, 5
        %v3660 = vsel %vm732, %v3658, %v3659
        %v3661 = vrot.slane %v3143, 5
        %v3662 = vrot.slane %v3661, 4
        %v3663 = vrot.slane %v3144, 5
        %v3664 = vsel %vm732, %v3662, %v3663
        %v3665 = vrot.slane %v3663, 4
        %v3666 = vrot.slane %v3145, 5
        %v3667 = vsel %vm732, %v3665, %v3666
        %v3668 = vrot.slane %v3146, 5
        %v3669 = vrot.slane %v3668, 4
        %v3670 = vrot.slane %v3147, 5
        %v3671 = vsel %vm732, %v3669, %v3670
        %v3672 = vrot.slane %v3670, 4
        %v3673 = vrot.slane %v3148, 5
        %v3674 = vsel %vm732, %v3672, %v3673
        %v3675 = vrot.slane %v3149, 5
        %v3676 = vrot.slane %v3675, 4
        %v3677 = vrot.slane %v3150, 5
        %v3678 = vsel %vm732, %v3676, %v3677
        %v3679 = vrot.slane %v3677, 4
        %v3680 = vrot.slane %v3151, 5
        %v3681 = vsel %vm732, %v3679, %v3680
        %v3682 = vrot.slane %v3152, 5
        %v3683 = vrot.slane %v3682, 4
        %v3684 = vrot.slane %v3153, 5
        %v3685 = vsel %vm732, %v3683, %v3684
        %v3686 = vrot.slane %v3684, 4
        %v3687 = vrot.slane %v3154, 5
        %v3688 = vsel %vm732, %v3686, %v3687
        %v3689 = vrot.slane %v3155, 5
        %v3690 = vrot.slane %v3689, 4
        %v3691 = vrot.slane %v3156, 5
        %v3692 = vsel %vm732, %v3690, %v3691
        %v3693 = vrot.slane %v3691, 4
        %v3694 = vrot.slane %v3157, 5
        %v3695 = vsel %vm732, %v3693, %v3694
        %v3696 = vrot.slane %v3158, 5
        %v3697 = vrot.slane %v3696, 4
        %v3698 = vrot.slane %v3159, 5
        %v3699 = vsel %vm732, %v3697, %v3698
        %v3700 = vrot.slane %v3698, 4
        %v3701 = vrot.slane %v3160, 5
        %v3702 = vsel %vm732, %v3700, %v3701
        %v3703 = vrot.slane %v3161, 5
        %v3704 = vrot.slane %v3703, 4
        %v3705 = vrot.slane %v3162, 5
        %v3706 = vsel %vm732, %v3704, %v3705
        %v3707 = vrot.slane %v3705, 4
        %v3708 = vrot.slane %v3163, 5
        %v3709 = vsel %vm732, %v3707, %v3708
        %v3710 = vrot.slane %v3164, 5
        %v3711 = vrot.slane %v3710, 4
        %v3712 = vrot.slane %v3165, 5
        %v3713 = vsel %vm732, %v3711, %v3712
        %v3714 = vrot.slane %v3712, 4
        %v3715 = vrot.slane %v3166, 5
        %v3716 = vsel %vm732, %v3714, %v3715
        %v3718 = vshrl.u32 %v3167, 16
        %v3720 = vrot.slane %v3718, 4
        %v3721 = vshll.u32 %v3167, 16
        %v3723 = vrot.slane %v3721, 5
        %v3724 = vor.u32 %v3720, %v3723
        %v3725 = vrot.slane %v3724, 4
        %v3727 = vshll.u32 %v3168, 16
        %v3729 = vrot.slane %v3727, 5
        %v3730 = vsel %vm297, %v3725, %v3729
        %v3731 = vshrl.u32 %v3168, 16
        %v3733 = vrot.slane %v3731, 4
        %v3734 = vor.u32 %v3733, %v3729
        %v3735 = vrot.slane %v3734, 4
        %v3737 = vshll.u32 %v3169, 16
        %v3739 = vrot.slane %v3737, 5
        %v3740 = vsel %vm297, %v3735, %v3739
        %v3744 = vrot.slane %v3167, 5
        %v3745 = vrot.slane %v3744, 4
        %v3746 = vrot.slane %v3168, 5
        %v3747 = vsel %vm732, %v3745, %v3746
        %v3748 = vrot.slane %v3746, 4
        %v3749 = vrot.slane %v3169, 5
        %v3750 = vsel %vm732, %v3748, %v3749
        %v3752 = vshrl.u32 %v3170, 16
        %v3754 = vrot.slane %v3752, 4
        %v3755 = vshll.u32 %v3170, 16
        %v3757 = vrot.slane %v3755, 5
        %v3758 = vor.u32 %v3754, %v3757
        %v3759 = vrot.slane %v3758, 4
        %v3761 = vshll.u32 %v3171, 16
        %v3763 = vrot.slane %v3761, 5
        %v3764 = vsel %vm297, %v3759, %v3763
        %v3765 = vshrl.u32 %v3171, 16
        %v3767 = vrot.slane %v3765, 4
        %v3768 = vor.u32 %v3767, %v3763
        %v3769 = vrot.slane %v3768, 4
        %v3771 = vshll.u32 %v3172, 16
        %v3773 = vrot.slane %v3771, 5
        %v3774 = vsel %vm297, %v3769, %v3773
        %v3778 = vrot.slane %v3170, 5
        %v3779 = vrot.slane %v3778, 4
        %v3780 = vrot.slane %v3171, 5
        %v3781 = vsel %vm732, %v3779, %v3780
        %v3782 = vrot.slane %v3780, 4
        %v3783 = vrot.slane %v3172, 5
        %v3784 = vsel %vm732, %v3782, %v3783
        %v3785 = vunpack.c.l.b16 %v3119
        %v3786 = vunpack.c.l.b16 %v3120
        %v3787 = vunpack.c.l.b16 %v3122
        %v3788 = vunpack.c.l.b16 %v3123
        %v3789 = vunpack.c.l.b16 %v3125
        %v3790 = vunpack.c.l.b16 %v3126
        %v3791 = vunpack.c.l.b16 %v3128
        %v3792 = vunpack.c.l.b16 %v3129
        %v3793 = vunpack.c.l.b16 %v3131
        %v3794 = vunpack.c.l.b16 %v3132
        %v3795 = vunpack.c.l.b16 %v3134
        %v3796 = vunpack.c.l.b16 %v3135
        %v3797 = vunpack.c.l.b16 %v3137
        %v3798 = vunpack.c.l.b16 %v3138
        %v3799 = vunpack.c.l.b16 %v3140
        %v3800 = vunpack.c.l.b16 %v3141
        %v3801 = vunpack.c.l.b16 %v3143
        %v3802 = vunpack.c.l.b16 %v3144
        %v3803 = vunpack.c.l.b16 %v3146
        %v3804 = vunpack.c.l.b16 %v3147
        %v3805 = vunpack.c.l.b16 %v3149
        %v3806 = vunpack.c.l.b16 %v3150
        %v3807 = vunpack.c.l.b16 %v3152
        %v3808 = vunpack.c.l.b16 %v3153
        %v3809 = vunpack.c.l.b16 %v3155
        %v3810 = vunpack.c.l.b16 %v3156
        %v3811 = vunpack.c.l.b16 %v3158
        %v3812 = vunpack.c.l.b16 %v3159
        %v3813 = vunpack.c.l.b16 %v3161
        %v3814 = vunpack.c.l.b16 %v3162
        %v3815 = vunpack.c.l.b16 %v3164
        %v3816 = vunpack.c.l.b16 %v3165
        %v3817 = vpack.c.b16 %v3786, %v3785
        %v3818 = vpack.c.b16 %v3788, %v3787
        %v3819 = vpack.c.b16 %v3790, %v3789
        %v3820 = vpack.c.b16 %v3792, %v3791
        %v3821 = vpack.c.b16 %v3794, %v3793
        %v3822 = vpack.c.b16 %v3796, %v3795
        %v3823 = vpack.c.b16 %v3798, %v3797
        %v3824 = vpack.c.b16 %v3800, %v3799
        %v3825 = vpack.c.b16 %v3802, %v3801
        %v3826 = vpack.c.b16 %v3804, %v3803
        %v3827 = vpack.c.b16 %v3806, %v3805
        %v3828 = vpack.c.b16 %v3808, %v3807
        %v3829 = vpack.c.b16 %v3810, %v3809
        %v3830 = vpack.c.b16 %v3812, %v3811
        %v3831 = vpack.c.b16 %v3814, %v3813
        %v3832 = vpack.c.b16 %v3816, %v3815
        %v3849 = vunpack.c.l.b16 %v3186
        %v3850 = vunpack.c.l.b16 %v3196
        %v3851 = vunpack.c.l.b16 %v3210
        %v3852 = vunpack.c.l.b16 %v3220
        %v3853 = vunpack.c.l.b16 %v3234
        %v3854 = vunpack.c.l.b16 %v3244
        %v3855 = vunpack.c.l.b16 %v3258
        %v3856 = vunpack.c.l.b16 %v3268
        %v3857 = vunpack.c.l.b16 %v3282
        %v3858 = vunpack.c.l.b16 %v3292
        %v3859 = vunpack.c.l.b16 %v3306
        %v3860 = vunpack.c.l.b16 %v3316
        %v3861 = vunpack.c.l.b16 %v3330
        %v3862 = vunpack.c.l.b16 %v3340
        %v3863 = vunpack.c.l.b16 %v3354
        %v3864 = vunpack.c.l.b16 %v3364
        %v3865 = vunpack.c.l.b16 %v3378
        %v3866 = vunpack.c.l.b16 %v3388
        %v3867 = vunpack.c.l.b16 %v3402
        %v3868 = vunpack.c.l.b16 %v3412
        %v3869 = vunpack.c.l.b16 %v3426
        %v3870 = vunpack.c.l.b16 %v3436
        %v3871 = vunpack.c.l.b16 %v3450
        %v3872 = vunpack.c.l.b16 %v3460
        %v3873 = vunpack.c.l.b16 %v3474
        %v3874 = vunpack.c.l.b16 %v3484
        %v3875 = vunpack.c.l.b16 %v3498
        %v3876 = vunpack.c.l.b16 %v3508
        %v3877 = vunpack.c.l.b16 %v3522
        %v3878 = vunpack.c.l.b16 %v3532
        %v3879 = vunpack.c.l.b16 %v3546
        %v3880 = vunpack.c.l.b16 %v3556
        %v3881 = vpack.c.b16 %v3850, %v3849
        %v3882 = vpack.c.b16 %v3852, %v3851
        %v3883 = vpack.c.b16 %v3854, %v3853
        %v3884 = vpack.c.b16 %v3856, %v3855
        %v3885 = vpack.c.b16 %v3858, %v3857
        %v3886 = vpack.c.b16 %v3860, %v3859
        %v3887 = vpack.c.b16 %v3862, %v3861
        %v3888 = vpack.c.b16 %v3864, %v3863
        %v3889 = vpack.c.b16 %v3866, %v3865
        %v3890 = vpack.c.b16 %v3868, %v3867
        %v3891 = vpack.c.b16 %v3870, %v3869
        %v3892 = vpack.c.b16 %v3872, %v3871
        %v3893 = vpack.c.b16 %v3874, %v3873
        %v3894 = vpack.c.b16 %v3876, %v3875
        %v3895 = vpack.c.b16 %v3878, %v3877
        %v3896 = vpack.c.b16 %v3880, %v3879
        %v3913 = vunpack.c.l.b16 %v3608
        %v3914 = vunpack.c.l.b16 %v3611
        %v3915 = vunpack.c.l.b16 %v3615
        %v3916 = vunpack.c.l.b16 %v3618
        %v3917 = vunpack.c.l.b16 %v3622
        %v3918 = vunpack.c.l.b16 %v3625
        %v3919 = vunpack.c.l.b16 %v3629
        %v3920 = vunpack.c.l.b16 %v3632
        %v3921 = vunpack.c.l.b16 %v3636
        %v3922 = vunpack.c.l.b16 %v3639
        %v3923 = vunpack.c.l.b16 %v3643
        %v3924 = vunpack.c.l.b16 %v3646
        %v3925 = vunpack.c.l.b16 %v3650
        %v3926 = vunpack.c.l.b16 %v3653
        %v3927 = vunpack.c.l.b16 %v3657
        %v3928 = vunpack.c.l.b16 %v3660
        %v3929 = vunpack.c.l.b16 %v3664
        %v3930 = vunpack.c.l.b16 %v3667
        %v3931 = vunpack.c.l.b16 %v3671
        %v3932 = vunpack.c.l.b16 %v3674
        %v3933 = vunpack.c.l.b16 %v3678
        %v3934 = vunpack.c.l.b16 %v3681
        %v3935 = vunpack.c.l.b16 %v3685
        %v3936 = vunpack.c.l.b16 %v3688
        %v3937 = vunpack.c.l.b16 %v3692
        %v3938 = vunpack.c.l.b16 %v3695
        %v3939 = vunpack.c.l.b16 %v3699
        %v3940 = vunpack.c.l.b16 %v3702
        %v3941 = vunpack.c.l.b16 %v3706
        %v3942 = vunpack.c.l.b16 %v3709
        %v3943 = vunpack.c.l.b16 %v3713
        %v3944 = vunpack.c.l.b16 %v3716
        %v3945 = vpack.c.b16 %v3914, %v3913
        %v3946 = vpack.c.b16 %v3916, %v3915
        %v3947 = vpack.c.b16 %v3918, %v3917
        %v3948 = vpack.c.b16 %v3920, %v3919
        %v3949 = vpack.c.b16 %v3922, %v3921
        %v3950 = vpack.c.b16 %v3924, %v3923
        %v3951 = vpack.c.b16 %v3926, %v3925
        %v3952 = vpack.c.b16 %v3928, %v3927
        %v3953 = vpack.c.b16 %v3930, %v3929
        %v3954 = vpack.c.b16 %v3932, %v3931
        %v3955 = vpack.c.b16 %v3934, %v3933
        %v3956 = vpack.c.b16 %v3936, %v3935
        %v3957 = vpack.c.b16 %v3938, %v3937
        %v3958 = vpack.c.b16 %v3940, %v3939
        %v3959 = vpack.c.b16 %v3942, %v3941
        %v3960 = vpack.c.b16 %v3944, %v3943
        %v3977 = vunpack.c.l.b16 %v3167
        %v3978 = vunpack.c.l.b16 %v3168
        %v3979 = vpack.c.b16 %v3978, %v3977
        %v3981 = vunpack.c.l.b16 %v3730
        %v3982 = vunpack.c.l.b16 %v3740
        %v3983 = vpack.c.b16 %v3982, %v3981
        %v3985 = vunpack.c.l.b16 %v3747
        %v3986 = vunpack.c.l.b16 %v3750
        %v3987 = vpack.c.b16 %v3986, %v3985
        %v3989 = vunpack.c.l.b16 %v3170
        %v3990 = vunpack.c.l.b16 %v3171
        %v3991 = vpack.c.b16 %v3990, %v3989
        %v3993 = vunpack.c.l.b16 %v3764
        %v3994 = vunpack.c.l.b16 %v3774
        %v3995 = vpack.c.b16 %v3994, %v3993
        %v3997 = vunpack.c.l.b16 %v3781
        %v3998 = vunpack.c.l.b16 %v3784
        %v3999 = vpack.c.b16 %v3998, %v3997
        %v4001 = vld [vmem:[#allocation3] sm:$0xf]
        %v4002 = vld [vmem:[#allocation3 + $0x4] sm:$0xf]
        %v4003 = vld [vmem:[#allocation3 + $0x8] sm:$0xf]
        %v4004 = vld [vmem:[#allocation3 + $0xc] sm:$0xf]
        %v4005 = vld [vmem:[#allocation3 + $0x10] sm:$0xf]
        %v4006 = vld [vmem:[#allocation3 + $0x14] sm:$0xf]
        %v4007 = vld [vmem:[#allocation3 + $0x18] sm:$0xf]
        %v4008 = vld [vmem:[#allocation3 + $0x1c] sm:$0xf]
        %v4009 = vld [vmem:[#allocation3 + $0x20] sm:$0xf]
        %v4010 = vld [vmem:[#allocation3 + $0x24] sm:$0xf]
        %v4011 = vld [vmem:[#allocation3 + $0x28] sm:$0xf]
        %v4012 = vld [vmem:[#allocation3 + $0x2c] sm:$0xf]
        %v4013 = vld [vmem:[#allocation3 + $0x30] sm:$0xf]
        %v4014 = vld [vmem:[#allocation3 + $0x34] sm:$0xf]
        %v4015 = vld [vmem:[#allocation3 + $0x38] sm:$0xf]
        %v4016 = vld [vmem:[#allocation3 + $0x3c] sm:$0xf]
        %v4017 = vld [vmem:[#allocation3 + $0x40] sm:$0xf]
        %v4018 = vld [vmem:[#allocation3 + $0x44] sm:$0xf]
        %v4019 = vld [vmem:[#allocation3 + $0x48] sm:$0xf]
        %v4020 = vld [vmem:[#allocation3 + $0x4c] sm:$0xf]
        %v4021 = vld [vmem:[#allocation3 + $0x50] sm:$0xf]
        %v4022 = vld [vmem:[#allocation3 + $0x54] sm:$0xf]
        %v4023 = vld [vmem:[#allocation3 + $0x58] sm:$0xf]
        %v4024 = vld [vmem:[#allocation3 + $0x5c] sm:$0xf]
        %v4025 = vld [vmem:[#allocation3 + $0x60] sm:$0xf]
        %v4026 = vld [vmem:[#allocation3 + $0x64] sm:$0xf]
        %v4027 = vld [vmem:[#allocation3 + $0x68] sm:$0xf]
        %v4028 = vld [vmem:[#allocation3 + $0x6c] sm:$0xf]
        %v4029 = vld [vmem:[#allocation3 + $0x70] sm:$0xf]
        %v4030 = vld [vmem:[#allocation3 + $0x74] sm:$0xf]
        %v4031 = vld [vmem:[#allocation3 + $0x78] sm:$0xf]
        %v4032 = vld [vmem:[#allocation3 + $0x7c] sm:$0xf]
        %v4033 = vld [vmem:[#allocation3 + $0x80] sm:$0xf]
        %v4034 = vld [vmem:[#allocation3 + $0x84] sm:$0xf]
        %v4035 = vld [vmem:[#allocation3 + $0x88] sm:$0xf]
        %v4036 = vld [vmem:[#allocation3 + $0x8c] sm:$0xf]
        %v4037 = vld [vmem:[#allocation3 + $0x90] sm:$0xf]
        %v4038 = vld [vmem:[#allocation3 + $0x94] sm:$0xf]
        %v4039 = vld [vmem:[#allocation3 + $0x98] sm:$0xf]
        %v4040 = vld [vmem:[#allocation3 + $0x9c] sm:$0xf]
        %v4041 = vld [vmem:[#allocation3 + $0xa0] sm:$0xf]
        %v4042 = vld [vmem:[#allocation3 + $0xa4] sm:$0xf]
        %v4043 = vld [vmem:[#allocation3 + $0xa8] sm:$0xf]
        %v4044 = vld [vmem:[#allocation3 + $0xac] sm:$0xf]
        %v4045 = vld [vmem:[#allocation3 + $0xb0] sm:$0xf]
        %v4046 = vld [vmem:[#allocation3 + $0xb4] sm:$0xf]
        %v4047 = vld [vmem:[#allocation3 + $0xb8] sm:$0xf]
        %v4048 = vld [vmem:[#allocation3 + $0xbc] sm:$0xf]
        %v4049 = vld [vmem:[#allocation3 + $0xc0] sm:$0xf]
        %v4050 = vld [vmem:[#allocation3 + $0xc4] sm:$0xf]
        %v4051 = vld [vmem:[#allocation3 + $0xc8] sm:$0xf]
        %v4052 = vld [vmem:[#allocation3 + $0xcc] sm:$0xf]
        %v4053 = vld [vmem:[#allocation3 + $0xd0] sm:$0xf]
        %v4054 = vld [vmem:[#allocation3 + $0xd4] sm:$0xf]
        %v4055 = vld [vmem:[#allocation3 + $0xd8] sm:$0xf]
        %v4056 = vld [vmem:[#allocation3 + $0xdc] sm:$0xf]
        %v4057 = vld [vmem:[#allocation3 + $0xe0] sm:$0xf]
        %v4058 = vld [vmem:[#allocation3 + $0xe4] sm:$0xf]
        %v4059 = vld [vmem:[#allocation3 + $0xe8] sm:$0xf]
        %v4060 = vld [vmem:[#allocation3 + $0xec] sm:$0xf]
        %v4061 = vld [vmem:[#allocation3 + $0xf0] sm:$0xf]
        %v4062 = vld [vmem:[#allocation3 + $0xf4] sm:$0xf]
        %v4063 = vld [vmem:[#allocation3 + $0xf8] sm:$0xf]
        %v4064 = vld [vmem:[#allocation3 + $0xfc] sm:$0xf]
        %v4065 = vld [vmem:[#allocation3 + $0x100] sm:$0xf]
        %v4066 = vld [vmem:[#allocation3 + $0x104] sm:$0xf]
        %v4067 = vld [vmem:[#allocation3 + $0x108] sm:$0xf]
        %v4068 = vld [vmem:[#allocation3 + $0x10c] sm:$0xf]
        %v4069 = vld [vmem:[#allocation3 + $0x110] sm:$0xf]
        %v4070 = vld [vmem:[#allocation3 + $0x114] sm:$0xf]
        %v4071 = vld [vmem:[#allocation3 + $0x118] sm:$0xf]
        %v4072 = vld [vmem:[#allocation3 + $0x11c] sm:$0xf]
        %v4073 = vld [vmem:[#allocation3 + $0x120] sm:$0xf]
        %v4074 = vld [vmem:[#allocation3 + $0x124] sm:$0xf]
        %v4075 = vld [vmem:[#allocation3 + $0x128] sm:$0xf]
        %v4076 = vld [vmem:[#allocation3 + $0x12c] sm:$0xf]
        %v4077 = vld [vmem:[#allocation3 + $0x130] sm:$0xf]
        %v4078 = vld [vmem:[#allocation3 + $0x134] sm:$0xf]
        %v4079 = vld [vmem:[#allocation3 + $0x138] sm:$0xf]
        %v4080 = vld [vmem:[#allocation3 + $0x13c] sm:$0xf]
        %v4081 = vld [vmem:[#allocation3 + $0x140] sm:$0xf]
        %v4082 = vld [vmem:[#allocation3 + $0x144] sm:$0xf]
        %v4083 = vld [vmem:[#allocation3 + $0x148] sm:$0xf]
        %v4084 = vld [vmem:[#allocation3 + $0x14c] sm:$0xf]
        %v4085 = vld [vmem:[#allocation3 + $0x150] sm:$0xf]
        %v4086 = vld [vmem:[#allocation3 + $0x154] sm:$0xf]
        %v4087 = vld [vmem:[#allocation3 + $0x158] sm:$0xf]
        %v4088 = vld [vmem:[#allocation3 + $0x15c] sm:$0xf]
        %v4089 = vld [vmem:[#allocation3 + $0x160] sm:$0xf]
        %v4090 = vld [vmem:[#allocation3 + $0x164] sm:$0xf]
        %v4091 = vld [vmem:[#allocation3 + $0x168] sm:$0xf]
        %v4092 = vld [vmem:[#allocation3 + $0x16c] sm:$0xf]
        %v4093 = vld [vmem:[#allocation3 + $0x170] sm:$0xf]
        %v4094 = vld [vmem:[#allocation3 + $0x174] sm:$0xf]
        %v4095 = vld [vmem:[#allocation3 + $0x178] sm:$0xf]
        %v4096 = vld [vmem:[#allocation3 + $0x17c] sm:$0xf]
        %v4097 = vld [vmem:[#allocation3 + $0x180] sm:$0xf]
        %v4098 = vld [vmem:[#allocation3 + $0x184] sm:$0xf]
        %v4099 = vld [vmem:[#allocation3 + $0x188] sm:$0xf]
        %v4100 = vld [vmem:[#allocation3 + $0x18c] sm:$0xf]
        %v4101 = vld [vmem:[#allocation3 + $0x190] sm:$0xf]
        %v4102 = vld [vmem:[#allocation3 + $0x194] sm:$0xf]
        %v4103 = vld [vmem:[#allocation3 + $0x198] sm:$0xf]
        %v4104 = vld [vmem:[#allocation3 + $0x19c] sm:$0xf]
        %v4105 = vld [vmem:[#allocation3 + $0x1a0] sm:$0xf]
        %v4106 = vld [vmem:[#allocation3 + $0x1a4] sm:$0xf]
        %v4107 = vld [vmem:[#allocation3 + $0x1a8] sm:$0xf]
        %v4108 = vld [vmem:[#allocation3 + $0x1ac] sm:$0xf]
        %v4109 = vld [vmem:[#allocation3 + $0x1b0] sm:$0xf]
        %v4110 = vld [vmem:[#allocation3 + $0x1b4] sm:$0xf]
        %v4111 = vld [vmem:[#allocation3 + $0x1b8] sm:$0xf]
        %v4112 = vld [vmem:[#allocation3 + $0x1bc] sm:$0xf]
        %v4113 = vld [vmem:[#allocation3 + $0x1c0] sm:$0xf]
        %v4114 = vld [vmem:[#allocation3 + $0x1c4] sm:$0xf]
        %v4115 = vld [vmem:[#allocation3 + $0x1c8] sm:$0xf]
        %v4116 = vld [vmem:[#allocation3 + $0x1cc] sm:$0xf]
        %v4117 = vld [vmem:[#allocation3 + $0x1d0] sm:$0xf]
        %v4118 = vld [vmem:[#allocation3 + $0x1d4] sm:$0xf]
        %v4119 = vld [vmem:[#allocation3 + $0x1d8] sm:$0xf]
        %v4120 = vld [vmem:[#allocation3 + $0x1dc] sm:$0xf]
        %v4121 = vld [vmem:[#allocation3 + $0x1e0] sm:$0xf]
        %v4122 = vld [vmem:[#allocation3 + $0x1e4] sm:$0xf]
        %v4123 = vld [vmem:[#allocation3 + $0x1e8] sm:$0xf]
        %v4124 = vld [vmem:[#allocation3 + $0x1ec] sm:$0xf]
        %v4125 = vld [vmem:[#allocation3 + $0x1f0] sm:$0xf]
        %v4126 = vld [vmem:[#allocation3 + $0x1f4] sm:$0xf]
        %v4127 = vld [vmem:[#allocation3 + $0x1f8] sm:$0xf]
        %v4128 = vld [vmem:[#allocation3 + $0x1fc] sm:$0xf]
        %v4129 = vld [vmem:[#allocation3 + $0x200] sm:$0xf]
        %v4130 = vld [vmem:[#allocation3 + $0x204] sm:$0xf]
        %v4131 = vld [vmem:[#allocation3 + $0x208] sm:$0xf]
        %v4132 = vld [vmem:[#allocation3 + $0x20c] sm:$0xf]
        %v4133 = vld [vmem:[#allocation3 + $0x210] sm:$0xf]
        %v4134 = vld [vmem:[#allocation3 + $0x214] sm:$0xf]
        %v4135 = vld [vmem:[#allocation3 + $0x218] sm:$0xf]
        %v4136 = vld [vmem:[#allocation3 + $0x21c] sm:$0xf]
        %v4137 = vld [vmem:[#allocation3 + $0x220] sm:$0xf]
        %v4138 = vld [vmem:[#allocation3 + $0x224] sm:$0xf]
        %v4139 = vld [vmem:[#allocation3 + $0x228] sm:$0xf]
        %v4140 = vld [vmem:[#allocation3 + $0x22c] sm:$0xf]
        %v4141 = vld [vmem:[#allocation3 + $0x230] sm:$0xf]
        %v4142 = vld [vmem:[#allocation3 + $0x234] sm:$0xf]
        %v4143 = vld [vmem:[#allocation3 + $0x238] sm:$0xf]
        %v4144 = vld [vmem:[#allocation3 + $0x23c] sm:$0xf]
        %v4145 = vld [vmem:[%s4] sm:$0x1]
        %v4147 = vperm.slane %v4145, 0
        %v4293 = vunpack.c.l.b16 %v4001
        %v4294 = vunpack.c.l.b16 %v4002
        %v4295 = vunpack.c.l.b16 %v4003
        %v4296 = vunpack.c.l.b16 %v4004
        %v4297 = vunpack.c.l.b16 %v4005
        %v4298 = vunpack.c.l.b16 %v4006
        %v4299 = vunpack.c.l.b16 %v4007
        %v4300 = vunpack.c.l.b16 %v4008
        %v4301 = vunpack.c.l.b16 %v4009
        %v4302 = vunpack.c.l.b16 %v4010
        %v4303 = vunpack.c.l.b16 %v4011
        %v4304 = vunpack.c.l.b16 %v4012
        %v4305 = vunpack.c.l.b16 %v4013
        %v4306 = vunpack.c.l.b16 %v4014
        %v4307 = vunpack.c.l.b16 %v4015
        %v4308 = vunpack.c.l.b16 %v4016
        %v4309 = vunpack.c.l.b16 %v4017
        %v4310 = vunpack.c.l.b16 %v4018
        %v4311 = vunpack.c.l.b16 %v4019
        %v4312 = vunpack.c.l.b16 %v4020
        %v4313 = vunpack.c.l.b16 %v4021
        %v4314 = vunpack.c.l.b16 %v4022
        %v4315 = vunpack.c.l.b16 %v4023
        %v4316 = vunpack.c.l.b16 %v4024
        %v4317 = vunpack.c.l.b16 %v4025
        %v4318 = vunpack.c.l.b16 %v4026
        %v4319 = vunpack.c.l.b16 %v4027
        %v4320 = vunpack.c.l.b16 %v4028
        %v4321 = vunpack.c.l.b16 %v4029
        %v4322 = vunpack.c.l.b16 %v4030
        %v4323 = vunpack.c.l.b16 %v4031
        %v4324 = vunpack.c.l.b16 %v4032
        %v4325 = vunpack.c.l.b16 %v4033
        %v4326 = vunpack.c.l.b16 %v4034
        %v4327 = vunpack.c.l.b16 %v4035
        %v4328 = vunpack.c.l.b16 %v4036
        %v4329 = vunpack.c.l.b16 %v4037
        %v4330 = vunpack.c.l.b16 %v4038
        %v4331 = vunpack.c.l.b16 %v4039
        %v4332 = vunpack.c.l.b16 %v4040
        %v4333 = vunpack.c.l.b16 %v4041
        %v4334 = vunpack.c.l.b16 %v4042
        %v4335 = vunpack.c.l.b16 %v4043
        %v4336 = vunpack.c.l.b16 %v4044
        %v4337 = vunpack.c.l.b16 %v4045
        %v4338 = vunpack.c.l.b16 %v4046
        %v4339 = vunpack.c.l.b16 %v4047
        %v4340 = vunpack.c.l.b16 %v4048
        %v4341 = vunpack.c.l.b16 %v4049
        %v4342 = vunpack.c.l.b16 %v4050
        %v4343 = vunpack.c.l.b16 %v4051
        %v4344 = vunpack.c.l.b16 %v4052
        %v4345 = vunpack.c.l.b16 %v4053
        %v4346 = vunpack.c.l.b16 %v4054
        %v4347 = vunpack.c.l.b16 %v4055
        %v4348 = vunpack.c.l.b16 %v4056
        %v4349 = vunpack.c.l.b16 %v4057
        %v4350 = vunpack.c.l.b16 %v4058
        %v4351 = vunpack.c.l.b16 %v4059
        %v4352 = vunpack.c.l.b16 %v4060
        %v4353 = vunpack.c.l.b16 %v4061
        %v4354 = vunpack.c.l.b16 %v4062
        %v4355 = vunpack.c.l.b16 %v4063
        %v4356 = vunpack.c.l.b16 %v4064
        %v4357 = vunpack.c.l.b16 %v4065
        %v4358 = vunpack.c.l.b16 %v4066
        %v4359 = vunpack.c.l.b16 %v4067
        %v4360 = vunpack.c.l.b16 %v4068
        %v4361 = vunpack.c.l.b16 %v4069
        %v4362 = vunpack.c.l.b16 %v4070
        %v4363 = vunpack.c.l.b16 %v4071
        %v4364 = vunpack.c.l.b16 %v4072
        %v4365 = vunpack.c.l.b16 %v4073
        %v4366 = vunpack.c.l.b16 %v4074
        %v4367 = vunpack.c.l.b16 %v4075
        %v4368 = vunpack.c.l.b16 %v4076
        %v4369 = vunpack.c.l.b16 %v4077
        %v4370 = vunpack.c.l.b16 %v4078
        %v4371 = vunpack.c.l.b16 %v4079
        %v4372 = vunpack.c.l.b16 %v4080
        %v4373 = vunpack.c.l.b16 %v4081
        %v4374 = vunpack.c.l.b16 %v4082
        %v4375 = vunpack.c.l.b16 %v4083
        %v4376 = vunpack.c.l.b16 %v4084
        %v4377 = vunpack.c.l.b16 %v4085
        %v4378 = vunpack.c.l.b16 %v4086
        %v4379 = vunpack.c.l.b16 %v4087
        %v4380 = vunpack.c.l.b16 %v4088
        %v4381 = vunpack.c.l.b16 %v4089
        %v4382 = vunpack.c.l.b16 %v4090
        %v4383 = vunpack.c.l.b16 %v4091
        %v4384 = vunpack.c.l.b16 %v4092
        %v4385 = vunpack.c.l.b16 %v4093
        %v4386 = vunpack.c.l.b16 %v4094
        %v4387 = vunpack.c.l.b16 %v4095
        %v4388 = vunpack.c.l.b16 %v4096
        %v4389 = vunpack.c.l.b16 %v4097
        %v4390 = vunpack.c.l.b16 %v4098
        %v4391 = vunpack.c.l.b16 %v4099
        %v4392 = vunpack.c.l.b16 %v4100
        %v4393 = vunpack.c.l.b16 %v4101
        %v4394 = vunpack.c.l.b16 %v4102
        %v4395 = vunpack.c.l.b16 %v4103
        %v4396 = vunpack.c.l.b16 %v4104
        %v4397 = vunpack.c.l.b16 %v4105
        %v4398 = vunpack.c.l.b16 %v4106
        %v4399 = vunpack.c.l.b16 %v4107
        %v4400 = vunpack.c.l.b16 %v4108
        %v4401 = vunpack.c.l.b16 %v4109
        %v4402 = vunpack.c.l.b16 %v4110
        %v4403 = vunpack.c.l.b16 %v4111
        %v4404 = vunpack.c.l.b16 %v4112
        %v4405 = vunpack.c.l.b16 %v4113
        %v4406 = vunpack.c.l.b16 %v4114
        %v4407 = vunpack.c.l.b16 %v4115
        %v4408 = vunpack.c.l.b16 %v4116
        %v4409 = vunpack.c.l.b16 %v4117
        %v4410 = vunpack.c.l.b16 %v4118
        %v4411 = vunpack.c.l.b16 %v4119
        %v4412 = vunpack.c.l.b16 %v4120
        %v4413 = vunpack.c.l.b16 %v4121
        %v4414 = vunpack.c.l.b16 %v4122
        %v4415 = vunpack.c.l.b16 %v4123
        %v4416 = vunpack.c.l.b16 %v4124
        %v4417 = vunpack.c.l.b16 %v4125
        %v4418 = vunpack.c.l.b16 %v4126
        %v4419 = vunpack.c.l.b16 %v4127
        %v4420 = vunpack.c.l.b16 %v4128
        %v4421 = vunpack.c.l.b16 %v4129
        %v4422 = vunpack.c.l.b16 %v4130
        %v4423 = vunpack.c.l.b16 %v4131
        %v4424 = vunpack.c.l.b16 %v4132
        %v4425 = vunpack.c.l.b16 %v4133
        %v4426 = vunpack.c.l.b16 %v4134
        %v4427 = vunpack.c.l.b16 %v4135
        %v4428 = vunpack.c.l.b16 %v4136
        %v4429 = vunpack.c.l.b16 %v4137
        %v4430 = vunpack.c.l.b16 %v4138
        %v4431 = vunpack.c.l.b16 %v4139
        %v4432 = vunpack.c.l.b16 %v4140
        %v4433 = vunpack.c.l.b16 %v4141
        %v4434 = vunpack.c.l.b16 %v4142
        %v4435 = vunpack.c.l.b16 %v4143
        %v4436 = vunpack.c.l.b16 %v4144
        %v4437 = vpack.c.b16 %v4294, %v4293
        %v4438 = vpack.c.b16 %v4296, %v4295
        %v4439 = vpack.c.b16 %v4298, %v4297
        %v4440 = vpack.c.b16 %v4300, %v4299
        %v4441 = vpack.c.b16 %v4302, %v4301
        %v4442 = vpack.c.b16 %v4304, %v4303
        %v4443 = vpack.c.b16 %v4306, %v4305
        %v4444 = vpack.c.b16 %v4308, %v4307
        %v4445 = vpack.c.b16 %v4310, %v4309
        %v4446 = vpack.c.b16 %v4312, %v4311
        %v4447 = vpack.c.b16 %v4314, %v4313
        %v4448 = vpack.c.b16 %v4316, %v4315
        %v4449 = vpack.c.b16 %v4318, %v4317
        %v4450 = vpack.c.b16 %v4320, %v4319
        %v4451 = vpack.c.b16 %v4322, %v4321
        %v4452 = vpack.c.b16 %v4324, %v4323
        %v4453 = vpack.c.b16 %v4326, %v4325
        %v4454 = vpack.c.b16 %v4328, %v4327
        %v4455 = vpack.c.b16 %v4330, %v4329
        %v4456 = vpack.c.b16 %v4332, %v4331
        %v4457 = vpack.c.b16 %v4334, %v4333
        %v4458 = vpack.c.b16 %v4336, %v4335
        %v4459 = vpack.c.b16 %v4338, %v4337
        %v4460 = vpack.c.b16 %v4340, %v4339
        %v4461 = vpack.c.b16 %v4342, %v4341
        %v4462 = vpack.c.b16 %v4344, %v4343
        %v4463 = vpack.c.b16 %v4346, %v4345
        %v4464 = vpack.c.b16 %v4348, %v4347
        %v4465 = vpack.c.b16 %v4350, %v4349
        %v4466 = vpack.c.b16 %v4352, %v4351
        %v4467 = vpack.c.b16 %v4354, %v4353
        %v4468 = vpack.c.b16 %v4356, %v4355
        %v4469 = vpack.c.b16 %v4358, %v4357
        %v4470 = vpack.c.b16 %v4360, %v4359
        %v4471 = vpack.c.b16 %v4362, %v4361
        %v4472 = vpack.c.b16 %v4364, %v4363
        %v4473 = vpack.c.b16 %v4366, %v4365
        %v4474 = vpack.c.b16 %v4368, %v4367
        %v4475 = vpack.c.b16 %v4370, %v4369
        %v4476 = vpack.c.b16 %v4372, %v4371
        %v4477 = vpack.c.b16 %v4374, %v4373
        %v4478 = vpack.c.b16 %v4376, %v4375
        %v4479 = vpack.c.b16 %v4378, %v4377
        %v4480 = vpack.c.b16 %v4380, %v4379
        %v4481 = vpack.c.b16 %v4382, %v4381
        %v4482 = vpack.c.b16 %v4384, %v4383
        %v4483 = vpack.c.b16 %v4386, %v4385
        %v4484 = vpack.c.b16 %v4388, %v4387
        %v4485 = vpack.c.b16 %v4390, %v4389
        %v4486 = vpack.c.b16 %v4392, %v4391
        %v4487 = vpack.c.b16 %v4394, %v4393
        %v4488 = vpack.c.b16 %v4396, %v4395
        %v4489 = vpack.c.b16 %v4398, %v4397
        %v4490 = vpack.c.b16 %v4400, %v4399
        %v4491 = vpack.c.b16 %v4402, %v4401
        %v4492 = vpack.c.b16 %v4404, %v4403
        %v4493 = vpack.c.b16 %v4406, %v4405
        %v4494 = vpack.c.b16 %v4408, %v4407
        %v4495 = vpack.c.b16 %v4410, %v4409
        %v4496 = vpack.c.b16 %v4412, %v4411
        %v4497 = vpack.c.b16 %v4414, %v4413
        %v4498 = vpack.c.b16 %v4416, %v4415
        %v4499 = vpack.c.b16 %v4418, %v4417
        %v4500 = vpack.c.b16 %v4420, %v4419
        %v4501 = vpack.c.b16 %v4422, %v4421
        %v4502 = vpack.c.b16 %v4424, %v4423
        %v4503 = vpack.c.b16 %v4426, %v4425
        %v4504 = vpack.c.b16 %v4428, %v4427
        %v4505 = vpack.c.b16 %v4430, %v4429
        %v4506 = vpack.c.b16 %v4432, %v4431
        %v4507 = vpack.c.b16 %v4434, %v4433
        %v4508 = vpack.c.b16 %v4436, %v4435
        %4581 = vmatpush.bf16.msra.mxu0 %v4444
        %4582 = vmatpush.bf16.msra.mxu0 %v4443
        %4583 = vmatpush.bf16.msra.mxu0 %v4442
        %4584 = vmatpush.bf16.msra.mxu0 %v4441
        %4585 = vmatpush.bf16.msra.mxu0 %v4440
        %4586 = vmatpush.bf16.msra.mxu0 %v4439
        %4587 = vmatpush.bf16.msra.mxu0 %v4438
        %4588 = vmatpush.bf16.msra.mxu0 %v4437
        %4589 = vmatmul.bf16.gmra.mxu0 %v3817
        %v4590 = vpop.f32.mrf.mxu0
        %v4591 = vadd.f32 %v4147, %v4590
        %v4592 = vpop.f32.mrf.mxu0
        %v4593 = vadd.f32 %v4147, %v4592
        %4594 = vmatmul.bf16.gmra.mxu0 %v3818
        %v4595 = vpop.f32.mrf.mxu0
        %v4596 = vadd.f32 %v4147, %v4595
        %v4597 = vpop.f32.mrf.mxu0
        %v4598 = vadd.f32 %v4147, %v4597
        %4599 = vmatmul.bf16.gmra.mxu0 %v3819
        %v4600 = vpop.f32.mrf.mxu0
        %v4601 = vadd.f32 %v4147, %v4600
        %v4602 = vpop.f32.mrf.mxu0
        %v4603 = vadd.f32 %v4147, %v4602
        %4604 = vmatmul.bf16.gmra.mxu0 %v3820
        %v4605 = vpop.f32.mrf.mxu0
        %v4606 = vadd.f32 %v4147, %v4605
        %v4607 = vpop.f32.mrf.mxu0
        %v4608 = vadd.f32 %v4147, %v4607
        %4609 = vmatmul.bf16.gmra.mxu0 %v3821
        %v4610 = vpop.f32.mrf.mxu0
        %v4611 = vadd.f32 %v4147, %v4610
        %v4612 = vpop.f32.mrf.mxu0
        %v4613 = vadd.f32 %v4147, %v4612
        %4614 = vmatmul.bf16.gmra.mxu0 %v3822
        %v4615 = vpop.f32.mrf.mxu0
        %v4616 = vadd.f32 %v4147, %v4615
        %v4617 = vpop.f32.mrf.mxu0
        %v4618 = vadd.f32 %v4147, %v4617
        %4619 = vmatmul.bf16.gmra.mxu0 %v3823
        %v4620 = vpop.f32.mrf.mxu0
        %v4621 = vadd.f32 %v4147, %v4620
        %v4622 = vpop.f32.mrf.mxu0
        %v4623 = vadd.f32 %v4147, %v4622
        %4624 = vmatmul.bf16.gmra.mxu0 %v3824
        %v4625 = vpop.f32.mrf.mxu0
        %v4626 = vadd.f32 %v4147, %v4625
        %v4627 = vpop.f32.mrf.mxu0
        %v4628 = vadd.f32 %v4147, %v4627
        %4629 = vmatmul.bf16.gmra.mxu0 %v3825
        %v4630 = vpop.f32.mrf.mxu0
        %v4631 = vadd.f32 %v4147, %v4630
        %v4632 = vpop.f32.mrf.mxu0
        %v4633 = vadd.f32 %v4147, %v4632
        %4634 = vmatmul.bf16.gmra.mxu0 %v3826
        %v4635 = vpop.f32.mrf.mxu0
        %v4636 = vadd.f32 %v4147, %v4635
        %v4637 = vpop.f32.mrf.mxu0
        %v4638 = vadd.f32 %v4147, %v4637
        %4639 = vmatmul.bf16.gmra.mxu0 %v3827
        %v4640 = vpop.f32.mrf.mxu0
        %v4641 = vadd.f32 %v4147, %v4640
        %v4642 = vpop.f32.mrf.mxu0
        %v4643 = vadd.f32 %v4147, %v4642
        %4644 = vmatmul.bf16.gmra.mxu0 %v3828
        %v4645 = vpop.f32.mrf.mxu0
        %v4646 = vadd.f32 %v4147, %v4645
        %v4647 = vpop.f32.mrf.mxu0
        %v4648 = vadd.f32 %v4147, %v4647
        %4649 = vmatmul.bf16.gmra.mxu0 %v3829
        %v4650 = vpop.f32.mrf.mxu0
        %v4651 = vadd.f32 %v4147, %v4650
        %v4652 = vpop.f32.mrf.mxu0
        %v4653 = vadd.f32 %v4147, %v4652
        %4654 = vmatmul.bf16.gmra.mxu0 %v3830
        %v4655 = vpop.f32.mrf.mxu0
        %v4656 = vadd.f32 %v4147, %v4655
        %v4657 = vpop.f32.mrf.mxu0
        %v4658 = vadd.f32 %v4147, %v4657
        %4659 = vmatmul.bf16.gmra.mxu0 %v3831
        %v4660 = vpop.f32.mrf.mxu0
        %v4661 = vadd.f32 %v4147, %v4660
        %v4662 = vpop.f32.mrf.mxu0
        %v4663 = vadd.f32 %v4147, %v4662
        %4664 = vmatmul.bf16.gmra.mxu0 %v3832
        %v4665 = vpop.f32.mrf.mxu0
        %v4666 = vadd.f32 %v4147, %v4665
        %v4667 = vpop.f32.mrf.mxu0
        %v4668 = vadd.f32 %v4147, %v4667
        %4669 = vdwg.mxu0
        %4670 = vmatpush.bf16.msra.mxu0 %v4452
        %4671 = vmatpush.bf16.msra.mxu0 %v4451
        %4672 = vmatpush.bf16.msra.mxu0 %v4450
        %4673 = vmatpush.bf16.msra.mxu0 %v4449
        %4674 = vmatpush.bf16.msra.mxu0 %v4448
        %4675 = vmatpush.bf16.msra.mxu0 %v4447
        %4676 = vmatpush.bf16.msra.mxu0 %v4446
        %4677 = vmatpush.bf16.msra.mxu0 %v4445
        %4678 = vmatmul.bf16.gmra.mxu0 %v3881
        %v4679 = vpop.f32.mrf.mxu0
        %v4680 = vadd.f32 %v4591, %v4679
        %v4681 = vpop.f32.mrf.mxu0
        %v4682 = vadd.f32 %v4593, %v4681
        %4683 = vmatmul.bf16.gmra.mxu0 %v3882
        %v4684 = vpop.f32.mrf.mxu0
        %v4685 = vadd.f32 %v4596, %v4684
        %v4686 = vpop.f32.mrf.mxu0
        %v4687 = vadd.f32 %v4598, %v4686
        %4688 = vmatmul.bf16.gmra.mxu0 %v3883
        %v4689 = vpop.f32.mrf.mxu0
        %v4690 = vadd.f32 %v4601, %v4689
        %v4691 = vpop.f32.mrf.mxu0
        %v4692 = vadd.f32 %v4603, %v4691
        %4693 = vmatmul.bf16.gmra.mxu0 %v3884
        %v4694 = vpop.f32.mrf.mxu0
        %v4695 = vadd.f32 %v4606, %v4694
        %v4696 = vpop.f32.mrf.mxu0
        %v4697 = vadd.f32 %v4608, %v4696
        %4698 = vmatmul.bf16.gmra.mxu0 %v3885
        %v4699 = vpop.f32.mrf.mxu0
        %v4700 = vadd.f32 %v4611, %v4699
        %v4701 = vpop.f32.mrf.mxu0
        %v4702 = vadd.f32 %v4613, %v4701
        %4703 = vmatmul.bf16.gmra.mxu0 %v3886
        %v4704 = vpop.f32.mrf.mxu0
        %v4705 = vadd.f32 %v4616, %v4704
        %v4706 = vpop.f32.mrf.mxu0
        %v4707 = vadd.f32 %v4618, %v4706
        %4708 = vmatmul.bf16.gmra.mxu0 %v3887
        %v4709 = vpop.f32.mrf.mxu0
        %v4710 = vadd.f32 %v4621, %v4709
        %v4711 = vpop.f32.mrf.mxu0
        %v4712 = vadd.f32 %v4623, %v4711
        %4713 = vmatmul.bf16.gmra.mxu0 %v3888
        %v4714 = vpop.f32.mrf.mxu0
        %v4715 = vadd.f32 %v4626, %v4714
        %v4716 = vpop.f32.mrf.mxu0
        %v4717 = vadd.f32 %v4628, %v4716
        %4718 = vmatmul.bf16.gmra.mxu0 %v3889
        %v4719 = vpop.f32.mrf.mxu0
        %v4720 = vadd.f32 %v4631, %v4719
        %v4721 = vpop.f32.mrf.mxu0
        %v4722 = vadd.f32 %v4633, %v4721
        %4723 = vmatmul.bf16.gmra.mxu0 %v3890
        %v4724 = vpop.f32.mrf.mxu0
        %v4725 = vadd.f32 %v4636, %v4724
        %v4726 = vpop.f32.mrf.mxu0
        %v4727 = vadd.f32 %v4638, %v4726
        %4728 = vmatmul.bf16.gmra.mxu0 %v3891
        %v4729 = vpop.f32.mrf.mxu0
        %v4730 = vadd.f32 %v4641, %v4729
        %v4731 = vpop.f32.mrf.mxu0
        %v4732 = vadd.f32 %v4643, %v4731
        %4733 = vmatmul.bf16.gmra.mxu0 %v3892
        %v4734 = vpop.f32.mrf.mxu0
        %v4735 = vadd.f32 %v4646, %v4734
        %v4736 = vpop.f32.mrf.mxu0
        %v4737 = vadd.f32 %v4648, %v4736
        %4738 = vmatmul.bf16.gmra.mxu0 %v3893
        %v4739 = vpop.f32.mrf.mxu0
        %v4740 = vadd.f32 %v4651, %v4739
        %v4741 = vpop.f32.mrf.mxu0
        %v4742 = vadd.f32 %v4653, %v4741
        %4743 = vmatmul.bf16.gmra.mxu0 %v3894
        %v4744 = vpop.f32.mrf.mxu0
        %v4745 = vadd.f32 %v4656, %v4744
        %v4746 = vpop.f32.mrf.mxu0
        %v4747 = vadd.f32 %v4658, %v4746
        %4748 = vmatmul.bf16.gmra.mxu0 %v3895
        %v4749 = vpop.f32.mrf.mxu0
        %v4750 = vadd.f32 %v4661, %v4749
        %v4751 = vpop.f32.mrf.mxu0
        %v4752 = vadd.f32 %v4663, %v4751
        %4753 = vmatmul.bf16.gmra.mxu0 %v3896
        %v4754 = vpop.f32.mrf.mxu0
        %v4755 = vadd.f32 %v4666, %v4754
        %v4756 = vpop.f32.mrf.mxu0
        %v4757 = vadd.f32 %v4668, %v4756
        %4758 = vdwg.mxu0
        %4759 = vmatpush.bf16.msra.mxu0 %v4460
        %4760 = vmatpush.bf16.msra.mxu0 %v4459
        %4761 = vmatpush.bf16.msra.mxu0 %v4458
        %4762 = vmatpush.bf16.msra.mxu0 %v4457
        %4763 = vmatpush.bf16.msra.mxu0 %v4456
        %4764 = vmatpush.bf16.msra.mxu0 %v4455
        %4765 = vmatpush.bf16.msra.mxu0 %v4454
        %4766 = vmatpush.bf16.msra.mxu0 %v4453
        %4767 = vmatmul.bf16.gmra.mxu0 %v3945
        %v4768 = vpop.f32.mrf.mxu0
        %v4769 = vadd.f32 %v4680, %v4768
        %v4770 = vpop.f32.mrf.mxu0
        %v4771 = vadd.f32 %v4682, %v4770
        %4772 = vmatmul.bf16.gmra.mxu0 %v3946
        %v4773 = vpop.f32.mrf.mxu0
        %v4774 = vadd.f32 %v4685, %v4773
        %v4775 = vpop.f32.mrf.mxu0
        %v4776 = vadd.f32 %v4687, %v4775
        %4777 = vmatmul.bf16.gmra.mxu0 %v3947
        %v4778 = vpop.f32.mrf.mxu0
        %v4779 = vadd.f32 %v4690, %v4778
        %v4780 = vpop.f32.mrf.mxu0
        %v4781 = vadd.f32 %v4692, %v4780
        %4782 = vmatmul.bf16.gmra.mxu0 %v3948
        %v4783 = vpop.f32.mrf.mxu0
        %v4784 = vadd.f32 %v4695, %v4783
        %v4785 = vpop.f32.mrf.mxu0
        %v4786 = vadd.f32 %v4697, %v4785
        %4787 = vmatmul.bf16.gmra.mxu0 %v3949
        %v4788 = vpop.f32.mrf.mxu0
        %v4789 = vadd.f32 %v4700, %v4788
        %v4790 = vpop.f32.mrf.mxu0
        %v4791 = vadd.f32 %v4702, %v4790
        %4792 = vmatmul.bf16.gmra.mxu0 %v3950
        %v4793 = vpop.f32.mrf.mxu0
        %v4794 = vadd.f32 %v4705, %v4793
        %v4795 = vpop.f32.mrf.mxu0
        %v4796 = vadd.f32 %v4707, %v4795
        %4797 = vmatmul.bf16.gmra.mxu0 %v3951
        %v4798 = vpop.f32.mrf.mxu0
        %v4799 = vadd.f32 %v4710, %v4798
        %v4800 = vpop.f32.mrf.mxu0
        %v4801 = vadd.f32 %v4712, %v4800
        %4802 = vmatmul.bf16.gmra.mxu0 %v3952
        %v4803 = vpop.f32.mrf.mxu0
        %v4804 = vadd.f32 %v4715, %v4803
        %v4805 = vpop.f32.mrf.mxu0
        %v4806 = vadd.f32 %v4717, %v4805
        %4807 = vmatmul.bf16.gmra.mxu0 %v3953
        %v4808 = vpop.f32.mrf.mxu0
        %v4809 = vadd.f32 %v4720, %v4808
        %v4810 = vpop.f32.mrf.mxu0
        %v4811 = vadd.f32 %v4722, %v4810
        %4812 = vmatmul.bf16.gmra.mxu0 %v3954
        %v4813 = vpop.f32.mrf.mxu0
        %v4814 = vadd.f32 %v4725, %v4813
        %v4815 = vpop.f32.mrf.mxu0
        %v4816 = vadd.f32 %v4727, %v4815
        %4817 = vmatmul.bf16.gmra.mxu0 %v3955
        %v4818 = vpop.f32.mrf.mxu0
        %v4819 = vadd.f32 %v4730, %v4818
        %v4820 = vpop.f32.mrf.mxu0
        %v4821 = vadd.f32 %v4732, %v4820
        %4822 = vmatmul.bf16.gmra.mxu0 %v3956
        %v4823 = vpop.f32.mrf.mxu0
        %v4824 = vadd.f32 %v4735, %v4823
        %v4825 = vpop.f32.mrf.mxu0
        %v4826 = vadd.f32 %v4737, %v4825
        %4827 = vmatmul.bf16.gmra.mxu0 %v3957
        %v4828 = vpop.f32.mrf.mxu0
        %v4829 = vadd.f32 %v4740, %v4828
        %v4830 = vpop.f32.mrf.mxu0
        %v4831 = vadd.f32 %v4742, %v4830
        %4832 = vmatmul.bf16.gmra.mxu0 %v3958
        %v4833 = vpop.f32.mrf.mxu0
        %v4834 = vadd.f32 %v4745, %v4833
        %v4835 = vpop.f32.mrf.mxu0
        %v4836 = vadd.f32 %v4747, %v4835
        %4837 = vmatmul.bf16.gmra.mxu0 %v3959
        %v4838 = vpop.f32.mrf.mxu0
        %v4839 = vadd.f32 %v4750, %v4838
        %v4840 = vpop.f32.mrf.mxu0
        %v4841 = vadd.f32 %v4752, %v4840
        %4842 = vmatmul.bf16.gmra.mxu0 %v3960
        %v4843 = vpop.f32.mrf.mxu0
        %v4844 = vadd.f32 %v4755, %v4843
        %v4845 = vpop.f32.mrf.mxu0
        %v4846 = vadd.f32 %v4757, %v4845
        %4847 = vdwg.mxu0
        %4848 = vmatpush.bf16.msra.mxu0 %v4468
        %4849 = vmatpush.bf16.msra.mxu0 %v4467
        %4850 = vmatpush.bf16.msra.mxu0 %v4466
        %4851 = vmatpush.bf16.msra.mxu0 %v4465
        %4852 = vmatpush.bf16.msra.mxu0 %v4464
        %4853 = vmatpush.bf16.msra.mxu0 %v4463
        %4854 = vmatpush.bf16.msra.mxu0 %v4462
        %4855 = vmatpush.bf16.msra.mxu0 %v4461
        %4856 = vmatmul.bf16.gmra.mxu0 %v3818
        %v4857 = vpop.f32.mrf.mxu0
        %v4858 = vadd.f32 %v4769, %v4857
        %v4859 = vpop.f32.mrf.mxu0
        %v4860 = vadd.f32 %v4771, %v4859
        %4861 = vmatmul.bf16.gmra.mxu0 %v3819
        %v4862 = vpop.f32.mrf.mxu0
        %v4863 = vadd.f32 %v4774, %v4862
        %v4864 = vpop.f32.mrf.mxu0
        %v4865 = vadd.f32 %v4776, %v4864
        %4866 = vmatmul.bf16.gmra.mxu0 %v3820
        %v4867 = vpop.f32.mrf.mxu0
        %v4868 = vadd.f32 %v4779, %v4867
        %v4869 = vpop.f32.mrf.mxu0
        %v4870 = vadd.f32 %v4781, %v4869
        %4871 = vmatmul.bf16.gmra.mxu0 %v3821
        %v4872 = vpop.f32.mrf.mxu0
        %v4873 = vadd.f32 %v4784, %v4872
        %v4874 = vpop.f32.mrf.mxu0
        %v4875 = vadd.f32 %v4786, %v4874
        %4876 = vmatmul.bf16.gmra.mxu0 %v3822
        %v4877 = vpop.f32.mrf.mxu0
        %v4878 = vadd.f32 %v4789, %v4877
        %v4879 = vpop.f32.mrf.mxu0
        %v4880 = vadd.f32 %v4791, %v4879
        %4881 = vmatmul.bf16.gmra.mxu0 %v3823
        %v4882 = vpop.f32.mrf.mxu0
        %v4883 = vadd.f32 %v4794, %v4882
        %v4884 = vpop.f32.mrf.mxu0
        %v4885 = vadd.f32 %v4796, %v4884
        %4886 = vmatmul.bf16.gmra.mxu0 %v3824
        %v4887 = vpop.f32.mrf.mxu0
        %v4888 = vadd.f32 %v4799, %v4887
        %v4889 = vpop.f32.mrf.mxu0
        %v4890 = vadd.f32 %v4801, %v4889
        %4891 = vmatmul.bf16.gmra.mxu0 %v3825
        %v4892 = vpop.f32.mrf.mxu0
        %v4893 = vadd.f32 %v4804, %v4892
        %v4894 = vpop.f32.mrf.mxu0
        %v4895 = vadd.f32 %v4806, %v4894
        %4896 = vmatmul.bf16.gmra.mxu0 %v3826
        %v4897 = vpop.f32.mrf.mxu0
        %v4898 = vadd.f32 %v4809, %v4897
        %v4899 = vpop.f32.mrf.mxu0
        %v4900 = vadd.f32 %v4811, %v4899
        %4901 = vmatmul.bf16.gmra.mxu0 %v3827
        %v4902 = vpop.f32.mrf.mxu0
        %v4903 = vadd.f32 %v4814, %v4902
        %v4904 = vpop.f32.mrf.mxu0
        %v4905 = vadd.f32 %v4816, %v4904
        %4906 = vmatmul.bf16.gmra.mxu0 %v3828
        %v4907 = vpop.f32.mrf.mxu0
        %v4908 = vadd.f32 %v4819, %v4907
        %v4909 = vpop.f32.mrf.mxu0
        %v4910 = vadd.f32 %v4821, %v4909
        %4911 = vmatmul.bf16.gmra.mxu0 %v3829
        %v4912 = vpop.f32.mrf.mxu0
        %v4913 = vadd.f32 %v4824, %v4912
        %v4914 = vpop.f32.mrf.mxu0
        %v4915 = vadd.f32 %v4826, %v4914
        %4916 = vmatmul.bf16.gmra.mxu0 %v3830
        %v4917 = vpop.f32.mrf.mxu0
        %v4918 = vadd.f32 %v4829, %v4917
        %v4919 = vpop.f32.mrf.mxu0
        %v4920 = vadd.f32 %v4831, %v4919
        %4921 = vmatmul.bf16.gmra.mxu0 %v3831
        %v4922 = vpop.f32.mrf.mxu0
        %v4923 = vadd.f32 %v4834, %v4922
        %v4924 = vpop.f32.mrf.mxu0
        %v4925 = vadd.f32 %v4836, %v4924
        %4926 = vmatmul.bf16.gmra.mxu0 %v3832
        %v4927 = vpop.f32.mrf.mxu0
        %v4928 = vadd.f32 %v4839, %v4927
        %v4929 = vpop.f32.mrf.mxu0
        %v4930 = vadd.f32 %v4841, %v4929
        %4931 = vmatmul.bf16.gmra.mxu0 %v3979
        %v4932 = vpop.f32.mrf.mxu0
        %v4933 = vadd.f32 %v4844, %v4932
        %v4934 = vpop.f32.mrf.mxu0
        %v4935 = vadd.f32 %v4846, %v4934
        %4936 = vdwg.mxu0
        %4937 = vmatpush.bf16.msra.mxu0 %v4476
        %4938 = vmatpush.bf16.msra.mxu0 %v4475
        %4939 = vmatpush.bf16.msra.mxu0 %v4474
        %4940 = vmatpush.bf16.msra.mxu0 %v4473
        %4941 = vmatpush.bf16.msra.mxu0 %v4472
        %4942 = vmatpush.bf16.msra.mxu0 %v4471
        %4943 = vmatpush.bf16.msra.mxu0 %v4470
        %4944 = vmatpush.bf16.msra.mxu0 %v4469
        %4945 = vmatmul.bf16.gmra.mxu0 %v3882
        %v4946 = vpop.f32.mrf.mxu0
        %v4947 = vadd.f32 %v4858, %v4946
        %v4948 = vpop.f32.mrf.mxu0
        %v4949 = vadd.f32 %v4860, %v4948
        %4950 = vmatmul.bf16.gmra.mxu0 %v3883
        %v4951 = vpop.f32.mrf.mxu0
        %v4952 = vadd.f32 %v4863, %v4951
        %v4953 = vpop.f32.mrf.mxu0
        %v4954 = vadd.f32 %v4865, %v4953
        %4955 = vmatmul.bf16.gmra.mxu0 %v3884
        %v4956 = vpop.f32.mrf.mxu0
        %v4957 = vadd.f32 %v4868, %v4956
        %v4958 = vpop.f32.mrf.mxu0
        %v4959 = vadd.f32 %v4870, %v4958
        %4960 = vmatmul.bf16.gmra.mxu0 %v3885
        %v4961 = vpop.f32.mrf.mxu0
        %v4962 = vadd.f32 %v4873, %v4961
        %v4963 = vpop.f32.mrf.mxu0
        %v4964 = vadd.f32 %v4875, %v4963
        %4965 = vmatmul.bf16.gmra.mxu0 %v3886
        %v4966 = vpop.f32.mrf.mxu0
        %v4967 = vadd.f32 %v4878, %v4966
        %v4968 = vpop.f32.mrf.mxu0
        %v4969 = vadd.f32 %v4880, %v4968
        %4970 = vmatmul.bf16.gmra.mxu0 %v3887
        %v4971 = vpop.f32.mrf.mxu0
        %v4972 = vadd.f32 %v4883, %v4971
        %v4973 = vpop.f32.mrf.mxu0
        %v4974 = vadd.f32 %v4885, %v4973
        %4975 = vmatmul.bf16.gmra.mxu0 %v3888
        %v4976 = vpop.f32.mrf.mxu0
        %v4977 = vadd.f32 %v4888, %v4976
        %v4978 = vpop.f32.mrf.mxu0
        %v4979 = vadd.f32 %v4890, %v4978
        %4980 = vmatmul.bf16.gmra.mxu0 %v3889
        %v4981 = vpop.f32.mrf.mxu0
        %v4982 = vadd.f32 %v4893, %v4981
        %v4983 = vpop.f32.mrf.mxu0
        %v4984 = vadd.f32 %v4895, %v4983
        %4985 = vmatmul.bf16.gmra.mxu0 %v3890
        %v4986 = vpop.f32.mrf.mxu0
        %v4987 = vadd.f32 %v4898, %v4986
        %v4988 = vpop.f32.mrf.mxu0
        %v4989 = vadd.f32 %v4900, %v4988
        %4990 = vmatmul.bf16.gmra.mxu0 %v3891
        %v4991 = vpop.f32.mrf.mxu0
        %v4992 = vadd.f32 %v4903, %v4991
        %v4993 = vpop.f32.mrf.mxu0
        %v4994 = vadd.f32 %v4905, %v4993
        %4995 = vmatmul.bf16.gmra.mxu0 %v3892
        %v4996 = vpop.f32.mrf.mxu0
        %v4997 = vadd.f32 %v4908, %v4996
        %v4998 = vpop.f32.mrf.mxu0
        %v4999 = vadd.f32 %v4910, %v4998
        %5000 = vmatmul.bf16.gmra.mxu0 %v3893
        %v5001 = vpop.f32.mrf.mxu0
        %v5002 = vadd.f32 %v4913, %v5001
        %v5003 = vpop.f32.mrf.mxu0
        %v5004 = vadd.f32 %v4915, %v5003
        %5005 = vmatmul.bf16.gmra.mxu0 %v3894
        %v5006 = vpop.f32.mrf.mxu0
        %v5007 = vadd.f32 %v4918, %v5006
        %v5008 = vpop.f32.mrf.mxu0
        %v5009 = vadd.f32 %v4920, %v5008
        %5010 = vmatmul.bf16.gmra.mxu0 %v3895
        %v5011 = vpop.f32.mrf.mxu0
        %v5012 = vadd.f32 %v4923, %v5011
        %v5013 = vpop.f32.mrf.mxu0
        %v5014 = vadd.f32 %v4925, %v5013
        %5015 = vmatmul.bf16.gmra.mxu0 %v3896
        %v5016 = vpop.f32.mrf.mxu0
        %v5017 = vadd.f32 %v4928, %v5016
        %v5018 = vpop.f32.mrf.mxu0
        %v5019 = vadd.f32 %v4930, %v5018
        %5020 = vmatmul.bf16.gmra.mxu0 %v3983
        %v5021 = vpop.f32.mrf.mxu0
        %v5022 = vadd.f32 %v4933, %v5021
        %v5023 = vpop.f32.mrf.mxu0
        %v5024 = vadd.f32 %v4935, %v5023
        %5025 = vdwg.mxu0
        %5026 = vmatpush.bf16.msra.mxu0 %v4484
        %5027 = vmatpush.bf16.msra.mxu0 %v4483
        %5028 = vmatpush.bf16.msra.mxu0 %v4482
        %5029 = vmatpush.bf16.msra.mxu0 %v4481
        %5030 = vmatpush.bf16.msra.mxu0 %v4480
        %5031 = vmatpush.bf16.msra.mxu0 %v4479
        %5032 = vmatpush.bf16.msra.mxu0 %v4478
        %5033 = vmatpush.bf16.msra.mxu0 %v4477
        %5034 = vmatmul.bf16.gmra.mxu0 %v3946
        %v5035 = vpop.f32.mrf.mxu0
        %v5036 = vadd.f32 %v4947, %v5035
        %v5037 = vpop.f32.mrf.mxu0
        %v5038 = vadd.f32 %v4949, %v5037
        %5039 = vmatmul.bf16.gmra.mxu0 %v3947
        %v5040 = vpop.f32.mrf.mxu0
        %v5041 = vadd.f32 %v4952, %v5040
        %v5042 = vpop.f32.mrf.mxu0
        %v5043 = vadd.f32 %v4954, %v5042
        %5044 = vmatmul.bf16.gmra.mxu0 %v3948
        %v5045 = vpop.f32.mrf.mxu0
        %v5046 = vadd.f32 %v4957, %v5045
        %v5047 = vpop.f32.mrf.mxu0
        %v5048 = vadd.f32 %v4959, %v5047
        %5049 = vmatmul.bf16.gmra.mxu0 %v3949
        %v5050 = vpop.f32.mrf.mxu0
        %v5051 = vadd.f32 %v4962, %v5050
        %v5052 = vpop.f32.mrf.mxu0
        %v5053 = vadd.f32 %v4964, %v5052
        %5054 = vmatmul.bf16.gmra.mxu0 %v3950
        %v5055 = vpop.f32.mrf.mxu0
        %v5056 = vadd.f32 %v4967, %v5055
        %v5057 = vpop.f32.mrf.mxu0
        %v5058 = vadd.f32 %v4969, %v5057
        %5059 = vmatmul.bf16.gmra.mxu0 %v3951
        %v5060 = vpop.f32.mrf.mxu0
        %v5061 = vadd.f32 %v4972, %v5060
        %v5062 = vpop.f32.mrf.mxu0
        %v5063 = vadd.f32 %v4974, %v5062
        %5064 = vmatmul.bf16.gmra.mxu0 %v3952
        %v5065 = vpop.f32.mrf.mxu0
        %v5066 = vadd.f32 %v4977, %v5065
        %v5067 = vpop.f32.mrf.mxu0
        %v5068 = vadd.f32 %v4979, %v5067
        %5069 = vmatmul.bf16.gmra.mxu0 %v3953
        %v5070 = vpop.f32.mrf.mxu0
        %v5071 = vadd.f32 %v4982, %v5070
        %v5072 = vpop.f32.mrf.mxu0
        %v5073 = vadd.f32 %v4984, %v5072
        %5074 = vmatmul.bf16.gmra.mxu0 %v3954
        %v5075 = vpop.f32.mrf.mxu0
        %v5076 = vadd.f32 %v4987, %v5075
        %v5077 = vpop.f32.mrf.mxu0
        %v5078 = vadd.f32 %v4989, %v5077
        %5079 = vmatmul.bf16.gmra.mxu0 %v3955
        %v5080 = vpop.f32.mrf.mxu0
        %v5081 = vadd.f32 %v4992, %v5080
        %v5082 = vpop.f32.mrf.mxu0
        %v5083 = vadd.f32 %v4994, %v5082
        %5084 = vmatmul.bf16.gmra.mxu0 %v3956
        %v5085 = vpop.f32.mrf.mxu0
        %v5086 = vadd.f32 %v4997, %v5085
        %v5087 = vpop.f32.mrf.mxu0
        %v5088 = vadd.f32 %v4999, %v5087
        %5089 = vmatmul.bf16.gmra.mxu0 %v3957
        %v5090 = vpop.f32.mrf.mxu0
        %v5091 = vadd.f32 %v5002, %v5090
        %v5092 = vpop.f32.mrf.mxu0
        %v5093 = vadd.f32 %v5004, %v5092
        %5094 = vmatmul.bf16.gmra.mxu0 %v3958
        %v5095 = vpop.f32.mrf.mxu0
        %v5096 = vadd.f32 %v5007, %v5095
        %v5097 = vpop.f32.mrf.mxu0
        %v5098 = vadd.f32 %v5009, %v5097
        %5099 = vmatmul.bf16.gmra.mxu0 %v3959
        %v5100 = vpop.f32.mrf.mxu0
        %v5101 = vadd.f32 %v5012, %v5100
        %v5102 = vpop.f32.mrf.mxu0
        %v5103 = vadd.f32 %v5014, %v5102
        %5104 = vmatmul.bf16.gmra.mxu0 %v3960
        %v5105 = vpop.f32.mrf.mxu0
        %v5106 = vadd.f32 %v5017, %v5105
        %v5107 = vpop.f32.mrf.mxu0
        %v5108 = vadd.f32 %v5019, %v5107
        %5109 = vmatmul.bf16.gmra.mxu0 %v3987
        %v5110 = vpop.f32.mrf.mxu0
        %v5111 = vadd.f32 %v5022, %v5110
        %v5112 = vpop.f32.mrf.mxu0
        %v5113 = vadd.f32 %v5024, %v5112
        %5114 = vdwg.mxu0
        %5115 = vmatpush.bf16.msra.mxu0 %v4492
        %5116 = vmatpush.bf16.msra.mxu0 %v4491
        %5117 = vmatpush.bf16.msra.mxu0 %v4490
        %5118 = vmatpush.bf16.msra.mxu0 %v4489
        %5119 = vmatpush.bf16.msra.mxu0 %v4488
        %5120 = vmatpush.bf16.msra.mxu0 %v4487
        %5121 = vmatpush.bf16.msra.mxu0 %v4486
        %5122 = vmatpush.bf16.msra.mxu0 %v4485
        %5123 = vmatmul.bf16.gmra.mxu0 %v3819
        %v5124 = vpop.f32.mrf.mxu0
        %v5125 = vadd.f32 %v5036, %v5124
        %v5126 = vpop.f32.mrf.mxu0
        %v5127 = vadd.f32 %v5038, %v5126
        %5128 = vmatmul.bf16.gmra.mxu0 %v3820
        %v5129 = vpop.f32.mrf.mxu0
        %v5130 = vadd.f32 %v5041, %v5129
        %v5131 = vpop.f32.mrf.mxu0
        %v5132 = vadd.f32 %v5043, %v5131
        %5133 = vmatmul.bf16.gmra.mxu0 %v3821
        %v5134 = vpop.f32.mrf.mxu0
        %v5135 = vadd.f32 %v5046, %v5134
        %v5136 = vpop.f32.mrf.mxu0
        %v5137 = vadd.f32 %v5048, %v5136
        %5138 = vmatmul.bf16.gmra.mxu0 %v3822
        %v5139 = vpop.f32.mrf.mxu0
        %v5140 = vadd.f32 %v5051, %v5139
        %v5141 = vpop.f32.mrf.mxu0
        %v5142 = vadd.f32 %v5053, %v5141
        %5143 = vmatmul.bf16.gmra.mxu0 %v3823
        %v5144 = vpop.f32.mrf.mxu0
        %v5145 = vadd.f32 %v5056, %v5144
        %v5146 = vpop.f32.mrf.mxu0
        %v5147 = vadd.f32 %v5058, %v5146
        %5148 = vmatmul.bf16.gmra.mxu0 %v3824
        %v5149 = vpop.f32.mrf.mxu0
        %v5150 = vadd.f32 %v5061, %v5149
        %v5151 = vpop.f32.mrf.mxu0
        %v5152 = vadd.f32 %v5063, %v5151
        %5153 = vmatmul.bf16.gmra.mxu0 %v3825
        %v5154 = vpop.f32.mrf.mxu0
        %v5155 = vadd.f32 %v5066, %v5154
        %v5156 = vpop.f32.mrf.mxu0
        %v5157 = vadd.f32 %v5068, %v5156
        %5158 = vmatmul.bf16.gmra.mxu0 %v3826
        %v5159 = vpop.f32.mrf.mxu0
        %v5160 = vadd.f32 %v5071, %v5159
        %v5161 = vpop.f32.mrf.mxu0
        %v5162 = vadd.f32 %v5073, %v5161
        %5163 = vmatmul.bf16.gmra.mxu0 %v3827
        %v5164 = vpop.f32.mrf.mxu0
        %v5165 = vadd.f32 %v5076, %v5164
        %v5166 = vpop.f32.mrf.mxu0
        %v5167 = vadd.f32 %v5078, %v5166
        %5168 = vmatmul.bf16.gmra.mxu0 %v3828
        %v5169 = vpop.f32.mrf.mxu0
        %v5170 = vadd.f32 %v5081, %v5169
        %v5171 = vpop.f32.mrf.mxu0
        %v5172 = vadd.f32 %v5083, %v5171
        %5173 = vmatmul.bf16.gmra.mxu0 %v3829
        %v5174 = vpop.f32.mrf.mxu0
        %v5175 = vadd.f32 %v5086, %v5174
        %v5176 = vpop.f32.mrf.mxu0
        %v5177 = vadd.f32 %v5088, %v5176
        %5178 = vmatmul.bf16.gmra.mxu0 %v3830
        %v5179 = vpop.f32.mrf.mxu0
        %v5180 = vadd.f32 %v5091, %v5179
        %v5181 = vpop.f32.mrf.mxu0
        %v5182 = vadd.f32 %v5093, %v5181
        %5183 = vmatmul.bf16.gmra.mxu0 %v3831
        %v5184 = vpop.f32.mrf.mxu0
        %v5185 = vadd.f32 %v5096, %v5184
        %v5186 = vpop.f32.mrf.mxu0
        %v5187 = vadd.f32 %v5098, %v5186
        %5188 = vmatmul.bf16.gmra.mxu0 %v3832
        %v5189 = vpop.f32.mrf.mxu0
        %v5190 = vadd.f32 %v5101, %v5189
        %v5191 = vpop.f32.mrf.mxu0
        %v5192 = vadd.f32 %v5103, %v5191
        %5193 = vmatmul.bf16.gmra.mxu0 %v3979
        %v5194 = vpop.f32.mrf.mxu0
        %v5195 = vadd.f32 %v5106, %v5194
        %v5196 = vpop.f32.mrf.mxu0
        %v5197 = vadd.f32 %v5108, %v5196
        %5198 = vmatmul.bf16.gmra.mxu0 %v3991
        %v5199 = vpop.f32.mrf.mxu0
        %v5200 = vadd.f32 %v5111, %v5199
        %v5201 = vpop.f32.mrf.mxu0
        %v5202 = vadd.f32 %v5113, %v5201
        %5203 = vdwg.mxu0
        %5204 = vmatpush.bf16.msra.mxu0 %v4500
        %5205 = vmatpush.bf16.msra.mxu0 %v4499
        %5206 = vmatpush.bf16.msra.mxu0 %v4498
        %5207 = vmatpush.bf16.msra.mxu0 %v4497
        %5208 = vmatpush.bf16.msra.mxu0 %v4496
        %5209 = vmatpush.bf16.msra.mxu0 %v4495
        %5210 = vmatpush.bf16.msra.mxu0 %v4494
        %5211 = vmatpush.bf16.msra.mxu0 %v4493
        %5212 = vmatmul.bf16.gmra.mxu0 %v3883
        %v5213 = vpop.f32.mrf.mxu0
        %v5214 = vadd.f32 %v5125, %v5213
        %v5215 = vpop.f32.mrf.mxu0
        %v5216 = vadd.f32 %v5127, %v5215
        %5217 = vmatmul.bf16.gmra.mxu0 %v3884
        %v5218 = vpop.f32.mrf.mxu0
        %v5219 = vadd.f32 %v5130, %v5218
        %v5220 = vpop.f32.mrf.mxu0
        %v5221 = vadd.f32 %v5132, %v5220
        %5222 = vmatmul.bf16.gmra.mxu0 %v3885
        %v5223 = vpop.f32.mrf.mxu0
        %v5224 = vadd.f32 %v5135, %v5223
        %v5225 = vpop.f32.mrf.mxu0
        %v5226 = vadd.f32 %v5137, %v5225
        %5227 = vmatmul.bf16.gmra.mxu0 %v3886
        %v5228 = vpop.f32.mrf.mxu0
        %v5229 = vadd.f32 %v5140, %v5228
        %v5230 = vpop.f32.mrf.mxu0
        %v5231 = vadd.f32 %v5142, %v5230
        %5232 = vmatmul.bf16.gmra.mxu0 %v3887
        %v5233 = vpop.f32.mrf.mxu0
        %v5234 = vadd.f32 %v5145, %v5233
        %v5235 = vpop.f32.mrf.mxu0
        %v5236 = vadd.f32 %v5147, %v5235
        %5237 = vmatmul.bf16.gmra.mxu0 %v3888
        %v5238 = vpop.f32.mrf.mxu0
        %v5239 = vadd.f32 %v5150, %v5238
        %v5240 = vpop.f32.mrf.mxu0
        %v5241 = vadd.f32 %v5152, %v5240
        %5242 = vmatmul.bf16.gmra.mxu0 %v3889
        %v5243 = vpop.f32.mrf.mxu0
        %v5244 = vadd.f32 %v5155, %v5243
        %v5245 = vpop.f32.mrf.mxu0
        %v5246 = vadd.f32 %v5157, %v5245
        %5247 = vmatmul.bf16.gmra.mxu0 %v3890
        %v5248 = vpop.f32.mrf.mxu0
        %v5249 = vadd.f32 %v5160, %v5248
        %v5250 = vpop.f32.mrf.mxu0
        %v5251 = vadd.f32 %v5162, %v5250
        %5252 = vmatmul.bf16.gmra.mxu0 %v3891
        %v5253 = vpop.f32.mrf.mxu0
        %v5254 = vadd.f32 %v5165, %v5253
        %v5255 = vpop.f32.mrf.mxu0
        %v5256 = vadd.f32 %v5167, %v5255
        %5257 = vmatmul.bf16.gmra.mxu0 %v3892
        %v5258 = vpop.f32.mrf.mxu0
        %v5259 = vadd.f32 %v5170, %v5258
        %v5260 = vpop.f32.mrf.mxu0
        %v5261 = vadd.f32 %v5172, %v5260
        %5262 = vmatmul.bf16.gmra.mxu0 %v3893
        %v5263 = vpop.f32.mrf.mxu0
        %v5264 = vadd.f32 %v5175, %v5263
        %v5265 = vpop.f32.mrf.mxu0
        %v5266 = vadd.f32 %v5177, %v5265
        %5267 = vmatmul.bf16.gmra.mxu0 %v3894
        %v5268 = vpop.f32.mrf.mxu0
        %v5269 = vadd.f32 %v5180, %v5268
        %v5270 = vpop.f32.mrf.mxu0
        %v5271 = vadd.f32 %v5182, %v5270
        %5272 = vmatmul.bf16.gmra.mxu0 %v3895
        %v5273 = vpop.f32.mrf.mxu0
        %v5274 = vadd.f32 %v5185, %v5273
        %v5275 = vpop.f32.mrf.mxu0
        %v5276 = vadd.f32 %v5187, %v5275
        %5277 = vmatmul.bf16.gmra.mxu0 %v3896
        %v5278 = vpop.f32.mrf.mxu0
        %v5279 = vadd.f32 %v5190, %v5278
        %v5280 = vpop.f32.mrf.mxu0
        %v5281 = vadd.f32 %v5192, %v5280
        %5282 = vmatmul.bf16.gmra.mxu0 %v3983
        %v5283 = vpop.f32.mrf.mxu0
        %v5284 = vadd.f32 %v5195, %v5283
        %v5285 = vpop.f32.mrf.mxu0
        %v5286 = vadd.f32 %v5197, %v5285
        %5287 = vmatmul.bf16.gmra.mxu0 %v3995
        %v5288 = vpop.f32.mrf.mxu0
        %v5289 = vadd.f32 %v5200, %v5288
        %v5290 = vpop.f32.mrf.mxu0
        %v5291 = vadd.f32 %v5202, %v5290
        %5292 = vdwg.mxu0
        %5293 = vmatpush.bf16.msra.mxu0 %v4508
        %5294 = vmatpush.bf16.msra.mxu0 %v4507
        %5295 = vmatpush.bf16.msra.mxu0 %v4506
        %5296 = vmatpush.bf16.msra.mxu0 %v4505
        %5297 = vmatpush.bf16.msra.mxu0 %v4504
        %5298 = vmatpush.bf16.msra.mxu0 %v4503
        %5299 = vmatpush.bf16.msra.mxu0 %v4502
        %5300 = vmatpush.bf16.msra.mxu0 %v4501
        %5301 = vmatmul.bf16.gmra.mxu0 %v3947
        %v5302 = vpop.f32.mrf.mxu0
        %v5303 = vadd.f32 %v5214, %v5302
        %v5304 = vpop.f32.mrf.mxu0
        %v5305 = vadd.f32 %v5216, %v5304
        %5306 = vmatmul.bf16.gmra.mxu0 %v3948
        %v5307 = vpop.f32.mrf.mxu0
        %v5308 = vadd.f32 %v5219, %v5307
        %v5309 = vpop.f32.mrf.mxu0
        %v5310 = vadd.f32 %v5221, %v5309
        %5311 = vmatmul.bf16.gmra.mxu0 %v3949
        %v5312 = vpop.f32.mrf.mxu0
        %v5313 = vadd.f32 %v5224, %v5312
        %v5314 = vpop.f32.mrf.mxu0
        %v5315 = vadd.f32 %v5226, %v5314
        %5316 = vmatmul.bf16.gmra.mxu0 %v3950
        %v5317 = vpop.f32.mrf.mxu0
        %v5318 = vadd.f32 %v5229, %v5317
        %v5319 = vpop.f32.mrf.mxu0
        %v5320 = vadd.f32 %v5231, %v5319
        %5321 = vmatmul.bf16.gmra.mxu0 %v3951
        %v5322 = vpop.f32.mrf.mxu0
        %v5323 = vadd.f32 %v5234, %v5322
        %v5324 = vpop.f32.mrf.mxu0
        %v5325 = vadd.f32 %v5236, %v5324
        %5326 = vmatmul.bf16.gmra.mxu0 %v3952
        %v5327 = vpop.f32.mrf.mxu0
        %v5328 = vadd.f32 %v5239, %v5327
        %v5329 = vpop.f32.mrf.mxu0
        %v5330 = vadd.f32 %v5241, %v5329
        %5331 = vmatmul.bf16.gmra.mxu0 %v3953
        %v5332 = vpop.f32.mrf.mxu0
        %v5333 = vadd.f32 %v5244, %v5332
        %v5334 = vpop.f32.mrf.mxu0
        %v5335 = vadd.f32 %v5246, %v5334
        %5336 = vmatmul.bf16.gmra.mxu0 %v3954
        %v5337 = vpop.f32.mrf.mxu0
        %v5338 = vadd.f32 %v5249, %v5337
        %v5339 = vpop.f32.mrf.mxu0
        %v5340 = vadd.f32 %v5251, %v5339
        %5341 = vmatmul.bf16.gmra.mxu0 %v3955
        %v5342 = vpop.f32.mrf.mxu0
        %v5343 = vadd.f32 %v5254, %v5342
        %v5344 = vpop.f32.mrf.mxu0
        %v5345 = vadd.f32 %v5256, %v5344
        %5346 = vmatmul.bf16.gmra.mxu0 %v3956
        %v5347 = vpop.f32.mrf.mxu0
        %v5348 = vadd.f32 %v5259, %v5347
        %v5349 = vpop.f32.mrf.mxu0
        %v5350 = vadd.f32 %v5261, %v5349
        %5351 = vmatmul.bf16.gmra.mxu0 %v3957
        %v5352 = vpop.f32.mrf.mxu0
        %v5353 = vadd.f32 %v5264, %v5352
        %v5354 = vpop.f32.mrf.mxu0
        %v5355 = vadd.f32 %v5266, %v5354
        %5356 = vmatmul.bf16.gmra.mxu0 %v3958
        %v5357 = vpop.f32.mrf.mxu0
        %v5358 = vadd.f32 %v5269, %v5357
        %v5359 = vpop.f32.mrf.mxu0
        %v5360 = vadd.f32 %v5271, %v5359
        %5361 = vmatmul.bf16.gmra.mxu0 %v3959
        %v5362 = vpop.f32.mrf.mxu0
        %v5363 = vadd.f32 %v5274, %v5362
        %v5364 = vpop.f32.mrf.mxu0
        %v5365 = vadd.f32 %v5276, %v5364
        %5366 = vmatmul.bf16.gmra.mxu0 %v3960
        %v5367 = vpop.f32.mrf.mxu0
        %v5368 = vadd.f32 %v5279, %v5367
        %v5369 = vpop.f32.mrf.mxu0
        %v5370 = vadd.f32 %v5281, %v5369
        %5371 = vmatmul.bf16.gmra.mxu0 %v3987
        %v5372 = vpop.f32.mrf.mxu0
        %v5373 = vadd.f32 %v5284, %v5372
        %v5374 = vpop.f32.mrf.mxu0
        %v5375 = vadd.f32 %v5286, %v5374
        %5376 = vmatmul.bf16.gmra.mxu0 %v3999
        %v5377 = vpop.f32.mrf.mxu0
        %v5378 = vadd.f32 %v5289, %v5377
        %v5379 = vpop.f32.mrf.mxu0
        %v5380 = vadd.f32 %v5291, %v5379
        %5381 = vdwg.mxu0
        %v5382 = vunpack.c.l.bf16 %v244
        %v5383 = vunpack.c.l.bf16 %v245
        %v5384 = vunpack.c.l.bf16 %v246
        %v5385 = vunpack.c.l.bf16 %v247
        %v5386 = vunpack.c.l.bf16 %v248
        %v5387 = vunpack.c.l.bf16 %v249
        %v5388 = vunpack.c.l.bf16 %v250
        %v5389 = vunpack.c.l.bf16 %v251
        %v5390 = vunpack.c.l.bf16 %v252
        %v5391 = vunpack.c.l.bf16 %v253
        %v5392 = vunpack.c.l.bf16 %v254
        %v5393 = vunpack.c.l.bf16 %v255
        %v5394 = vunpack.c.l.bf16 %v256
        %v5395 = vunpack.c.l.bf16 %v257
        %v5396 = vunpack.c.l.bf16 %v258
        %v5397 = vunpack.c.l.bf16 %v259
        %v5398 = vunpack.c.l.bf16 %v260
        %v5399 = vunpack.c.l.bf16 %v261
        %v5400 = vunpack.c.l.bf16 %v262
        %v5401 = vunpack.c.l.bf16 %v263
        %v5402 = vunpack.c.l.bf16 %v264
        %v5403 = vunpack.c.l.bf16 %v265
        %v5404 = vunpack.c.l.bf16 %v266
        %v5405 = vunpack.c.l.bf16 %v267
        %v5406 = vunpack.c.l.bf16 %v268
        %v5407 = vunpack.c.l.bf16 %v269
        %v5408 = vunpack.c.l.bf16 %v270
        %v5409 = vunpack.c.l.bf16 %v271
        %v5410 = vunpack.c.l.bf16 %v272
        %v5411 = vunpack.c.l.bf16 %v273
        %v5412 = vunpack.c.l.bf16 %v274
        %v5413 = vunpack.c.l.bf16 %v275
        %v5414 = vunpack.c.l.bf16 %v276
        %v5415 = vunpack.c.l.bf16 %v277
        %v5416 = vunpack.c.l.bf16 %v278
        %v5417 = vunpack.c.l.bf16 %v279
        %v5418 = vunpack.c.l.bf16 %v280
        %v5419 = vunpack.c.l.bf16 %v281
        %v5420 = vunpack.c.l.bf16 %v282
        %v5421 = vunpack.c.l.bf16 %v283
        %v5422 = vunpack.c.l.bf16 %v284
        %v5423 = vunpack.c.l.bf16 %v285
        %v5424 = vunpack.c.l.bf16 %v286
        %v5425 = vunpack.c.l.bf16 %v287
        %v5426 = vunpack.c.l.bf16 %v288
        %v5427 = vunpack.c.l.bf16 %v289
        %v5428 = vunpack.c.l.bf16 %v290
        %v5429 = vunpack.c.l.bf16 %v291
        %vm5478 = vcmask 1046528
        %v5479 = vrot.slane %v5382, 1
        %v5480 = vrot.slane %v5383, 1
        %v5481 = vsel %vm5478, %v5479, %v5480
        %v5482 = vrot.slane %v5384, 1
        %v5483 = vsel %vm5478, %v5480, %v5482
        %v5484 = vrot.slane %v5385, 1
        %v5485 = vrot.slane %v5386, 1
        %v5486 = vsel %vm5478, %v5484, %v5485
        %v5487 = vrot.slane %v5387, 1
        %v5488 = vsel %vm5478, %v5485, %v5487
        %v5489 = vrot.slane %v5388, 1
        %v5490 = vrot.slane %v5389, 1
        %v5491 = vsel %vm5478, %v5489, %v5490
        %v5492 = vrot.slane %v5390, 1
        %v5493 = vsel %vm5478, %v5490, %v5492
        %v5494 = vrot.slane %v5391, 1
        %v5495 = vrot.slane %v5392, 1
        %v5496 = vsel %vm5478, %v5494, %v5495
        %v5497 = vrot.slane %v5393, 1
        %v5498 = vsel %vm5478, %v5495, %v5497
        %v5499 = vrot.slane %v5394, 1
        %v5500 = vrot.slane %v5395, 1
        %v5501 = vsel %vm5478, %v5499, %v5500
        %v5502 = vrot.slane %v5396, 1
        %v5503 = vsel %vm5478, %v5500, %v5502
        %v5504 = vrot.slane %v5397, 1
        %v5505 = vrot.slane %v5398, 1
        %v5506 = vsel %vm5478, %v5504, %v5505
        %v5507 = vrot.slane %v5399, 1
        %v5508 = vsel %vm5478, %v5505, %v5507
        %v5509 = vrot.slane %v5400, 1
        %v5510 = vrot.slane %v5401, 1
        %v5511 = vsel %vm5478, %v5509, %v5510
        %v5512 = vrot.slane %v5402, 1
        %v5513 = vsel %vm5478, %v5510, %v5512
        %v5514 = vrot.slane %v5403, 1
        %v5515 = vrot.slane %v5404, 1
        %v5516 = vsel %vm5478, %v5514, %v5515
        %v5517 = vrot.slane %v5405, 1
        %v5518 = vsel %vm5478, %v5515, %v5517
        %v5519 = vrot.slane %v5406, 1
        %v5520 = vrot.slane %v5407, 1
        %v5521 = vsel %vm5478, %v5519, %v5520
        %v5522 = vrot.slane %v5408, 1
        %v5523 = vsel %vm5478, %v5520, %v5522
        %v5524 = vrot.slane %v5409, 1
        %v5525 = vrot.slane %v5410, 1
        %v5526 = vsel %vm5478, %v5524, %v5525
        %v5527 = vrot.slane %v5411, 1
        %v5528 = vsel %vm5478, %v5525, %v5527
        %v5529 = vrot.slane %v5412, 1
        %v5530 = vrot.slane %v5413, 1
        %v5531 = vsel %vm5478, %v5529, %v5530
        %v5532 = vrot.slane %v5414, 1
        %v5533 = vsel %vm5478, %v5530, %v5532
        %v5534 = vrot.slane %v5415, 1
        %v5535 = vrot.slane %v5416, 1
        %v5536 = vsel %vm5478, %v5534, %v5535
        %v5537 = vrot.slane %v5417, 1
        %v5538 = vsel %vm5478, %v5535, %v5537
        %v5539 = vrot.slane %v5418, 1
        %v5540 = vrot.slane %v5419, 1
        %v5541 = vsel %vm5478, %v5539, %v5540
        %v5542 = vrot.slane %v5420, 1
        %v5543 = vsel %vm5478, %v5540, %v5542
        %v5544 = vrot.slane %v5421, 1
        %v5545 = vrot.slane %v5422, 1
        %v5546 = vsel %vm5478, %v5544, %v5545
        %v5547 = vrot.slane %v5423, 1
        %v5548 = vsel %vm5478, %v5545, %v5547
        %v5549 = vrot.slane %v5424, 1
        %v5550 = vrot.slane %v5425, 1
        %v5551 = vsel %vm5478, %v5549, %v5550
        %v5552 = vrot.slane %v5426, 1
        %v5553 = vsel %vm5478, %v5550, %v5552
        %v5554 = vrot.slane %v5427, 1
        %v5555 = vrot.slane %v5428, 1
        %v5556 = vsel %vm5478, %v5554, %v5555
        %v5557 = vrot.slane %v5429, 1
        %v5558 = vsel %vm5478, %v5555, %v5557
        %v5591 = vadd.f32 %v5303, %v5481
        %v5592 = vadd.f32 %v5305, %v5483
        %v5593 = vadd.f32 %v5308, %v5486
        %v5594 = vadd.f32 %v5310, %v5488
        %v5595 = vadd.f32 %v5313, %v5491
        %v5596 = vadd.f32 %v5315, %v5493
        %v5597 = vadd.f32 %v5318, %v5496
        %v5598 = vadd.f32 %v5320, %v5498
        %v5599 = vadd.f32 %v5323, %v5501
        %v5600 = vadd.f32 %v5325, %v5503
        %v5601 = vadd.f32 %v5328, %v5506
        %v5602 = vadd.f32 %v5330, %v5508
        %v5603 = vadd.f32 %v5333, %v5511
        %v5604 = vadd.f32 %v5335, %v5513
        %v5605 = vadd.f32 %v5338, %v5516
        %v5606 = vadd.f32 %v5340, %v5518
        %v5607 = vadd.f32 %v5343, %v5521
        %v5608 = vadd.f32 %v5345, %v5523
        %v5609 = vadd.f32 %v5348, %v5526
        %v5610 = vadd.f32 %v5350, %v5528
        %v5611 = vadd.f32 %v5353, %v5531
        %v5612 = vadd.f32 %v5355, %v5533
        %v5613 = vadd.f32 %v5358, %v5536
        %v5614 = vadd.f32 %v5360, %v5538
        %v5615 = vadd.f32 %v5363, %v5541
        %v5616 = vadd.f32 %v5365, %v5543
        %v5617 = vadd.f32 %v5368, %v5546
        %v5618 = vadd.f32 %v5370, %v5548
        %v5619 = vadd.f32 %v5373, %v5551
        %v5620 = vadd.f32 %v5375, %v5553
        %v5621 = vadd.f32 %v5378, %v5556
        %v5622 = vadd.f32 %v5380, %v5558
        %v5623 = vmax.f32 %v5591, 0.0
        %v5624 = vmax.f32 %v5592, 0.0
        %v5625 = vmax.f32 %v5593, 0.0
        %v5626 = vmax.f32 %v5594, 0.0
        %v5627 = vmax.f32 %v5595, 0.0
        %v5628 = vmax.f32 %v5596, 0.0
        %v5629 = vmax.f32 %v5597, 0.0
        %v5630 = vmax.f32 %v5598, 0.0
        %v5631 = vmax.f32 %v5599, 0.0
        %v5632 = vmax.f32 %v5600, 0.0
        %v5633 = vmax.f32 %v5601, 0.0
        %v5634 = vmax.f32 %v5602, 0.0
        %v5635 = vmax.f32 %v5603, 0.0
        %v5636 = vmax.f32 %v5604, 0.0
        %v5637 = vmax.f32 %v5605, 0.0
        %v5638 = vmax.f32 %v5606, 0.0
        %v5639 = vmax.f32 %v5607, 0.0
        %v5640 = vmax.f32 %v5608, 0.0
        %v5641 = vmax.f32 %v5609, 0.0
        %v5642 = vmax.f32 %v5610, 0.0
        %v5643 = vmax.f32 %v5611, 0.0
        %v5644 = vmax.f32 %v5612, 0.0
        %v5645 = vmax.f32 %v5613, 0.0
        %v5646 = vmax.f32 %v5614, 0.0
        %v5647 = vmax.f32 %v5615, 0.0
        %v5648 = vmax.f32 %v5616, 0.0
        %v5649 = vmax.f32 %v5617, 0.0
        %v5650 = vmax.f32 %v5618, 0.0
        %v5651 = vmax.f32 %v5619, 0.0
        %v5652 = vmax.f32 %v5620, 0.0
        %v5653 = vmax.f32 %v5621, 0.0
        %v5654 = vmax.f32 %v5622, 0.0
        %5655 = vst [vmem:[%s234] sm:$0xff] %v5623
        %5656 = vst [vmem:[%s234 + $0x8] sm:$0xff] %v5624
        %5657 = vst [vmem:[%s234 + $0x10] sm:$0xff] %v5625
        %5658 = vst [vmem:[%s234 + $0x18] sm:$0xff] %v5626
        %5659 = vst [vmem:[%s234 + $0x20] sm:$0xff] %v5627
        %5660 = vst [vmem:[%s234 + $0x28] sm:$0xff] %v5628
        %5661 = vst [vmem:[%s234 + $0x30] sm:$0xff] %v5629
        %5662 = vst [vmem:[%s234 + $0x38] sm:$0xff] %v5630
        %5663 = vst [vmem:[%s234 + $0x40] sm:$0xff] %v5631
        %5664 = vst [vmem:[%s234 + $0x48] sm:$0xff] %v5632
        %5665 = vst [vmem:[%s234 + $0x50] sm:$0xff] %v5633
        %5666 = vst [vmem:[%s234 + $0x58] sm:$0xff] %v5634
        %5667 = vst [vmem:[%s234 + $0x60] sm:$0xff] %v5635
        %5668 = vst [vmem:[%s234 + $0x68] sm:$0xff] %v5636
        %5669 = vst [vmem:[%s234 + $0x70] sm:$0xff] %v5637
        %5670 = vst [vmem:[%s234 + $0x78] sm:$0xff] %v5638
        %5671 = vst [vmem:[%s234 + $0x80] sm:$0xff] %v5639
        %5672 = vst [vmem:[%s234 + $0x88] sm:$0xff] %v5640
        %5673 = vst [vmem:[%s234 + $0x90] sm:$0xff] %v5641
        %5674 = vst [vmem:[%s234 + $0x98] sm:$0xff] %v5642
        %5675 = vst [vmem:[%s234 + $0xa0] sm:$0xff] %v5643
        %5676 = vst [vmem:[%s234 + $0xa8] sm:$0xff] %v5644
        %5677 = vst [vmem:[%s234 + $0xb0] sm:$0xff] %v5645
        %5678 = vst [vmem:[%s234 + $0xb8] sm:$0xff] %v5646
        %5679 = vst [vmem:[%s234 + $0xc0] sm:$0xff] %v5647
        %5680 = vst [vmem:[%s234 + $0xc8] sm:$0xff] %v5648
        %5681 = vst [vmem:[%s234 + $0xd0] sm:$0xff] %v5649
        %5682 = vst [vmem:[%s234 + $0xd8] sm:$0xff] %v5650
        %5683 = vst [vmem:[%s234 + $0xe0] sm:$0xff] %v5651
        %5684 = vst [vmem:[%s234 + $0xe8] sm:$0xff] %v5652
        %5685 = vst [vmem:[%s234 + $0xf0] sm:$0xff] %v5653
        %5686 = vst [vmem:[%s234 + $0xf8] sm:$0xff] %v5654
        %s5687 = sand.u32 %s138, 1
        %s5688 = scalar_lea.sflag [#allocation5], %s5687
        %s5689 = sand.u32 %s138, 1
        %s5690 = smul.addr %s5689, 256
        %s5691 = scalar_lea.vmem [#allocation6], %s5690
        // Predicated region
        $region45: #{tpu_custom_call.1} parent=39 // pred_check
          %p5692 = pneg %p148
        $region46: #{tpu_custom_call.1} parent=39 // pred_check_branch
          %5694 = sbr.rel (%p5692) target = $region48
        $region47: #{tpu_custom_call.1} parent=39 // pred_region
          %5696 = vsyncadd %s5688, 0
          %s5697 = smul.addr %s20, 32
          %s5698 = smul.addr %s5697, 8
          %s5699 = scalar_lea.hbm %s5, %s5698
          %s5700 = sshll.u32 %s5691, 4
          %s5701 = int_to_ptr.vmem [resolvable:$true] %s5700
          %s5702 = sshll.u32 %s5699, 4
          %s5703 = int_to_ptr.hbm [resolvable:$true] %s5702
          %5708 = dma.vmem_to_hbm [thread:$0]  %s5701, 4096, %s5703, %s5688, 128, 128, 8
        $region48: #{tpu_custom_call.1} parent=39 // pred_fallthru
          _
      $region40: #{tpu_custom_call.1} parent=5 // pred_fallthru
        _
      %p5709 = scmp.le.s32.totalorder 2, %s15
      // Predicated region
      $region49: #{tpu_custom_call.1} parent=5 // pred_check
        %p5710 = pneg %p5709
      $region50: #{tpu_custom_call.1} parent=5 // pred_check_branch
        %5712 = sbr.rel (%p5710) target = $region52
      $region51: #{tpu_custom_call.1} parent=5 // pred_region
        %s5713 = ssub.s32 %s15, 2
        // Predicated region
        $region53: #{tpu_custom_call.1} parent=51 // pred_check
          %p5714 = pneg %p154
        $region54: #{tpu_custom_call.1} parent=51 // pred_check_branch
          %5716 = sbr.rel (%p5714) target = $region56
        $region55: #{tpu_custom_call.1} parent=51 // pred_region
          %s5717 = sand.u32 %s139, 1
          %s5718 = scalar_lea.sflag [#allocation5], %s5717
          %s5719 = sand.u32 %s139, 1
          %s5720 = smul.addr %s5719, 256
          %s5721 = scalar_lea.vmem [#allocation6], %s5720
          %5723 = dma.done %s5718, 4096
        $region56: #{tpu_custom_call.1} parent=51 // pred_fallthru
          _
      $region52: #{tpu_custom_call.1} parent=5 // pred_fallthru
        _
    $region6: #{tpu_custom_call.1} parent=1 // loop_footer
      %s19 = sadd.s32 1, %s15
    $region7: #{tpu_custom_call.1} parent=1 // loop_footer_branch
      %14 = sbr.rel target = $region3
    $region8: #{tpu_custom_call.1} parent=1 // loop_exit
      _
    %5724 = vsyncpa [#allocation4], 1
    %s5725 = scalar_lea.sflag [#allocation4], 1
    %5726 = vsyncpa %s5725, 1
    %5727 = vsyncpa [#allocation5], 1
    %s5728 = scalar_lea.sflag [#allocation5], 1
    %5729 = vsyncpa %s5728, 1

</llo_original>
